<compile_context>
chip_gen: v7x
topology: tpu7x:2x2x1
jax: 0.10.0
libtpu: 0.0.40
codegen_flags: <defaults>
</compile_context>

<pallas_src>
import functools
import math

import jax
import jax.numpy as jnp
from jax.experimental import pallas as pl
from jax.experimental.pallas import tpu as pltpu

_LN_EPS = 1e-5


# ------------------------------ in-kernel helpers ------------------------------

def _mxu_dot(a, b):
    # bf16 operands -> MXU, f32 accumulation.
    return jnp.dot(a.astype(jnp.bfloat16), b.astype(jnp.bfloat16),
                   preferred_element_type=jnp.float32)


def _layernorm(x, g, b):
    # Biased variance, eps inside rsqrt -- matches torch.nn.LayerNorm (eps=1e-5).
    mu = jnp.mean(x, axis=-1, keepdims=True)
    xc = x - mu
    var = jnp.mean(xc * xc, axis=-1, keepdims=True)
    return xc * jax.lax.rsqrt(var + _LN_EPS) * g + b


# ------------------------------ fused Pallas kernel ------------------------------

def _fused_transformer_kernel(
        src_ref, emb_w_ref, emb_b_ref,
        wA_ref, bA_ref, gA_ref, baA_ref,          # per-layer self-attn (folded) + norm1
        wB_ref, bB_ref, gB_ref, baB_ref,          # decoder cross-attn (folded) + norm2
        w1_ref, b1_ref, w2_ref, b2_ref, gF_ref, baF_ref,   # FFN + final norm
        fc_w_ref, fc_b_ref,
        out_ref,
        h_ref, mem_ref,
        *, n_enc):
    """Grid step l: l < n_enc -> encoder layer l; l >= n_enc -> decoder layer (l - n_enc).
    Embedding fused into step 0; classifier head fused into the last step.
    Activation h and encoder memory persist in VMEM scratch across grid steps."""
    l = pl.program_id(0)
    n_total = pl.num_programs(0)

    # --- embedding (once) ---
    @pl.when(l == 0)
    def _():
        h_ref[...] = _mxu_dot(src_ref[...], emb_w_ref[...]) + emb_b_ref[...]

    # --- encoder -> decoder transition: stash memory, tgt = zeros ---
    @pl.when(l == n_enc)
    def _():
        mem_ref[...] = h_ref[...]
        h_ref[...] = jnp.zeros_like(h_ref)

    # --- self-attention (S == 1 => folded single matmul) + norm1 ---
    x = h_ref[...]
    a = _mxu_dot(x, wA_ref[...]) + bA_ref[...]
    h_ref[...] = _layernorm(x + a, gA_ref[...], baA_ref[...])

    # --- cross-attention (decoder layers only; query irrelevant at S == 1) + norm2 ---
    @pl.when(l >= n_enc)
    def _():
        hh = h_ref[...]
        c = _mxu_dot(mem_ref[...], wB_ref[...]) + bB_ref[...]
        h_ref[...] = _layernorm(hh + c, gB_ref[...], baB_ref[...])

    # --- feed-forward + final norm (intermediate never leaves VMEM/vregs) ---
    h2 = h_ref[...]
    f = jnp.maximum(_mxu_dot(h2, w1_ref[...]) + b1_ref[...], 0.0)
    f = _mxu_dot(f, w2_ref[...]) + b2_ref[...]
    h_ref[...] = _layernorm(h2 + f, gF_ref[...], baF_ref[...])

    # --- classifier head (once, lane-dense padded output) ---
    @pl.when(l == n_total - 1)
    def _():
        out_ref[...] = (_mxu_dot(h_ref[...], fc_w_ref[...])
                        + fc_b_ref[...]).astype(out_ref.dtype)


# --------------------------- one-time parameter prep ---------------------------
# Call ONCE outside jit; the jitted forward consumes the prepared pytree directly.

def _round_up(n, m):
    return ((n + m - 1) // m) * m


def prepare_params(params, num_classes):
    """Fold S==1 attention (Wv@Wo, bv@Wo+bo), stack per-layer weights along a leading
    layer axis (encoder layers first, then decoder layers), cast matmul weights to bf16,
    and pad embedding-contraction / classifier-output dims to 128-lane multiples."""
    enc, dec = params["encoder"], params["decoder"]
    d = params["emb_w"].shape[1]
    in_dim = params["emb_w"].shape[0]
    pad_in = _round_up(in_dim, 128)
    pad_cls = _round_up(num_classes, 128)

    def fold(p):
        return p["wv"] @ p["wo"], p["bv"] @ p["wo"] + p["bo"]

    wA, bA, gA, baA = [], [], [], []
    w1, b1, w2, b2, gF, baF = [], [], [], [], [], []
    wB, bB, gB, baB = [], [], [], []

    for lp in enc:
        w, b = fold(lp["self_attn"])
        wA.append(w); bA.append(b)
        gA.append(lp["norm1_g"]); baA.append(lp["norm1_b"])
        w1.append(lp["w1"]); b1.append(lp["b1"])
        w2.append(lp["w2"]); b2.append(lp["b2"])
        gF.append(lp["norm2_g"]); baF.append(lp["norm2_b"])
    for lp in dec:
        w, b = fold(lp["self_attn"])          # layer 0's tgt==0 path uses only the bias
        wA.append(w); bA.append(b)
        gA.append(lp["norm1_g"]); baA.append(lp["norm1_b"])
        wc, bc = fold(lp["cross_attn"])
        wB.append(wc); bB.append(bc)
        gB.append(lp["norm2_g"]); baB.append(lp["norm2_b"])
        w1.append(lp["w1"]); b1.append(lp["b1"])
        w2.append(lp["w2"]); b2.append(lp["b2"])
        gF.append(lp["norm3_g"]); baF.append(lp["norm3_b"])

    def stack_w(ws):
        return jnp.stack(ws).astype(jnp.bfloat16)

    def stack_v(vs):
        return jnp.stack([v.reshape(1, -1) for v in vs]).astype(jnp.float32)

    emb_w = jnp.zeros((pad_in, d), jnp.float32).at[:in_dim].set(
        params["emb_w"]).astype(jnp.bfloat16)
    fc_w = jnp.zeros((d, pad_cls), jnp.float32).at[:, :num_classes].set(
        params["fc_w"]).astype(jnp.bfloat16)
    fc_b = jnp.zeros((1, pad_cls), jnp.float32).at[0, :num_classes].set(params["fc_b"])

    return dict(
        emb_w=emb_w, emb_b=params["emb_b"].reshape(1, -1).astype(jnp.float32),
        wA=stack_w(wA), bA=stack_v(bA), gA=stack_v(gA), baA=stack_v(baA),
        wB=stack_w(wB), bB=stack_v(bB), gB=stack_v(gB), baB=stack_v(baB),
        w1=stack_w(w1), b1=stack_v(b1), w2=stack_w(w2), b2=stack_v(b2),
        gF=stack_v(gF), baF=stack_v(baF),
        fc_w=fc_w, fc_b=fc_b)


# ----------------------------------- forward -----------------------------------

def transformer_classifier_forward(x, prep, *, num_classes):
    bsz = x.shape[0]
    pad_in, d = prep["emb_w"].shape
    n_layers = prep["wB"].shape[0]          # decoder layer count (== encoder count)
    n_total = prep["wA"].shape[0]           # 2 * n_layers
    dff = prep["w1"].shape[2]
    c_pad = prep["fc_w"].shape[1]

    # src.view(B, -1, 1).squeeze(-1): one length-1 token per image; pad the contraction
    # dim to a 128-lane multiple (weight rows were zero-padded once at prepare time).
    src = x.reshape(bsz, -1)
    src = jnp.pad(src, ((0, 0), (0, pad_in - src.shape[1])))

    per_layer = lambda l: (l, 0, 0)                              # encoder+decoder stacks
    dec_layer = lambda l: (jnp.maximum(l - n_layers, 0), 0, 0)   # decoder-only stacks
    const2d = lambda l: (0, 0)                                   # fetched once

    in_specs = [
        pl.BlockSpec((bsz, pad_in), const2d),     # src
        pl.BlockSpec((pad_in, d), const2d),       # emb_w
        pl.BlockSpec((1, d), const2d),            # emb_b
        pl.BlockSpec((None, d, d), per_layer),    # wA
        pl.BlockSpec((None, 1, d), per_layer),    # bA
        pl.BlockSpec((None, 1, d), per_layer),    # gA
        pl.BlockSpec((None, 1, d), per_layer),    # baA
        pl.BlockSpec((None, d, d), dec_layer),    # wB
        pl.BlockSpec((None, 1, d), dec_layer),    # bB
        pl.BlockSpec((None, 1, d), dec_layer),    # gB
        pl.BlockSpec((None, 1, d), dec_layer),    # baB
        pl.BlockSpec((None, d, dff), per_layer),  # w1
        pl.BlockSpec((None, 1, dff), per_layer),  # b1
        pl.BlockSpec((None, dff, d), per_layer),  # w2
        pl.BlockSpec((None, 1, d), per_layer),    # b2
        pl.BlockSpec((None, 1, d), per_layer),    # gF
        pl.BlockSpec((None, 1, d), per_layer),    # baF
        pl.BlockSpec((d, c_pad), const2d),        # fc_w
        pl.BlockSpec((1, c_pad), const2d),        # fc_b
    ]

    out = pl.pallas_call(
        functools.partial(_fused_transformer_kernel, n_enc=n_layers),
        out_shape=jax.ShapeDtypeStruct((bsz, c_pad), jnp.float32),
        grid=(n_total,),
        in_specs=in_specs,
        out_specs=pl.BlockSpec((bsz, c_pad), const2d),
        scratch_shapes=[pltpu.VMEM((bsz, d), jnp.float32),    # h (running activation)
                        pltpu.VMEM((bsz, d), jnp.float32)],   # encoder memory
        compiler_params=pltpu.CompilerParams(
            dimension_semantics=("arbitrary",),      # layers are sequentially dependent
            vmem_limit_bytes=32 * 1024 * 1024),      # explicit (v5e default scope is small)
    )(src, prep["emb_w"], prep["emb_b"],
      prep["wA"], prep["bA"], prep["gA"], prep["baA"],
      prep["wB"], prep["bB"], prep["gB"], prep["baB"],
      prep["w1"], prep["b1"], prep["w2"], prep["b2"], prep["gF"], prep["baF"],
      prep["fc_w"], prep["fc_b"])
    # output.mean(dim=0) over seq length 1 == identity; strip lane padding.
    return out[:, :num_classes]


# --------------------------- pure-JAX reference (check) ---------------------------

def _reference_forward(x, prep, num_classes):
    """Same math as the kernel (prepared/folded/bf16 weights), unrolled in plain jnp."""
    n_layers = prep["wB"].shape[0]
    src = x.reshape(x.shape[0], -1)
    src = jnp.pad(src, ((0, 0), (0, prep["emb_w"].shape[0] - src.shape[1])))

    def dot(a, w):
        return jnp.dot(a.astype(jnp.bfloat16), w, preferred_element_type=jnp.float32)

    def ln(v, g, b):
        mu = v.mean(-1, keepdims=True)
        vc = v - mu
        return vc * jax.lax.rsqrt((vc * vc).mean(-1, keepdims=True) + _LN_EPS) * g + b

    h = dot(src, prep["emb_w"]) + prep["emb_b"]
    for i in range(n_layers):
        a = dot(h, prep["wA"][i]) + prep["bA"][i]
        h = ln(h + a, prep["gA"][i], prep["baA"][i])
        f = jnp.maximum(dot(h, prep["w1"][i]) + prep["b1"][i], 0.0)
        f = dot(f, prep["w2"][i]) + prep["b2"][i]
        h = ln(h + f, prep["gF"][i], prep["baF"][i])
    mem = h
    h = jnp.zeros_like(mem)
    for i in range(n_layers):
        j = n_layers + i
        a = dot(h, prep["wA"][j]) + prep["bA"][j]
        h = ln(h + a, prep["gA"][j], prep["baA"][j])
        c = dot(mem, prep["wB"][i]) + prep["bB"][i]
        h = ln(h + c, prep["gB"][i], prep["baB"][i])
        f = jnp.maximum(dot(h, prep["w1"][j]) + prep["b1"][j], 0.0)
        f = dot(f, prep["w2"][j]) + prep["b2"][j]
        h = ln(h + f, prep["gF"][j], prep["baF"][j])
    return (dot(h, prep["fc_w"]) + prep["fc_b"])[:, :num_classes]


# -------------------------------- parameter init --------------------------------

def init_params(key, input_dim, d_model, nhead, num_layers, num_classes, dim_feedforward):
    keys = iter(jax.random.split(key, 512))

    def dense(din, dout):
        w = jax.random.normal(next(keys), (din, dout), jnp.float32) * (1.0 / math.sqrt(din))
        b = jax.random.normal(next(keys), (dout,), jnp.float32) * 0.01
        return w, b

    def mha_params():
        # Q/K kept for structural fidelity; with S == 1 they are dropped at fold time.
        wq, bq = dense(d_model, d_model)
        wk, bk = dense(d_model, d_model)
        wv, bv = dense(d_model, d_model)
        wo, bo = dense(d_model, d_model)
        return dict(wq=wq, bq=bq, wk=wk, bk=bk, wv=wv, bv=bv, wo=wo, bo=bo)

    def ln_params():
        return jnp.ones((d_model,), jnp.float32), jnp.zeros((d_model,), jnp.float32)

    def encoder_layer_params():
        w1, b1 = dense(d_model, dim_feedforward)
        w2, b2 = dense(dim_feedforward, d_model)
        n1g, n1b = ln_params()
        n2g, n2b = ln_params()
        return dict(self_attn=mha_params(), w1=w1, b1=b1, w2=w2, b2=b2,
                    norm1_g=n1g, norm1_b=n1b, norm2_g=n2g, norm2_b=n2b)

    def decoder_layer_params():
        w1, b1 = dense(d_model, dim_feedforward)
        w2, b2 = dense(dim_feedforward, d_model)
        n1g, n1b = ln_params()
        n2g, n2b = ln_params()
        n3g, n3b = ln_params()
        return dict(self_attn=mha_params(), cross_attn=mha_params(),
                    w1=w1, b1=b1, w2=w2, b2=b2,
                    norm1_g=n1g, norm1_b=n1b, norm2_g=n2g, norm2_b=n2b,
                    norm3_g=n3g, norm3_b=n3b)

    emb_w, emb_b = dense(input_dim, d_model)
    fc_w, fc_b = dense(d_model, num_classes)
    return dict(
        emb_w=emb_w, emb_b=emb_b,
        encoder=[encoder_layer_params() for _ in range(num_layers)],
        decoder=[decoder_layer_params() for _ in range(num_layers)],
        fc_w=fc_w, fc_b=fc_b)


# ------------------------------------ main ------------------------------------

if __name__ == "__main__":
    # Shapes from the reference module; dim_feedforward is the nn.Transformer*Layer default.
    batch = 2
    input_dim = 28 * 28
    d_model = 128
    nhead = 4
    num_layers = 2
    num_classes = 10
    dim_feedforward = 2048

    key = jax.random.PRNGKey(0)
    pkey, xkey = jax.random.split(key)
    params = init_params(pkey, input_dim, d_model, nhead, num_layers, num_classes,
                         dim_feedforward)
    x = jax.random.normal(xkey, (batch, 28, 28), jnp.float32)

    # Fold / cast / pad exactly once, OUTSIDE the jitted hot path.
    prep = jax.tree_util.tree_map(jax.block_until_ready,
                                  prepare_params(params, num_classes))

    fwd = jax.jit(functools.partial(transformer_classifier_forward,
                                    num_classes=num_classes))
    logits = fwd(x, prep)
    jax.block_until_ready(logits)

    assert logits.shape == (batch, num_classes)
    assert bool(jnp.all(jnp.isfinite(logits)))

    ref = _reference_forward(x, prep, num_classes)
    max_diff = float(jnp.max(jnp.abs(logits - ref)))
    assert max_diff < 1e-2, f"kernel/ref mismatch: {max_diff}"

    print("KERNEL_OK")
</pallas_src>

<mosaic_0001>
module attributes {stable_mosaic.version = 11 : i64} {
  func.func @_fused_transformer_kernel(%arg0: i32, %arg1: memref<2x896xf32, #tpu.memory_space<vmem>>, %arg2: memref<896x128xbf16, #tpu.memory_space<vmem>>, %arg3: memref<1x128xf32, #tpu.memory_space<vmem>>, %arg4: memref<1x128x128xbf16, #tpu.memory_space<vmem>>, %arg5: memref<1x1x128xf32, #tpu.memory_space<vmem>>, %arg6: memref<1x1x128xf32, #tpu.memory_space<vmem>>, %arg7: memref<1x1x128xf32, #tpu.memory_space<vmem>>, %arg8: memref<1x128x128xbf16, #tpu.memory_space<vmem>>, %arg9: memref<1x1x128xf32, #tpu.memory_space<vmem>>, %arg10: memref<1x1x128xf32, #tpu.memory_space<vmem>>, %arg11: memref<1x1x128xf32, #tpu.memory_space<vmem>>, %arg12: memref<1x128x2048xbf16, #tpu.memory_space<vmem>>, %arg13: memref<1x1x2048xf32, #tpu.memory_space<vmem>>, %arg14: memref<1x2048x128xbf16, #tpu.memory_space<vmem>>, %arg15: memref<1x1x128xf32, #tpu.memory_space<vmem>>, %arg16: memref<1x1x128xf32, #tpu.memory_space<vmem>>, %arg17: memref<1x1x128xf32, #tpu.memory_space<vmem>>, %arg18: memref<128x128xbf16, #tpu.memory_space<vmem>>, %arg19: memref<1x128xf32, #tpu.memory_space<vmem>>, %arg20: memref<2x128xf32, #tpu.memory_space<vmem>>, %arg21: memref<2x128xf32, #tpu.memory_space<vmem>>, %arg22: memref<2x128xf32, #tpu.memory_space<vmem>>) attributes {dimension_semantics = [#tpu.dimension_semantics<arbitrary>], iteration_bounds = array<i64: 4>, scalar_prefetch = 0 : i64, scratch_operands = 2 : i64, tpu.core_type = #tpu.core_type<tc>, window_params = [{pipeline_mode = #tpu.pipeline_mode<synchronous>, transform_indices = @transform_0, window_bounds = array<i64: 2, 896>}, {pipeline_mode = #tpu.pipeline_mode<synchronous>, transform_indices = @transform_1, window_bounds = array<i64: 896, 128>}, {pipeline_mode = #tpu.pipeline_mode<synchronous>, transform_indices = @transform_2, window_bounds = array<i64: 1, 128>}, {transform_indices = @transform_3, window_bounds = array<i64: 1, 128, 128>}, {transform_indices = @transform_4, window_bounds = array<i64: 1, 1, 128>}, {transform_indices = @transform_5, window_bounds = array<i64: 1, 1, 128>}, {transform_indices = @transform_6, window_bounds = array<i64: 1, 1, 128>}, {transform_indices = @transform_7, window_bounds = array<i64: 1, 128, 128>}, {transform_indices = @transform_8, window_bounds = array<i64: 1, 1, 128>}, {transform_indices = @transform_9, window_bounds = array<i64: 1, 1, 128>}, {transform_indices = @transform_10, window_bounds = array<i64: 1, 1, 128>}, {transform_indices = @transform_11, window_bounds = array<i64: 1, 128, 2048>}, {transform_indices = @transform_12, window_bounds = array<i64: 1, 1, 2048>}, {transform_indices = @transform_13, window_bounds = array<i64: 1, 2048, 128>}, {transform_indices = @transform_14, window_bounds = array<i64: 1, 1, 128>}, {transform_indices = @transform_15, window_bounds = array<i64: 1, 1, 128>}, {transform_indices = @transform_16, window_bounds = array<i64: 1, 1, 128>}, {pipeline_mode = #tpu.pipeline_mode<synchronous>, transform_indices = @transform_17, window_bounds = array<i64: 128, 128>}, {pipeline_mode = #tpu.pipeline_mode<synchronous>, transform_indices = @transform_18, window_bounds = array<i64: 1, 128>}, {pipeline_mode = #tpu.pipeline_mode<synchronous>, transform_indices = @transform_19, window_bounds = array<i64: 2, 128>}]} {
    %c0_i32 = arith.constant 0 : i32
    %0 = arith.cmpi eq, %arg0, %c0_i32 : i32
    %1 = arith.extui %0 : i1 to i32
    %c0_i32_0 = arith.constant 0 : i32
    %2 = arith.cmpi ne, %1, %c0_i32_0 : i32
    scf.if %2 {
      %c0_55 = arith.constant 0 : index
      %c0_56 = arith.constant 0 : index
      %92 = vector.load %arg1[%c0_55, %c0_56] : memref<2x896xf32, #tpu.memory_space<vmem>>, vector<2x896xf32>
      %c0_57 = arith.constant 0 : index
      %c0_58 = arith.constant 0 : index
      %93 = vector.load %arg2[%c0_57, %c0_58] : memref<896x128xbf16, #tpu.memory_space<vmem>>, vector<896x128xbf16>
      %94 = arith.truncf %92 : vector<2x896xf32> to vector<2x896xbf16>
      %cst_59 = arith.constant dense<0.000000e+00> : vector<2x128xf32>
      %95 = tpu.matmul %94, %93, %cst_59 {dimension_numbers = #tpu.dot_dimension_numbers<[1], [0], [0], [1], [0, 0, 1, 1], [], []>} : vector<2x896xbf16>, vector<896x128xbf16>, vector<2x128xf32> -> vector<2x128xf32>
      %c0_60 = arith.constant 0 : index
      %c0_61 = arith.constant 0 : index
      %96 = vector.load %arg3[%c0_60, %c0_61] : memref<1x128xf32, #tpu.memory_space<vmem>>, vector<1x128xf32>
      %97 = vector.broadcast %96 : vector<1x128xf32> to vector<2x128xf32>
      %98 = arith.addf %95, %97 : vector<2x128xf32>
      %c0_62 = arith.constant 0 : index
      %c0_63 = arith.constant 0 : index
      %99 = vector.load %arg21[%c0_62, %c0_63] : memref<2x128xf32, #tpu.memory_space<vmem>>, vector<2x128xf32>
      tpu.vector_store %arg21[%c0_62, %c0_63], %98 {strides = array<i32>} : memref<2x128xf32, #tpu.memory_space<vmem>>, vector<2x128xf32>,
    } else {
    }
    %c2_i32 = arith.constant 2 : i32
    %3 = arith.cmpi eq, %arg0, %c2_i32 : i32
    %4 = arith.extui %3 : i1 to i32
    %c0_i32_1 = arith.constant 0 : i32
    %5 = arith.cmpi ne, %4, %c0_i32_1 : i32
    scf.if %5 {
      %c0_55 = arith.constant 0 : index
      %c0_56 = arith.constant 0 : index
      %92 = vector.load %arg21[%c0_55, %c0_56] : memref<2x128xf32, #tpu.memory_space<vmem>>, vector<2x128xf32>
      %c0_57 = arith.constant 0 : index
      %c0_58 = arith.constant 0 : index
      %93 = vector.load %arg22[%c0_57, %c0_58] : memref<2x128xf32, #tpu.memory_space<vmem>>, vector<2x128xf32>
      tpu.vector_store %arg22[%c0_57, %c0_58], %92 {strides = array<i32>} : memref<2x128xf32, #tpu.memory_space<vmem>>, vector<2x128xf32>,
      %cst_59 = arith.constant 0.000000e+00 : f32
      %94 = vector.broadcast %cst_59 : f32 to vector<2x128xf32>
      %c0_60 = arith.constant 0 : index
      %c0_61 = arith.constant 0 : index
      %95 = vector.load %arg21[%c0_60, %c0_61] : memref<2x128xf32, #tpu.memory_space<vmem>>, vector<2x128xf32>
      tpu.vector_store %arg21[%c0_60, %c0_61], %94 {strides = array<i32>} : memref<2x128xf32, #tpu.memory_space<vmem>>, vector<2x128xf32>,
    } else {
    }
    %c0 = arith.constant 0 : index
    %c0_2 = arith.constant 0 : index
    %6 = vector.load %arg21[%c0, %c0_2] : memref<2x128xf32, #tpu.memory_space<vmem>>, vector<2x128xf32>
    %c0_3 = arith.constant 0 : index
    %c0_4 = arith.constant 0 : index
    %c0_5 = arith.constant 0 : index
    %7 = vector.load %arg4[%c0_3, %c0_4, %c0_5] : memref<1x128x128xbf16, #tpu.memory_space<vmem>>, vector<1x128x128xbf16>
    %8 = vector.shape_cast %7 : vector<1x128x128xbf16> to vector<128x128xbf16>
    %9 = arith.truncf %6 : vector<2x128xf32> to vector<2x128xbf16>
    %cst = arith.constant dense<0.000000e+00> : vector<2x128xf32>
    %10 = tpu.matmul %9, %8, %cst {dimension_numbers = #tpu.dot_dimension_numbers<[1], [0], [0], [1], [0, 0, 1, 1], [], []>} : vector<2x128xbf16>, vector<128x128xbf16>, vector<2x128xf32> -> vector<2x128xf32>
    %c0_6 = arith.constant 0 : index
    %c0_7 = arith.constant 0 : index
    %c0_8 = arith.constant 0 : index
    %11 = vector.load %arg5[%c0_6, %c0_7, %c0_8] : memref<1x1x128xf32, #tpu.memory_space<vmem>>, vector<1x1x128xf32>
    %12 = vector.shape_cast %11 : vector<1x1x128xf32> to vector<1x128xf32>
    %13 = vector.broadcast %12 : vector<1x128xf32> to vector<2x128xf32>
    %14 = arith.addf %10, %13 : vector<2x128xf32>
    %15 = arith.addf %6, %14 : vector<2x128xf32>
    %c0_9 = arith.constant 0 : index
    %c0_10 = arith.constant 0 : index
    %c0_11 = arith.constant 0 : index
    %16 = vector.load %arg6[%c0_9, %c0_10, %c0_11] : memref<1x1x128xf32, #tpu.memory_space<vmem>>, vector<1x1x128xf32>
    %17 = vector.shape_cast %16 : vector<1x1x128xf32> to vector<1x128xf32>
    %c0_12 = arith.constant 0 : index
    %c0_13 = arith.constant 0 : index
    %c0_14 = arith.constant 0 : index
    %18 = vector.load %arg7[%c0_12, %c0_13, %c0_14] : memref<1x1x128xf32, #tpu.memory_space<vmem>>, vector<1x1x128xf32>
    %19 = vector.shape_cast %18 : vector<1x1x128xf32> to vector<1x128xf32>
    %cst_15 = arith.constant dense<0.000000e+00> : vector<2xf32>
    %20 = vector.multi_reduction <add>, %15, %cst_15 [1] : vector<2x128xf32> to vector<2xf32>
    %21 = vector.shape_cast %20 : vector<2xf32> to vector<2x1xf32>
    %cst_16 = arith.constant 1.280000e+02 : f32
    %22 = vector.broadcast %cst_16 : f32 to vector<2x1xf32>
    %23 = arith.divf %21, %22 : vector<2x1xf32>
    %24 = vector.broadcast %23 : vector<2x1xf32> to vector<2x128xf32>
    %25 = arith.subf %15, %24 : vector<2x128xf32>
    %26 = arith.mulf %25, %25 : vector<2x128xf32>
    %cst_17 = arith.constant dense<0.000000e+00> : vector<2xf32>
    %27 = vector.multi_reduction <add>, %26, %cst_17 [1] : vector<2x128xf32> to vector<2xf32>
    %28 = vector.shape_cast %27 : vector<2xf32> to vector<2x1xf32>
    %cst_18 = arith.constant 1.280000e+02 : f32
    %29 = vector.broadcast %cst_18 : f32 to vector<2x1xf32>
    %30 = arith.divf %28, %29 : vector<2x1xf32>
    %cst_19 = arith.constant 9.99999974E-6 : f32
    %31 = vector.broadcast %cst_19 : f32 to vector<2x1xf32>
    %32 = arith.addf %30, %31 : vector<2x1xf32>
    %33 = math.rsqrt %32 : vector<2x1xf32>
    %34 = vector.broadcast %33 : vector<2x1xf32> to vector<2x128xf32>
    %35 = arith.mulf %25, %34 : vector<2x128xf32>
    %36 = vector.broadcast %17 : vector<1x128xf32> to vector<2x128xf32>
    %37 = arith.mulf %35, %36 : vector<2x128xf32>
    %38 = vector.broadcast %19 : vector<1x128xf32> to vector<2x128xf32>
    %39 = arith.addf %37, %38 : vector<2x128xf32>
    %c0_20 = arith.constant 0 : index
    %c0_21 = arith.constant 0 : index
    %40 = vector.load %arg21[%c0_20, %c0_21] : memref<2x128xf32, #tpu.memory_space<vmem>>, vector<2x128xf32>
    tpu.vector_store %arg21[%c0_20, %c0_21], %39 {strides = array<i32>} : memref<2x128xf32, #tpu.memory_space<vmem>>, vector<2x128xf32>,
    %c2_i32_22 = arith.constant 2 : i32
    %41 = arith.cmpi sge, %arg0, %c2_i32_22 : i32
    %42 = arith.extui %41 : i1 to i32
    %c0_i32_23 = arith.constant 0 : i32
    %43 = arith.cmpi ne, %42, %c0_i32_23 : i32
    scf.if %43 {
      %c0_55 = arith.constant 0 : index
      %c0_56 = arith.constant 0 : index
      %92 = vector.load %arg21[%c0_55, %c0_56] : memref<2x128xf32, #tpu.memory_space<vmem>>, vector<2x128xf32>
      %c0_57 = arith.constant 0 : index
      %c0_58 = arith.constant 0 : index
      %93 = vector.load %arg22[%c0_57, %c0_58] : memref<2x128xf32, #tpu.memory_space<vmem>>, vector<2x128xf32>
      %c0_59 = arith.constant 0 : index
      %c0_60 = arith.constant 0 : index
      %c0_61 = arith.constant 0 : index
      %94 = vector.load %arg8[%c0_59, %c0_60, %c0_61] : memref<1x128x128xbf16, #tpu.memory_space<vmem>>, vector<1x128x128xbf16>
      %95 = vector.shape_cast %94 : vector<1x128x128xbf16> to vector<128x128xbf16>
      %96 = arith.truncf %93 : vector<2x128xf32> to vector<2x128xbf16>
      %cst_62 = arith.constant dense<0.000000e+00> : vector<2x128xf32>
      %97 = tpu.matmul %96, %95, %cst_62 {dimension_numbers = #tpu.dot_dimension_numbers<[1], [0], [0], [1], [0, 0, 1, 1], [], []>} : vector<2x128xbf16>, vector<128x128xbf16>, vector<2x128xf32> -> vector<2x128xf32>
      %c0_63 = arith.constant 0 : index
      %c0_64 = arith.constant 0 : index
      %c0_65 = arith.constant 0 : index
      %98 = vector.load %arg9[%c0_63, %c0_64, %c0_65] : memref<1x1x128xf32, #tpu.memory_space<vmem>>, vector<1x1x128xf32>
      %99 = vector.shape_cast %98 : vector<1x1x128xf32> to vector<1x128xf32>
      %100 = vector.broadcast %99 : vector<1x128xf32> to vector<2x128xf32>
      %101 = arith.addf %97, %100 : vector<2x128xf32>
      %102 = arith.addf %92, %101 : vector<2x128xf32>
      %c0_66 = arith.constant 0 : index
      %c0_67 = arith.constant 0 : index
      %c0_68 = arith.constant 0 : index
      %103 = vector.load %arg10[%c0_66, %c0_67, %c0_68] : memref<1x1x128xf32, #tpu.memory_space<vmem>>, vector<1x1x128xf32>
      %104 = vector.shape_cast %103 : vector<1x1x128xf32> to vector<1x128xf32>
      %c0_69 = arith.constant 0 : index
      %c0_70 = arith.constant 0 : index
      %c0_71 = arith.constant 0 : index
      %105 = vector.load %arg11[%c0_69, %c0_70, %c0_71] : memref<1x1x128xf32, #tpu.memory_space<vmem>>, vector<1x1x128xf32>
      %106 = vector.shape_cast %105 : vector<1x1x128xf32> to vector<1x128xf32>
      %cst_72 = arith.constant dense<0.000000e+00> : vector<2xf32>
      %107 = vector.multi_reduction <add>, %102, %cst_72 [1] : vector<2x128xf32> to vector<2xf32>
      %108 = vector.shape_cast %107 : vector<2xf32> to vector<2x1xf32>
      %cst_73 = arith.constant 1.280000e+02 : f32
      %109 = vector.broadcast %cst_73 : f32 to vector<2x1xf32>
      %110 = arith.divf %108, %109 : vector<2x1xf32>
      %111 = vector.broadcast %110 : vector<2x1xf32> to vector<2x128xf32>
      %112 = arith.subf %102, %111 : vector<2x128xf32>
      %113 = arith.mulf %112, %112 : vector<2x128xf32>
      %cst_74 = arith.constant dense<0.000000e+00> : vector<2xf32>
      %114 = vector.multi_reduction <add>, %113, %cst_74 [1] : vector<2x128xf32> to vector<2xf32>
      %115 = vector.shape_cast %114 : vector<2xf32> to vector<2x1xf32>
      %cst_75 = arith.constant 1.280000e+02 : f32
      %116 = vector.broadcast %cst_75 : f32 to vector<2x1xf32>
      %117 = arith.divf %115, %116 : vector<2x1xf32>
      %cst_76 = arith.constant 9.99999974E-6 : f32
      %118 = vector.broadcast %cst_76 : f32 to vector<2x1xf32>
      %119 = arith.addf %117, %118 : vector<2x1xf32>
      %120 = math.rsqrt %119 : vector<2x1xf32>
      %121 = vector.broadcast %120 : vector<2x1xf32> to vector<2x128xf32>
      %122 = arith.mulf %112, %121 : vector<2x128xf32>
      %123 = vector.broadcast %104 : vector<1x128xf32> to vector<2x128xf32>
      %124 = arith.mulf %122, %123 : vector<2x128xf32>
      %125 = vector.broadcast %106 : vector<1x128xf32> to vector<2x128xf32>
      %126 = arith.addf %124, %125 : vector<2x128xf32>
      %c0_77 = arith.constant 0 : index
      %c0_78 = arith.constant 0 : index
      %127 = vector.load %arg21[%c0_77, %c0_78] : memref<2x128xf32, #tpu.memory_space<vmem>>, vector<2x128xf32>
      tpu.vector_store %arg21[%c0_77, %c0_78], %126 {strides = array<i32>} : memref<2x128xf32, #tpu.memory_space<vmem>>, vector<2x128xf32>,
    } else {
    }
    %c0_24 = arith.constant 0 : index
    %c0_25 = arith.constant 0 : index
    %44 = vector.load %arg21[%c0_24, %c0_25] : memref<2x128xf32, #tpu.memory_space<vmem>>, vector<2x128xf32>
    %c0_26 = arith.constant 0 : index
    %c0_27 = arith.constant 0 : index
    %c0_28 = arith.constant 0 : index
    %45 = vector.load %arg12[%c0_26, %c0_27, %c0_28] : memref<1x128x2048xbf16, #tpu.memory_space<vmem>>, vector<1x128x2048xbf16>
    %46 = vector.shape_cast %45 : vector<1x128x2048xbf16> to vector<128x2048xbf16>
    %47 = arith.truncf %44 : vector<2x128xf32> to vector<2x128xbf16>
    %cst_29 = arith.constant dense<0.000000e+00> : vector<2x2048xf32>
    %48 = tpu.matmul %47, %46, %cst_29 {dimension_numbers = #tpu.dot_dimension_numbers<[1], [0], [0], [1], [0, 0, 1, 1], [], []>} : vector<2x128xbf16>, vector<128x2048xbf16>, vector<2x2048xf32> -> vector<2x2048xf32>
    %c0_30 = arith.constant 0 : index
    %c0_31 = arith.constant 0 : index
    %c0_32 = arith.constant 0 : index
    %49 = vector.load %arg13[%c0_30, %c0_31, %c0_32] : memref<1x1x2048xf32, #tpu.memory_space<vmem>>, vector<1x1x2048xf32>
    %50 = vector.shape_cast %49 : vector<1x1x2048xf32> to vector<1x2048xf32>
    %51 = vector.broadcast %50 : vector<1x2048xf32> to vector<2x2048xf32>
    %52 = arith.addf %48, %51 : vector<2x2048xf32>
    %cst_33 = arith.constant 0.000000e+00 : f32
    %53 = vector.broadcast %cst_33 : f32 to vector<2x2048xf32>
    %54 = arith.maximumf %52, %53 : vector<2x2048xf32>
    %c0_34 = arith.constant 0 : index
    %c0_35 = arith.constant 0 : index
    %c0_36 = arith.constant 0 : index
    %55 = vector.load %arg14[%c0_34, %c0_35, %c0_36] : memref<1x2048x128xbf16, #tpu.memory_space<vmem>>, vector<1x2048x128xbf16>
    %56 = vector.shape_cast %55 : vector<1x2048x128xbf16> to vector<2048x128xbf16>
    %57 = arith.truncf %54 : vector<2x2048xf32> to vector<2x2048xbf16>
    %cst_37 = arith.constant dense<0.000000e+00> : vector<2x128xf32>
    %58 = tpu.matmul %57, %56, %cst_37 {dimension_numbers = #tpu.dot_dimension_numbers<[1], [0], [0], [1], [0, 0, 1, 1], [], []>} : vector<2x2048xbf16>, vector<2048x128xbf16>, vector<2x128xf32> -> vector<2x128xf32>
    %c0_38 = arith.constant 0 : index
    %c0_39 = arith.constant 0 : index
    %c0_40 = arith.constant 0 : index
    %59 = vector.load %arg15[%c0_38, %c0_39, %c0_40] : memref<1x1x128xf32, #tpu.memory_space<vmem>>, vector<1x1x128xf32>
    %60 = vector.shape_cast %59 : vector<1x1x128xf32> to vector<1x128xf32>
    %61 = vector.broadcast %60 : vector<1x128xf32> to vector<2x128xf32>
    %62 = arith.addf %58, %61 : vector<2x128xf32>
    %63 = arith.addf %44, %62 : vector<2x128xf32>
    %c0_41 = arith.constant 0 : index
    %c0_42 = arith.constant 0 : index
    %c0_43 = arith.constant 0 : index
    %64 = vector.load %arg16[%c0_41, %c0_42, %c0_43] : memref<1x1x128xf32, #tpu.memory_space<vmem>>, vector<1x1x128xf32>
    %65 = vector.shape_cast %64 : vector<1x1x128xf32> to vector<1x128xf32>
    %c0_44 = arith.constant 0 : index
    %c0_45 = arith.constant 0 : index
    %c0_46 = arith.constant 0 : index
    %66 = vector.load %arg17[%c0_44, %c0_45, %c0_46] : memref<1x1x128xf32, #tpu.memory_space<vmem>>, vector<1x1x128xf32>
    %67 = vector.shape_cast %66 : vector<1x1x128xf32> to vector<1x128xf32>
    %cst_47 = arith.constant dense<0.000000e+00> : vector<2xf32>
    %68 = vector.multi_reduction <add>, %63, %cst_47 [1] : vector<2x128xf32> to vector<2xf32>
    %69 = vector.shape_cast %68 : vector<2xf32> to vector<2x1xf32>
    %cst_48 = arith.constant 1.280000e+02 : f32
    %70 = vector.broadcast %cst_48 : f32 to vector<2x1xf32>
    %71 = arith.divf %69, %70 : vector<2x1xf32>
    %72 = vector.broadcast %71 : vector<2x1xf32> to vector<2x128xf32>
    %73 = arith.subf %63, %72 : vector<2x128xf32>
    %74 = arith.mulf %73, %73 : vector<2x128xf32>
    %cst_49 = arith.constant dense<0.000000e+00> : vector<2xf32>
    %75 = vector.multi_reduction <add>, %74, %cst_49 [1] : vector<2x128xf32> to vector<2xf32>
    %76 = vector.shape_cast %75 : vector<2xf32> to vector<2x1xf32>
    %cst_50 = arith.constant 1.280000e+02 : f32
    %77 = vector.broadcast %cst_50 : f32 to vector<2x1xf32>
    %78 = arith.divf %76, %77 : vector<2x1xf32>
    %cst_51 = arith.constant 9.99999974E-6 : f32
    %79 = vector.broadcast %cst_51 : f32 to vector<2x1xf32>
    %80 = arith.addf %78, %79 : vector<2x1xf32>
    %81 = math.rsqrt %80 : vector<2x1xf32>
    %82 = vector.broadcast %81 : vector<2x1xf32> to vector<2x128xf32>
    %83 = arith.mulf %73, %82 : vector<2x128xf32>
    %84 = vector.broadcast %65 : vector<1x128xf32> to vector<2x128xf32>
    %85 = arith.mulf %83, %84 : vector<2x128xf32>
    %86 = vector.broadcast %67 : vector<1x128xf32> to vector<2x128xf32>
    %87 = arith.addf %85, %86 : vector<2x128xf32>
    %c0_52 = arith.constant 0 : index
    %c0_53 = arith.constant 0 : index
    %88 = vector.load %arg21[%c0_52, %c0_53] : memref<2x128xf32, #tpu.memory_space<vmem>>, vector<2x128xf32>
    tpu.vector_store %arg21[%c0_52, %c0_53], %87 {strides = array<i32>} : memref<2x128xf32, #tpu.memory_space<vmem>>, vector<2x128xf32>,
    %c3_i32 = arith.constant 3 : i32
    %89 = arith.cmpi eq, %arg0, %c3_i32 : i32
    %90 = arith.extui %89 : i1 to i32
    %c0_i32_54 = arith.constant 0 : i32
    %91 = arith.cmpi ne, %90, %c0_i32_54 : i32
    scf.if %91 {
      %c0_55 = arith.constant 0 : index
      %c0_56 = arith.constant 0 : index
      %92 = vector.load %arg21[%c0_55, %c0_56] : memref<2x128xf32, #tpu.memory_space<vmem>>, vector<2x128xf32>
      %c0_57 = arith.constant 0 : index
      %c0_58 = arith.constant 0 : index
      %93 = vector.load %arg18[%c0_57, %c0_58] : memref<128x128xbf16, #tpu.memory_space<vmem>>, vector<128x128xbf16>
      %94 = arith.truncf %92 : vector<2x128xf32> to vector<2x128xbf16>
      %cst_59 = arith.constant dense<0.000000e+00> : vector<2x128xf32>
      %95 = tpu.matmul %94, %93, %cst_59 {dimension_numbers = #tpu.dot_dimension_numbers<[1], [0], [0], [1], [0, 0, 1, 1], [], []>} : vector<2x128xbf16>, vector<128x128xbf16>, vector<2x128xf32> -> vector<2x128xf32>
      %c0_60 = arith.constant 0 : index
      %c0_61 = arith.constant 0 : index
      %96 = vector.load %arg19[%c0_60, %c0_61] : memref<1x128xf32, #tpu.memory_space<vmem>>, vector<1x128xf32>
      %97 = vector.broadcast %96 : vector<1x128xf32> to vector<2x128xf32>
      %98 = arith.addf %95, %97 : vector<2x128xf32>
      %c0_62 = arith.constant 0 : index
      %c0_63 = arith.constant 0 : index
      %99 = vector.load %arg20[%c0_62, %c0_63] : memref<2x128xf32, #tpu.memory_space<vmem>>, vector<2x128xf32>
      tpu.vector_store %arg20[%c0_62, %c0_63], %98 {strides = array<i32>} : memref<2x128xf32, #tpu.memory_space<vmem>>, vector<2x128xf32>,
    } else {
    }
    return
  }
  func.func @transform_0(%arg0: i32) -> (i32, i32) {
    %c0_i32 = arith.constant 0 : i32
    %c0_i32_0 = arith.constant 0 : i32
    %c0_i32_1 = arith.constant 0 : i32
    return %c0_i32, %c0_i32_0 : i32, i32
  }
  func.func @transform_1(%arg0: i32) -> (i32, i32) {
    %c0_i32 = arith.constant 0 : i32
    %c0_i32_0 = arith.constant 0 : i32
    %c0_i32_1 = arith.constant 0 : i32
    return %c0_i32, %c0_i32_0 : i32, i32
  }
  func.func @transform_2(%arg0: i32) -> (i32, i32) {
    %c0_i32 = arith.constant 0 : i32
    %c0_i32_0 = arith.constant 0 : i32
    %c0_i32_1 = arith.constant 0 : i32
    return %c0_i32, %c0_i32_0 : i32, i32
  }
  func.func @transform_3(%arg0: i32) -> (i32, i32, i32) {
    %c0_i32 = arith.constant 0 : i32
    %c0_i32_0 = arith.constant 0 : i32
    %c0_i32_1 = arith.constant 0 : i32
    return %arg0, %c0_i32, %c0_i32_0 : i32, i32, i32
  }
  func.func @transform_4(%arg0: i32) -> (i32, i32, i32) {
    %c0_i32 = arith.constant 0 : i32
    %c0_i32_0 = arith.constant 0 : i32
    %c0_i32_1 = arith.constant 0 : i32
    return %arg0, %c0_i32, %c0_i32_0 : i32, i32, i32
  }
  func.func @transform_5(%arg0: i32) -> (i32, i32, i32) {
    %c0_i32 = arith.constant 0 : i32
    %c0_i32_0 = arith.constant 0 : i32
    %c0_i32_1 = arith.constant 0 : i32
    return %arg0, %c0_i32, %c0_i32_0 : i32, i32, i32
  }
  func.func @transform_6(%arg0: i32) -> (i32, i32, i32) {
    %c0_i32 = arith.constant 0 : i32
    %c0_i32_0 = arith.constant 0 : i32
    %c0_i32_1 = arith.constant 0 : i32
    return %arg0, %c0_i32, %c0_i32_0 : i32, i32, i32
  }
  func.func @transform_7(%arg0: i32) -> (i32, i32, i32) {
    %c2_i32 = arith.constant 2 : i32
    %0 = arith.subi %arg0, %c2_i32 : i32
    %c0_i32 = arith.constant 0 : i32
    %1 = arith.maxsi %0, %c0_i32 : i32
    %c0_i32_0 = arith.constant 0 : i32
    %c0_i32_1 = arith.constant 0 : i32
    %c0_i32_2 = arith.constant 0 : i32
    return %1, %c0_i32_0, %c0_i32_1 : i32, i32, i32
  }
  func.func @transform_8(%arg0: i32) -> (i32, i32, i32) {
    %c2_i32 = arith.constant 2 : i32
    %0 = arith.subi %arg0, %c2_i32 : i32
    %c0_i32 = arith.constant 0 : i32
    %1 = arith.maxsi %0, %c0_i32 : i32
    %c0_i32_0 = arith.constant 0 : i32
    %c0_i32_1 = arith.constant 0 : i32
    %c0_i32_2 = arith.constant 0 : i32
    return %1, %c0_i32_0, %c0_i32_1 : i32, i32, i32
  }
  func.func @transform_9(%arg0: i32) -> (i32, i32, i32) {
    %c2_i32 = arith.constant 2 : i32
    %0 = arith.subi %arg0, %c2_i32 : i32
    %c0_i32 = arith.constant 0 : i32
    %1 = arith.maxsi %0, %c0_i32 : i32
    %c0_i32_0 = arith.constant 0 : i32
    %c0_i32_1 = arith.constant 0 : i32
    %c0_i32_2 = arith.constant 0 : i32
    return %1, %c0_i32_0, %c0_i32_1 : i32, i32, i32
  }
  func.func @transform_10(%arg0: i32) -> (i32, i32, i32) {
    %c2_i32 = arith.constant 2 : i32
    %0 = arith.subi %arg0, %c2_i32 : i32
    %c0_i32 = arith.constant 0 : i32
    %1 = arith.maxsi %0, %c0_i32 : i32
    %c0_i32_0 = arith.constant 0 : i32
    %c0_i32_1 = arith.constant 0 : i32
    %c0_i32_2 = arith.constant 0 : i32
    return %1, %c0_i32_0, %c0_i32_1 : i32, i32, i32
  }
  func.func @transform_11(%arg0: i32) -> (i32, i32, i32) {
    %c0_i32 = arith.constant 0 : i32
    %c0_i32_0 = arith.constant 0 : i32
    %c0_i32_1 = arith.constant 0 : i32
    return %arg0, %c0_i32, %c0_i32_0 : i32, i32, i32
  }
  func.func @transform_12(%arg0: i32) -> (i32, i32, i32) {
    %c0_i32 = arith.constant 0 : i32
    %c0_i32_0 = arith.constant 0 : i32
    %c0_i32_1 = arith.constant 0 : i32
    return %arg0, %c0_i32, %c0_i32_0 : i32, i32, i32
  }
  func.func @transform_13(%arg0: i32) -> (i32, i32, i32) {
    %c0_i32 = arith.constant 0 : i32
    %c0_i32_0 = arith.constant 0 : i32
    %c0_i32_1 = arith.constant 0 : i32
    return %arg0, %c0_i32, %c0_i32_0 : i32, i32, i32
  }
  func.func @transform_14(%arg0: i32) -> (i32, i32, i32) {
    %c0_i32 = arith.constant 0 : i32
    %c0_i32_0 = arith.constant 0 : i32
    %c0_i32_1 = arith.constant 0 : i32
    return %arg0, %c0_i32, %c0_i32_0 : i32, i32, i32
  }
  func.func @transform_15(%arg0: i32) -> (i32, i32, i32) {
    %c0_i32 = arith.constant 0 : i32
    %c0_i32_0 = arith.constant 0 : i32
    %c0_i32_1 = arith.constant 0 : i32
    return %arg0, %c0_i32, %c0_i32_0 : i32, i32, i32
  }
  func.func @transform_16(%arg0: i32) -> (i32, i32, i32) {
    %c0_i32 = arith.constant 0 : i32
    %c0_i32_0 = arith.constant 0 : i32
    %c0_i32_1 = arith.constant 0 : i32
    return %arg0, %c0_i32, %c0_i32_0 : i32, i32, i32
  }
  func.func @transform_17(%arg0: i32) -> (i32, i32) {
    %c0_i32 = arith.constant 0 : i32
    %c0_i32_0 = arith.constant 0 : i32
    %c0_i32_1 = arith.constant 0 : i32
    return %c0_i32, %c0_i32_0 : i32, i32
  }
  func.func @transform_18(%arg0: i32) -> (i32, i32) {
    %c0_i32 = arith.constant 0 : i32
    %c0_i32_0 = arith.constant 0 : i32
    %c0_i32_1 = arith.constant 0 : i32
    return %c0_i32, %c0_i32_0 : i32, i32
  }
  func.func @transform_19(%arg0: i32) -> (i32, i32) {
    %c0_i32 = arith.constant 0 : i32
    %c0_i32_0 = arith.constant 0 : i32
    %c0_i32_1 = arith.constant 0 : i32
    return %c0_i32, %c0_i32_0 : i32, i32
  }
}

</mosaic_0001>

<llo_original>
// kernel: transformer_classifier_forward.1
$region0: #{transformer_classifier_forward.1}
  #allocation0 [shape = 'u32[]', space=smem, size = 0x4, offset = 0x4, fixed_abs, tag = 'smem constant byte address 0x4 - core index']
  #allocation1 [shape = 'u32[144,128]{1,0:T(1,128)}', space=vmem, size = 0x12000, scoped, tag = 'internal scratch']
  #allocation2 [shape = 'f32[2,128]{1,0:T(2,128)}', space=vmem, size = 0x400, scoped, tag = 'scratch operand']
  #allocation3 [shape = 'f32[2,128]{1,0:T(2,128)}', space=vmem, size = 0x400, scoped, tag = 'scratch operand']
  %s0 = inlined_call_operand.vmem [shape: f32[2,896], index: 0, kind: input, shape index: {}]
  %s1 = inlined_call_operand.hbm [shape: bf16[896,128], index: 1, kind: input, shape index: {}]
  %s2 = inlined_call_operand.hbm [shape: f32[1,128], index: 2, kind: input, shape index: {}]
  %s3 = inlined_call_operand.hbm [shape: bf16[4,128,128], index: 3, kind: input, shape index: {}]
  %s4 = inlined_call_operand.hbm [shape: f32[4,1,128], index: 4, kind: input, shape index: {}]
  %s5 = inlined_call_operand.hbm [shape: f32[4,1,128], index: 5, kind: input, shape index: {}]
  %s6 = inlined_call_operand.hbm [shape: f32[4,1,128], index: 6, kind: input, shape index: {}]
  %s7 = inlined_call_operand.hbm [shape: bf16[2,128,128], index: 7, kind: input, shape index: {}]
  %s8 = inlined_call_operand.hbm [shape: f32[2,1,128], index: 8, kind: input, shape index: {}]
  %s9 = inlined_call_operand.hbm [shape: f32[2,1,128], index: 9, kind: input, shape index: {}]
  %s10 = inlined_call_operand.hbm [shape: f32[2,1,128], index: 10, kind: input, shape index: {}]
  %s11 = inlined_call_operand.hbm [shape: bf16[4,128,2048], index: 11, kind: input, shape index: {}]
  %s12 = inlined_call_operand.hbm [shape: f32[4,1,2048], index: 12, kind: input, shape index: {}]
  %s13 = inlined_call_operand.hbm [shape: bf16[4,2048,128], index: 13, kind: input, shape index: {}]
  %s14 = inlined_call_operand.hbm [shape: f32[4,1,128], index: 14, kind: input, shape index: {}]
  %s15 = inlined_call_operand.hbm [shape: f32[4,1,128], index: 15, kind: input, shape index: {}]
  %s16 = inlined_call_operand.hbm [shape: f32[4,1,128], index: 16, kind: input, shape index: {}]
  %s17 = inlined_call_operand.hbm [shape: bf16[128,128], index: 17, kind: input, shape index: {}]
  %s18 = inlined_call_operand.hbm [shape: f32[1,128], index: 18, kind: input, shape index: {}]
  %s19 = inlined_call_operand.hbm [shape: f32[2,128], index: 19, kind: output, shape index: {}]
  %s20 = sld [smem:[#allocation0]]
  $region197: #{transformer_classifier_forward.1} parent=0
    _
  %s22 = ssub.s32 1, %s20
  %s23 = scalar_select 0, %s22, %s20
  $region1: #{transformer_classifier_forward.1} parent=0
    #allocation4 [shape = 'u8[229376]{0}', space=vmem, size = 0x38000, scoped, tag = 'input window, operand 1, single buffered']
    #allocation5 [shape = 's32[2]{0}', space=sflag, size = 0x8, scoped, tag = 'scoped memory for transformer_classifier_forward.1']
    #allocation6 [shape = 's32[2]{0}', space=sflag, size = 0x8, scoped, tag = 'scoped memory for transformer_classifier_forward.1']
    #allocation7 [shape = 'u8[512]{0}', space=vmem, size = 0x400, scoped, tag = 'input window, operand 2, single buffered']
    #allocation8 [shape = 's32[1]{0}', space=sflag, size = 0x4, scoped, tag = 'scoped memory for transformer_classifier_forward.1']
    #allocation9 [shape = 'u8[65536]{0}', space=vmem, size = 0x10000, scoped, tag = 'input window, operand 3']
    #allocation10 [shape = 'u8[1024]{0}', space=vmem, size = 0x400, scoped, tag = 'input window, operand 4']
    #allocation11 [shape = 'u8[1024]{0}', space=vmem, size = 0x400, scoped, tag = 'input window, operand 5']
    #allocation12 [shape = 'u8[1024]{0}', space=vmem, size = 0x400, scoped, tag = 'input window, operand 6']
    #allocation13 [shape = 'u8[65536]{0}', space=vmem, size = 0x10000, scoped, tag = 'input window, operand 7']
    #allocation14 [shape = 'u8[1024]{0}', space=vmem, size = 0x400, scoped, tag = 'input window, operand 8']
    #allocation15 [shape = 'u8[1024]{0}', space=vmem, size = 0x400, scoped, tag = 'input window, operand 9']
    #allocation16 [shape = 'u8[1024]{0}', space=vmem, size = 0x400, scoped, tag = 'input window, operand 10']
    #allocation17 [shape = 'u8[1048576]{0}', space=vmem, size = 0x100000, scoped, tag = 'input window, operand 11']
    #allocation18 [shape = 'u8[16384]{0}', space=vmem, size = 0x4000, scoped, tag = 'input window, operand 12']
    #allocation19 [shape = 'u8[1048576]{0}', space=vmem, size = 0x100000, scoped, tag = 'input window, operand 13']
    #allocation20 [shape = 'u8[1024]{0}', space=vmem, size = 0x400, scoped, tag = 'input window, operand 14']
    #allocation21 [shape = 'u8[1024]{0}', space=vmem, size = 0x400, scoped, tag = 'input window, operand 15']
    #allocation22 [shape = 'u8[1024]{0}', space=vmem, size = 0x400, scoped, tag = 'input window, operand 16']
    #allocation23 [shape = 'u8[32768]{0}', space=vmem, size = 0x8000, scoped, tag = 'input window, operand 17, single buffered']
    #allocation24 [shape = 'u8[512]{0}', space=vmem, size = 0x400, scoped, tag = 'input window, operand 18, single buffered']
    #allocation25 [shape = 's32[1]{0}', space=sflag, size = 0x4, scoped, tag = 'scoped memory for transformer_classifier_forward.1']
    #allocation26 [shape = 'u8[1024]{0}', space=vmem, size = 0x400, scoped, tag = 'output window, operand 0, single buffered']
    %24 = vsyncpa [#allocation5], 0
    %25 = vsyncpa [#allocation8], 0
    %26 = vsyncpa [#allocation25], 0
    %27 = vsyncpa [#allocation6], 0
    loop: start=0, step=1, limit=6
    $region2: #{transformer_classifier_forward.1} parent=1 // loop_pre_header
      _
    $region3: #{transformer_classifier_forward.1} parent=1 // loop_header
      %s29 = sphi 0, %s33
      %p30 = scmp.ge.s32.totalorder %s29, 6
      %s37 = sphi 0, %s37
      %s39 = sphi 0, %s37
      %s40 = sphi 0, %s39
      %s54 = sphi 0, %s40
      %s58 = sphi 0, %s58
      %s60 = sphi 0, %s58
      %s61 = sphi 0, %s60
      %s75 = sphi 0, %s61
      %s79 = sphi 0, %s79
      %s81 = sphi 0, %s79
      %s82 = sphi 0, %s81
      %s96 = sphi 0, %s82
      %s102 = sphi 0, %s104
      %s105 = sphi 0, %s102
      %s106 = sphi 0, %s105
      %s122 = sphi 0, %s106
      %s128 = sphi 0, %s130
      %s131 = sphi 0, %s128
      %s132 = sphi 0, %s131
      %s148 = sphi 0, %s132
      %s154 = sphi 0, %s156
      %s157 = sphi 0, %s154
      %s158 = sphi 0, %s157
      %s174 = sphi 0, %s158
      %s180 = sphi 0, %s182
      %s183 = sphi 0, %s180
      %s184 = sphi 0, %s183
      %s200 = sphi 0, %s184
      %s212 = sphi 0, %s214
      %s215 = sphi 0, %s212
      %s216 = sphi 0, %s215
      %s232 = sphi 0, %s216
      %s244 = sphi 0, %s246
      %s247 = sphi 0, %s244
      %s248 = sphi 0, %s247
      %s264 = sphi 0, %s248
      %s276 = sphi 0, %s278
      %s279 = sphi 0, %s276
      %s280 = sphi 0, %s279
      %s296 = sphi 0, %s280
      %s308 = sphi 0, %s310
      %s311 = sphi 0, %s308
      %s312 = sphi 0, %s311
      %s328 = sphi 0, %s312
      %s334 = sphi 0, %s336
      %s337 = sphi 0, %s334
      %s338 = sphi 0, %s337
      %s354 = sphi 0, %s338
      %s360 = sphi 0, %s362
      %s363 = sphi 0, %s360
      %s364 = sphi 0, %s363
      %s380 = sphi 0, %s364
      %s386 = sphi 0, %s388
      %s389 = sphi 0, %s386
      %s390 = sphi 0, %s389
      %s406 = sphi 0, %s390
      %s412 = sphi 0, %s414
      %s415 = sphi 0, %s412
      %s416 = sphi 0, %s415
      %s432 = sphi 0, %s416
      %s438 = sphi 0, %s440
      %s441 = sphi 0, %s438
      %s442 = sphi 0, %s441
      %s458 = sphi 0, %s442
      %s464 = sphi 0, %s466
      %s467 = sphi 0, %s464
      %s468 = sphi 0, %s467
      %s484 = sphi 0, %s468
      %s488 = sphi 0, %s488
      %s490 = sphi 0, %s488
      %s491 = sphi 0, %s490
      %s505 = sphi 0, %s491
      %s509 = sphi 0, %s509
      %s511 = sphi 0, %s509
      %s512 = sphi 0, %s511
      %s526 = sphi 0, %s512
      %s530 = sphi 0, %s530
      %s532 = sphi 0, %s530
      %s533 = sphi 0, %s532
      %s547 = sphi 0, %s533
    $region4: #{transformer_classifier_forward.1} parent=1 // loop_header_branch
      %32 = sbr.rel (%p30) target = $region8
    $region5: #{transformer_classifier_forward.1} parent=1 // loop_body
      %s34 = ssub.s32 %s29, 1
      %s35 = ssub.s32 %s29, 2
      %s36 = sadd.s32 %s29, 1
      %s38 = sadd.s32 %s37, 1
      %p41 = scmp.eq.s32.totalorder %s29, 3
      %p42 = scmp.ne.s32.totalorder %s37, %s39
      %p43 = scmp.eq.s32.totalorder %s29, 0
      %p44 = por %p42, %p43
      %p45 = scmp.ne.s32.totalorder %s37, %s39
      %p46 = scmp.eq.s32.totalorder %s34, 3
      %p47 = por %p45, %p46
      %p48 = scmp.ne.s32.totalorder %s39, %s40
      %p49 = scmp.eq.s32.totalorder %s34, 0
      %p50 = por %p48, %p49
      %p51 = scmp.ne.s32.totalorder %s39, %s40
      %p52 = scmp.eq.s32.totalorder %s35, 3
      %p53 = por %p51, %p52
      %p55 = scmp.ne.s32.totalorder %s40, %s54
      %p56 = scmp.eq.s32.totalorder %s35, 0
      %p57 = por %p55, %p56
      %s59 = sadd.s32 %s58, 1
      %p62 = scmp.eq.s32.totalorder %s29, 3
      %p63 = scmp.ne.s32.totalorder %s58, %s60
      %p64 = scmp.eq.s32.totalorder %s29, 0
      %p65 = por %p63, %p64
      %p66 = scmp.ne.s32.totalorder %s58, %s60
      %p67 = scmp.eq.s32.totalorder %s34, 3
      %p68 = por %p66, %p67
      %p69 = scmp.ne.s32.totalorder %s60, %s61
      %p70 = scmp.eq.s32.totalorder %s34, 0
      %p71 = por %p69, %p70
      %p72 = scmp.ne.s32.totalorder %s60, %s61
      %p73 = scmp.eq.s32.totalorder %s35, 3
      %p74 = por %p72, %p73
      %p76 = scmp.ne.s32.totalorder %s61, %s75
      %p77 = scmp.eq.s32.totalorder %s35, 0
      %p78 = por %p76, %p77
      %s80 = sadd.s32 %s79, 1
      %p83 = scmp.eq.s32.totalorder %s29, 3
      %p84 = scmp.ne.s32.totalorder %s79, %s81
      %p85 = scmp.eq.s32.totalorder %s29, 0
      %p86 = por %p84, %p85
      %p87 = scmp.ne.s32.totalorder %s79, %s81
      %p88 = scmp.eq.s32.totalorder %s34, 3
      %p89 = por %p87, %p88
      %p90 = scmp.ne.s32.totalorder %s81, %s82
      %p91 = scmp.eq.s32.totalorder %s34, 0
      %p92 = por %p90, %p91
      %p93 = scmp.ne.s32.totalorder %s81, %s82
      %p94 = scmp.eq.s32.totalorder %s35, 3
      %p95 = por %p93, %p94
      %p97 = scmp.ne.s32.totalorder %s82, %s96
      %p98 = scmp.eq.s32.totalorder %s35, 0
      %p99 = por %p97, %p98
      %s100 = ssub.s32 %s29, %s36
      %p101 = scmp.eq.s32.totalorder %s100, 0
      %s103 = sadd.s32 %s102, 1
      %s104 = scalar_select %p101, %s102, %s103
      %p107 = pneg %p101
      %p108 = scmp.eq.s32.totalorder %s29, 3
      %p109 = por %p107, %p108
      %p110 = scmp.ne.s32.totalorder %s102, %s105
      %p111 = scmp.eq.s32.totalorder %s29, 0
      %p112 = por %p110, %p111
      %p113 = scmp.ne.s32.totalorder %s102, %s105
      %p114 = scmp.eq.s32.totalorder %s34, 3
      %p115 = por %p113, %p114
      %p116 = scmp.ne.s32.totalorder %s105, %s106
      %p117 = scmp.eq.s32.totalorder %s34, 0
      %p118 = por %p116, %p117
      %p119 = scmp.ne.s32.totalorder %s105, %s106
      %p120 = scmp.eq.s32.totalorder %s35, 3
      %p121 = por %p119, %p120
      %p123 = scmp.ne.s32.totalorder %s106, %s122
      %p124 = scmp.eq.s32.totalorder %s35, 0
      %p125 = por %p123, %p124
      %s126 = ssub.s32 %s29, %s36
      %p127 = scmp.eq.s32.totalorder %s126, 0
      %s129 = sadd.s32 %s128, 1
      %s130 = scalar_select %p127, %s128, %s129
      %p133 = pneg %p127
      %p134 = scmp.eq.s32.totalorder %s29, 3
      %p135 = por %p133, %p134
      %p136 = scmp.ne.s32.totalorder %s128, %s131
      %p137 = scmp.eq.s32.totalorder %s29, 0
      %p138 = por %p136, %p137
      %p139 = scmp.ne.s32.totalorder %s128, %s131
      %p140 = scmp.eq.s32.totalorder %s34, 3
      %p141 = por %p139, %p140
      %p142 = scmp.ne.s32.totalorder %s131, %s132
      %p143 = scmp.eq.s32.totalorder %s34, 0
      %p144 = por %p142, %p143
      %p145 = scmp.ne.s32.totalorder %s131, %s132
      %p146 = scmp.eq.s32.totalorder %s35, 3
      %p147 = por %p145, %p146
      %p149 = scmp.ne.s32.totalorder %s132, %s148
      %p150 = scmp.eq.s32.totalorder %s35, 0
      %p151 = por %p149, %p150
      %s152 = ssub.s32 %s29, %s36
      %p153 = scmp.eq.s32.totalorder %s152, 0
      %s155 = sadd.s32 %s154, 1
      %s156 = scalar_select %p153, %s154, %s155
      %p159 = pneg %p153
      %p160 = scmp.eq.s32.totalorder %s29, 3
      %p161 = por %p159, %p160
      %p162 = scmp.ne.s32.totalorder %s154, %s157
      %p163 = scmp.eq.s32.totalorder %s29, 0
      %p164 = por %p162, %p163
      %p165 = scmp.ne.s32.totalorder %s154, %s157
      %p166 = scmp.eq.s32.totalorder %s34, 3
      %p167 = por %p165, %p166
      %p168 = scmp.ne.s32.totalorder %s157, %s158
      %p169 = scmp.eq.s32.totalorder %s34, 0
      %p170 = por %p168, %p169
      %p171 = scmp.ne.s32.totalorder %s157, %s158
      %p172 = scmp.eq.s32.totalorder %s35, 3
      %p173 = por %p171, %p172
      %p175 = scmp.ne.s32.totalorder %s158, %s174
      %p176 = scmp.eq.s32.totalorder %s35, 0
      %p177 = por %p175, %p176
      %s178 = ssub.s32 %s29, %s36
      %p179 = scmp.eq.s32.totalorder %s178, 0
      %s181 = sadd.s32 %s180, 1
      %s182 = scalar_select %p179, %s180, %s181
      %p185 = pneg %p179
      %p186 = scmp.eq.s32.totalorder %s29, 3
      %p187 = por %p185, %p186
      %p188 = scmp.ne.s32.totalorder %s180, %s183
      %p189 = scmp.eq.s32.totalorder %s29, 0
      %p190 = por %p188, %p189
      %p191 = scmp.ne.s32.totalorder %s180, %s183
      %p192 = scmp.eq.s32.totalorder %s34, 3
      %p193 = por %p191, %p192
      %p194 = scmp.ne.s32.totalorder %s183, %s184
      %p195 = scmp.eq.s32.totalorder %s34, 0
      %p196 = por %p194, %p195
      %p197 = scmp.ne.s32.totalorder %s183, %s184
      %p198 = scmp.eq.s32.totalorder %s35, 3
      %p199 = por %p197, %p198
      %p201 = scmp.ne.s32.totalorder %s184, %s200
      %p202 = scmp.eq.s32.totalorder %s35, 0
      %p203 = por %p201, %p202
      %s204 = ssub.s32 %s29, 2
      %p205 = scmp.gt.s32.totalorder %s204, 0
      %s206 = scalar_select %p205, %s204, 0
      %s207 = ssub.s32 %s36, 2
      %p208 = scmp.gt.s32.totalorder %s207, 0
      %s209 = scalar_select %p208, %s207, 0
      %s210 = ssub.s32 %s206, %s209
      %p211 = scmp.eq.s32.totalorder %s210, 0
      %s213 = sadd.s32 %s212, 1
      %s214 = scalar_select %p211, %s212, %s213
      %p217 = pneg %p211
      %p218 = scmp.eq.s32.totalorder %s29, 3
      %p219 = por %p217, %p218
      %p220 = scmp.ne.s32.totalorder %s212, %s215
      %p221 = scmp.eq.s32.totalorder %s29, 0
      %p222 = por %p220, %p221
      %p223 = scmp.ne.s32.totalorder %s212, %s215
      %p224 = scmp.eq.s32.totalorder %s34, 3
      %p225 = por %p223, %p224
      %p226 = scmp.ne.s32.totalorder %s215, %s216
      %p227 = scmp.eq.s32.totalorder %s34, 0
      %p228 = por %p226, %p227
      %p229 = scmp.ne.s32.totalorder %s215, %s216
      %p230 = scmp.eq.s32.totalorder %s35, 3
      %p231 = por %p229, %p230
      %p233 = scmp.ne.s32.totalorder %s216, %s232
      %p234 = scmp.eq.s32.totalorder %s35, 0
      %p235 = por %p233, %p234
      %s236 = ssub.s32 %s29, 2
      %p237 = scmp.gt.s32.totalorder %s236, 0
      %s238 = scalar_select %p237, %s236, 0
      %s239 = ssub.s32 %s36, 2
      %p240 = scmp.gt.s32.totalorder %s239, 0
      %s241 = scalar_select %p240, %s239, 0
      %s242 = ssub.s32 %s238, %s241
      %p243 = scmp.eq.s32.totalorder %s242, 0
      %s245 = sadd.s32 %s244, 1
      %s246 = scalar_select %p243, %s244, %s245
      %p249 = pneg %p243
      %p250 = scmp.eq.s32.totalorder %s29, 3
      %p251 = por %p249, %p250
      %p252 = scmp.ne.s32.totalorder %s244, %s247
      %p253 = scmp.eq.s32.totalorder %s29, 0
      %p254 = por %p252, %p253
      %p255 = scmp.ne.s32.totalorder %s244, %s247
      %p256 = scmp.eq.s32.totalorder %s34, 3
      %p257 = por %p255, %p256
      %p258 = scmp.ne.s32.totalorder %s247, %s248
      %p259 = scmp.eq.s32.totalorder %s34, 0
      %p260 = por %p258, %p259
      %p261 = scmp.ne.s32.totalorder %s247, %s248
      %p262 = scmp.eq.s32.totalorder %s35, 3
      %p263 = por %p261, %p262
      %p265 = scmp.ne.s32.totalorder %s248, %s264
      %p266 = scmp.eq.s32.totalorder %s35, 0
      %p267 = por %p265, %p266
      %s268 = ssub.s32 %s29, 2
      %p269 = scmp.gt.s32.totalorder %s268, 0
      %s270 = scalar_select %p269, %s268, 0
      %s271 = ssub.s32 %s36, 2
      %p272 = scmp.gt.s32.totalorder %s271, 0
      %s273 = scalar_select %p272, %s271, 0
      %s274 = ssub.s32 %s270, %s273
      %p275 = scmp.eq.s32.totalorder %s274, 0
      %s277 = sadd.s32 %s276, 1
      %s278 = scalar_select %p275, %s276, %s277
      %p281 = pneg %p275
      %p282 = scmp.eq.s32.totalorder %s29, 3
      %p283 = por %p281, %p282
      %p284 = scmp.ne.s32.totalorder %s276, %s279
      %p285 = scmp.eq.s32.totalorder %s29, 0
      %p286 = por %p284, %p285
      %p287 = scmp.ne.s32.totalorder %s276, %s279
      %p288 = scmp.eq.s32.totalorder %s34, 3
      %p289 = por %p287, %p288
      %p290 = scmp.ne.s32.totalorder %s279, %s280
      %p291 = scmp.eq.s32.totalorder %s34, 0
      %p292 = por %p290, %p291
      %p293 = scmp.ne.s32.totalorder %s279, %s280
      %p294 = scmp.eq.s32.totalorder %s35, 3
      %p295 = por %p293, %p294
      %p297 = scmp.ne.s32.totalorder %s280, %s296
      %p298 = scmp.eq.s32.totalorder %s35, 0
      %p299 = por %p297, %p298
      %s300 = ssub.s32 %s29, 2
      %p301 = scmp.gt.s32.totalorder %s300, 0
      %s302 = scalar_select %p301, %s300, 0
      %s303 = ssub.s32 %s36, 2
      %p304 = scmp.gt.s32.totalorder %s303, 0
      %s305 = scalar_select %p304, %s303, 0
      %s306 = ssub.s32 %s302, %s305
      %p307 = scmp.eq.s32.totalorder %s306, 0
      %s309 = sadd.s32 %s308, 1
      %s310 = scalar_select %p307, %s308, %s309
      %p313 = pneg %p307
      %p314 = scmp.eq.s32.totalorder %s29, 3
      %p315 = por %p313, %p314
      %p316 = scmp.ne.s32.totalorder %s308, %s311
      %p317 = scmp.eq.s32.totalorder %s29, 0
      %p318 = por %p316, %p317
      %p319 = scmp.ne.s32.totalorder %s308, %s311
      %p320 = scmp.eq.s32.totalorder %s34, 3
      %p321 = por %p319, %p320
      %p322 = scmp.ne.s32.totalorder %s311, %s312
      %p323 = scmp.eq.s32.totalorder %s34, 0
      %p324 = por %p322, %p323
      %p325 = scmp.ne.s32.totalorder %s311, %s312
      %p326 = scmp.eq.s32.totalorder %s35, 3
      %p327 = por %p325, %p326
      %p329 = scmp.ne.s32.totalorder %s312, %s328
      %p330 = scmp.eq.s32.totalorder %s35, 0
      %p331 = por %p329, %p330
      %s332 = ssub.s32 %s29, %s36
      %p333 = scmp.eq.s32.totalorder %s332, 0
      %s335 = sadd.s32 %s334, 1
      %s336 = scalar_select %p333, %s334, %s335
      %p339 = pneg %p333
      %p340 = scmp.eq.s32.totalorder %s29, 3
      %p341 = por %p339, %p340
      %p342 = scmp.ne.s32.totalorder %s334, %s337
      %p343 = scmp.eq.s32.totalorder %s29, 0
      %p344 = por %p342, %p343
      %p345 = scmp.ne.s32.totalorder %s334, %s337
      %p346 = scmp.eq.s32.totalorder %s34, 3
      %p347 = por %p345, %p346
      %p348 = scmp.ne.s32.totalorder %s337, %s338
      %p349 = scmp.eq.s32.totalorder %s34, 0
      %p350 = por %p348, %p349
      %p351 = scmp.ne.s32.totalorder %s337, %s338
      %p352 = scmp.eq.s32.totalorder %s35, 3
      %p353 = por %p351, %p352
      %p355 = scmp.ne.s32.totalorder %s338, %s354
      %p356 = scmp.eq.s32.totalorder %s35, 0
      %p357 = por %p355, %p356
      %s358 = ssub.s32 %s29, %s36
      %p359 = scmp.eq.s32.totalorder %s358, 0
      %s361 = sadd.s32 %s360, 1
      %s362 = scalar_select %p359, %s360, %s361
      %p365 = pneg %p359
      %p366 = scmp.eq.s32.totalorder %s29, 3
      %p367 = por %p365, %p366
      %p368 = scmp.ne.s32.totalorder %s360, %s363
      %p369 = scmp.eq.s32.totalorder %s29, 0
      %p370 = por %p368, %p369
      %p371 = scmp.ne.s32.totalorder %s360, %s363
      %p372 = scmp.eq.s32.totalorder %s34, 3
      %p373 = por %p371, %p372
      %p374 = scmp.ne.s32.totalorder %s363, %s364
      %p375 = scmp.eq.s32.totalorder %s34, 0
      %p376 = por %p374, %p375
      %p377 = scmp.ne.s32.totalorder %s363, %s364
      %p378 = scmp.eq.s32.totalorder %s35, 3
      %p379 = por %p377, %p378
      %p381 = scmp.ne.s32.totalorder %s364, %s380
      %p382 = scmp.eq.s32.totalorder %s35, 0
      %p383 = por %p381, %p382
      %s384 = ssub.s32 %s29, %s36
      %p385 = scmp.eq.s32.totalorder %s384, 0
      %s387 = sadd.s32 %s386, 1
      %s388 = scalar_select %p385, %s386, %s387
      %p391 = pneg %p385
      %p392 = scmp.eq.s32.totalorder %s29, 3
      %p393 = por %p391, %p392
      %p394 = scmp.ne.s32.totalorder %s386, %s389
      %p395 = scmp.eq.s32.totalorder %s29, 0
      %p396 = por %p394, %p395
      %p397 = scmp.ne.s32.totalorder %s386, %s389
      %p398 = scmp.eq.s32.totalorder %s34, 3
      %p399 = por %p397, %p398
      %p400 = scmp.ne.s32.totalorder %s389, %s390
      %p401 = scmp.eq.s32.totalorder %s34, 0
      %p402 = por %p400, %p401
      %p403 = scmp.ne.s32.totalorder %s389, %s390
      %p404 = scmp.eq.s32.totalorder %s35, 3
      %p405 = por %p403, %p404
      %p407 = scmp.ne.s32.totalorder %s390, %s406
      %p408 = scmp.eq.s32.totalorder %s35, 0
      %p409 = por %p407, %p408
      %s410 = ssub.s32 %s29, %s36
      %p411 = scmp.eq.s32.totalorder %s410, 0
      %s413 = sadd.s32 %s412, 1
      %s414 = scalar_select %p411, %s412, %s413
      %p417 = pneg %p411
      %p418 = scmp.eq.s32.totalorder %s29, 3
      %p419 = por %p417, %p418
      %p420 = scmp.ne.s32.totalorder %s412, %s415
      %p421 = scmp.eq.s32.totalorder %s29, 0
      %p422 = por %p420, %p421
      %p423 = scmp.ne.s32.totalorder %s412, %s415
      %p424 = scmp.eq.s32.totalorder %s34, 3
      %p425 = por %p423, %p424
      %p426 = scmp.ne.s32.totalorder %s415, %s416
      %p427 = scmp.eq.s32.totalorder %s34, 0
      %p428 = por %p426, %p427
      %p429 = scmp.ne.s32.totalorder %s415, %s416
      %p430 = scmp.eq.s32.totalorder %s35, 3
      %p431 = por %p429, %p430
      %p433 = scmp.ne.s32.totalorder %s416, %s432
      %p434 = scmp.eq.s32.totalorder %s35, 0
      %p435 = por %p433, %p434
      %s436 = ssub.s32 %s29, %s36
      %p437 = scmp.eq.s32.totalorder %s436, 0
      %s439 = sadd.s32 %s438, 1
      %s440 = scalar_select %p437, %s438, %s439
      %p443 = pneg %p437
      %p444 = scmp.eq.s32.totalorder %s29, 3
      %p445 = por %p443, %p444
      %p446 = scmp.ne.s32.totalorder %s438, %s441
      %p447 = scmp.eq.s32.totalorder %s29, 0
      %p448 = por %p446, %p447
      %p449 = scmp.ne.s32.totalorder %s438, %s441
      %p450 = scmp.eq.s32.totalorder %s34, 3
      %p451 = por %p449, %p450
      %p452 = scmp.ne.s32.totalorder %s441, %s442
      %p453 = scmp.eq.s32.totalorder %s34, 0
      %p454 = por %p452, %p453
      %p455 = scmp.ne.s32.totalorder %s441, %s442
      %p456 = scmp.eq.s32.totalorder %s35, 3
      %p457 = por %p455, %p456
      %p459 = scmp.ne.s32.totalorder %s442, %s458
      %p460 = scmp.eq.s32.totalorder %s35, 0
      %p461 = por %p459, %p460
      %s462 = ssub.s32 %s29, %s36
      %p463 = scmp.eq.s32.totalorder %s462, 0
      %s465 = sadd.s32 %s464, 1
      %s466 = scalar_select %p463, %s464, %s465
      %p469 = pneg %p463
      %p470 = scmp.eq.s32.totalorder %s29, 3
      %p471 = por %p469, %p470
      %p472 = scmp.ne.s32.totalorder %s464, %s467
      %p473 = scmp.eq.s32.totalorder %s29, 0
      %p474 = por %p472, %p473
      %p475 = scmp.ne.s32.totalorder %s464, %s467
      %p476 = scmp.eq.s32.totalorder %s34, 3
      %p477 = por %p475, %p476
      %p478 = scmp.ne.s32.totalorder %s467, %s468
      %p479 = scmp.eq.s32.totalorder %s34, 0
      %p480 = por %p478, %p479
      %p481 = scmp.ne.s32.totalorder %s467, %s468
      %p482 = scmp.eq.s32.totalorder %s35, 3
      %p483 = por %p481, %p482
      %p485 = scmp.ne.s32.totalorder %s468, %s484
      %p486 = scmp.eq.s32.totalorder %s35, 0
      %p487 = por %p485, %p486
      %s489 = sadd.s32 %s488, 1
      %p492 = scmp.eq.s32.totalorder %s29, 3
      %p493 = scmp.ne.s32.totalorder %s488, %s490
      %p494 = scmp.eq.s32.totalorder %s29, 0
      %p495 = por %p493, %p494
      %p496 = scmp.ne.s32.totalorder %s488, %s490
      %p497 = scmp.eq.s32.totalorder %s34, 3
      %p498 = por %p496, %p497
      %p499 = scmp.ne.s32.totalorder %s490, %s491
      %p500 = scmp.eq.s32.totalorder %s34, 0
      %p501 = por %p499, %p500
      %p502 = scmp.ne.s32.totalorder %s490, %s491
      %p503 = scmp.eq.s32.totalorder %s35, 3
      %p504 = por %p502, %p503
      %p506 = scmp.ne.s32.totalorder %s491, %s505
      %p507 = scmp.eq.s32.totalorder %s35, 0
      %p508 = por %p506, %p507
      %s510 = sadd.s32 %s509, 1
      %p513 = scmp.eq.s32.totalorder %s29, 3
      %p514 = scmp.ne.s32.totalorder %s509, %s511
      %p515 = scmp.eq.s32.totalorder %s29, 0
      %p516 = por %p514, %p515
      %p517 = scmp.ne.s32.totalorder %s509, %s511
      %p518 = scmp.eq.s32.totalorder %s34, 3
      %p519 = por %p517, %p518
      %p520 = scmp.ne.s32.totalorder %s511, %s512
      %p521 = scmp.eq.s32.totalorder %s34, 0
      %p522 = por %p520, %p521
      %p523 = scmp.ne.s32.totalorder %s511, %s512
      %p524 = scmp.eq.s32.totalorder %s35, 3
      %p525 = por %p523, %p524
      %p527 = scmp.ne.s32.totalorder %s512, %s526
      %p528 = scmp.eq.s32.totalorder %s35, 0
      %p529 = por %p527, %p528
      %s531 = sadd.s32 %s530, 1
      %p534 = scmp.eq.s32.totalorder %s29, 3
      %p535 = scmp.ne.s32.totalorder %s530, %s532
      %p536 = scmp.eq.s32.totalorder %s29, 0
      %p537 = por %p535, %p536
      %p538 = scmp.ne.s32.totalorder %s530, %s532
      %p539 = scmp.eq.s32.totalorder %s34, 3
      %p540 = por %p538, %p539
      %p541 = scmp.ne.s32.totalorder %s532, %s533
      %p542 = scmp.eq.s32.totalorder %s34, 0
      %p543 = por %p541, %p542
      %p544 = scmp.ne.s32.totalorder %s532, %s533
      %p545 = scmp.eq.s32.totalorder %s35, 3
      %p546 = por %p544, %p545
      %p548 = scmp.ne.s32.totalorder %s533, %s547
      %p549 = scmp.eq.s32.totalorder %s35, 0
      %p550 = por %p548, %p549
      %p551 = scmp.le.s32.totalorder 1, %s29
      %p552 = scmp.lt.s32.totalorder %s29, 5
      %p553 = pnand %p551, %p552
      %p554 = pneg %p553
      // Predicated region
      $region9: #{transformer_classifier_forward.1} parent=5 // pred_check
        _
      $region10: #{transformer_classifier_forward.1} parent=5 // pred_check_branch
        %556 = sbr.rel (%p553) target = $region12
      $region11: #{transformer_classifier_forward.1} parent=5 // pred_region
        %s557 = ssub.s32 %s29, 1
        // Predicated region
        $region13: #{transformer_classifier_forward.1} parent=11 // pred_check
          %p558 = pneg %p50
        $region14: #{transformer_classifier_forward.1} parent=11 // pred_check_branch
          %560 = sbr.rel (%p558) target = $region16
        $region15: #{transformer_classifier_forward.1} parent=11 // pred_region
          _
        $region16: #{transformer_classifier_forward.1} parent=11 // pred_fallthru
          _
        // Predicated region
        $region17: #{transformer_classifier_forward.1} parent=11 // pred_check
          %p561 = pneg %p71
        $region18: #{transformer_classifier_forward.1} parent=11 // pred_check_branch
          %563 = sbr.rel (%p561) target = $region20
        $region19: #{transformer_classifier_forward.1} parent=11 // pred_region
          %s565 = ssub.s32 7168, 7168
          %566 = vsyncadd [#allocation5], %s565
          %s567 = sshll.u32 [#allocation4], 4
          %s568 = int_to_ptr.vmem [resolvable:$true] %s567
          %573 = dma.hbm_to_vmem [thread:$0]  %s1, 7168, %s568, [#allocation5], 64, 64, 4
        $region20: #{transformer_classifier_forward.1} parent=11 // pred_fallthru
          _
        // Predicated region
        $region21: #{transformer_classifier_forward.1} parent=11 // pred_check
          %p574 = pneg %p92
        $region22: #{transformer_classifier_forward.1} parent=11 // pred_check_branch
          %576 = sbr.rel (%p574) target = $region24
        $region23: #{transformer_classifier_forward.1} parent=11 // pred_region
          %s578 = ssub.s32 16, 16
          %579 = vsyncadd [#allocation8], %s578
          %s581 = sshll.u32 [#allocation7], 4
          %s582 = int_to_ptr.vmem [resolvable:$true] %s581
          %584 = dma.hbm_to_vmem [thread:$0]  %s2, 16, %s582, [#allocation8]
        $region24: #{transformer_classifier_forward.1} parent=11 // pred_fallthru
          _
        // Predicated region
        $region25: #{transformer_classifier_forward.1} parent=11 // pred_check
          %p585 = pneg %p501
        $region26: #{transformer_classifier_forward.1} parent=11 // pred_check_branch
          %587 = sbr.rel (%p585) target = $region28
        $region27: #{transformer_classifier_forward.1} parent=11 // pred_region
          %s589 = ssub.s32 1024, 1024
          %590 = vsyncadd [#allocation8], %s589
          %s591 = sshll.u32 [#allocation23], 4
          %s592 = int_to_ptr.vmem [resolvable:$true] %s591
          %597 = dma.hbm_to_vmem [thread:$0]  %s17, 1024, %s592, [#allocation8], 64, 64, 4
        $region28: #{transformer_classifier_forward.1} parent=11 // pred_fallthru
          _
        // Predicated region
        $region29: #{transformer_classifier_forward.1} parent=11 // pred_check
          %p598 = pneg %p522
        $region30: #{transformer_classifier_forward.1} parent=11 // pred_check_branch
          %600 = sbr.rel (%p598) target = $region32
        $region31: #{transformer_classifier_forward.1} parent=11 // pred_region
          %s602 = ssub.s32 16, 16
          %603 = vsyncadd [#allocation25], %s602
          %s605 = sshll.u32 [#allocation24], 4
          %s606 = int_to_ptr.vmem [resolvable:$true] %s605
          %608 = dma.hbm_to_vmem [thread:$0]  %s18, 16, %s606, [#allocation25]
        $region32: #{transformer_classifier_forward.1} parent=11 // pred_fallthru
          _
      $region12: #{transformer_classifier_forward.1} parent=5 // pred_fallthru
        _
      %p609 = scmp.lt.s32.totalorder %s29, 4
      // Predicated region
      $region33: #{transformer_classifier_forward.1} parent=5 // pred_check
        %p610 = pneg %p609
      $region34: #{transformer_classifier_forward.1} parent=5 // pred_check_branch
        %612 = sbr.rel (%p610) target = $region36
      $region35: #{transformer_classifier_forward.1} parent=5 // pred_region
        // Predicated region
        $region37: #{transformer_classifier_forward.1} parent=35 // pred_check
          %p613 = pneg %p112
        $region38: #{transformer_classifier_forward.1} parent=35 // pred_check_branch
          %615 = sbr.rel (%p613) target = $region40
        $region39: #{transformer_classifier_forward.1} parent=35 // pred_region
          %s616 = sand.u32 %s29, 1
          %s617 = scalar_lea.sflag [#allocation5], %s616
          %s618 = sand.u32 %s102, 1
          %s619 = smul.addr %s618, 64
          %s620 = scalar_lea.vmem [#allocation9], %s619
          %s622 = ssub.s32 1024, 1024
          %623 = vsyncadd %s617, %s622
          %s624 = smul.addr %s29, 16
          %s625 = smul.addr %s624, 64
          %s626 = scalar_lea.hbm %s3, %s625
          %s627 = sshll.u32 %s620, 4
          %s628 = int_to_ptr.vmem [resolvable:$true] %s627
          %633 = dma.hbm_to_vmem [thread:$0]  %s626, 1024, %s628, %s617, 64, 64, 4
        $region40: #{transformer_classifier_forward.1} parent=35 // pred_fallthru
          _
        // Predicated region
        $region41: #{transformer_classifier_forward.1} parent=35 // pred_check
          %p634 = pneg %p138
        $region42: #{transformer_classifier_forward.1} parent=35 // pred_check_branch
          %636 = sbr.rel (%p634) target = $region44
        $region43: #{transformer_classifier_forward.1} parent=35 // pred_region
          %s637 = sand.u32 %s29, 1
          %s638 = scalar_lea.sflag [#allocation5], %s637
          %s639 = sand.u32 %s128, 1
          %s640 = scalar_lea.vmem [#allocation10], %s639
          %s642 = ssub.s32 16, 16
          %643 = vsyncadd %s638, %s642
          %s644 = smul.addr %s29, 16
          %s645 = scalar_lea.hbm %s4, %s644
          %s647 = sshll.u32 %s640, 4
          %s648 = int_to_ptr.vmem [resolvable:$true] %s647
          %650 = dma.hbm_to_vmem [thread:$0]  %s645, 16, %s648, %s638
        $region44: #{transformer_classifier_forward.1} parent=35 // pred_fallthru
          _
        // Predicated region
        $region45: #{transformer_classifier_forward.1} parent=35 // pred_check
          %p651 = pneg %p164
        $region46: #{transformer_classifier_forward.1} parent=35 // pred_check_branch
          %653 = sbr.rel (%p651) target = $region48
        $region47: #{transformer_classifier_forward.1} parent=35 // pred_region
          %s654 = sand.u32 %s29, 1
          %s655 = scalar_lea.sflag [#allocation5], %s654
          %s656 = sand.u32 %s154, 1
          %s657 = scalar_lea.vmem [#allocation11], %s656
          %s659 = ssub.s32 16, 16
          %660 = vsyncadd %s655, %s659
          %s661 = smul.addr %s29, 16
          %s662 = scalar_lea.hbm %s5, %s661
          %s664 = sshll.u32 %s657, 4
          %s665 = int_to_ptr.vmem [resolvable:$true] %s664
          %667 = dma.hbm_to_vmem [thread:$0]  %s662, 16, %s665, %s655
        $region48: #{transformer_classifier_forward.1} parent=35 // pred_fallthru
          _
        // Predicated region
        $region49: #{transformer_classifier_forward.1} parent=35 // pred_check
          %p668 = pneg %p190
        $region50: #{transformer_classifier_forward.1} parent=35 // pred_check_branch
          %670 = sbr.rel (%p668) target = $region52
        $region51: #{transformer_classifier_forward.1} parent=35 // pred_region
          %s671 = sand.u32 %s29, 1
          %s672 = scalar_lea.sflag [#allocation5], %s671
          %s673 = sand.u32 %s180, 1
          %s674 = scalar_lea.vmem [#allocation12], %s673
          %s676 = ssub.s32 16, 16
          %677 = vsyncadd %s672, %s676
          %s678 = smul.addr %s29, 16
          %s679 = scalar_lea.hbm %s6, %s678
          %s681 = sshll.u32 %s674, 4
          %s682 = int_to_ptr.vmem [resolvable:$true] %s681
          %684 = dma.hbm_to_vmem [thread:$0]  %s679, 16, %s682, %s672
        $region52: #{transformer_classifier_forward.1} parent=35 // pred_fallthru
          _
        // Predicated region
        $region53: #{transformer_classifier_forward.1} parent=35 // pred_check
          %p685 = pneg %p222
        $region54: #{transformer_classifier_forward.1} parent=35 // pred_check_branch
          %687 = sbr.rel (%p685) target = $region56
        $region55: #{transformer_classifier_forward.1} parent=35 // pred_region
          %s688 = sand.u32 %s29, 1
          %s689 = scalar_lea.sflag [#allocation5], %s688
          %s690 = sand.u32 %s212, 1
          %s691 = smul.addr %s690, 64
          %s692 = scalar_lea.vmem [#allocation13], %s691
          %s693 = ssub.s32 %s29, 2
          %p694 = scmp.gt.s32.totalorder %s693, 0
          %s695 = scalar_select %p694, %s693, 0
          %s697 = ssub.s32 1024, 1024
          %698 = vsyncadd %s689, %s697
          %s699 = smul.addr %s695, 16
          %s700 = smul.addr %s699, 64
          %s701 = scalar_lea.hbm %s7, %s700
          %s702 = sshll.u32 %s692, 4
          %s703 = int_to_ptr.vmem [resolvable:$true] %s702
          %708 = dma.hbm_to_vmem [thread:$0]  %s701, 1024, %s703, %s689, 64, 64, 4
        $region56: #{transformer_classifier_forward.1} parent=35 // pred_fallthru
          _
        // Predicated region
        $region57: #{transformer_classifier_forward.1} parent=35 // pred_check
          %p709 = pneg %p254
        $region58: #{transformer_classifier_forward.1} parent=35 // pred_check_branch
          %711 = sbr.rel (%p709) target = $region60
        $region59: #{transformer_classifier_forward.1} parent=35 // pred_region
          %s712 = sand.u32 %s29, 1
          %s713 = scalar_lea.sflag [#allocation5], %s712
          %s714 = sand.u32 %s244, 1
          %s715 = scalar_lea.vmem [#allocation14], %s714
          %s716 = ssub.s32 %s29, 2
          %p717 = scmp.gt.s32.totalorder %s716, 0
          %s718 = scalar_select %p717, %s716, 0
          %s720 = ssub.s32 16, 16
          %721 = vsyncadd %s713, %s720
          %s722 = smul.addr %s718, 16
          %s723 = scalar_lea.hbm %s8, %s722
          %s725 = sshll.u32 %s715, 4
          %s726 = int_to_ptr.vmem [resolvable:$true] %s725
          %728 = dma.hbm_to_vmem [thread:$0]  %s723, 16, %s726, %s713
        $region60: #{transformer_classifier_forward.1} parent=35 // pred_fallthru
          _
        // Predicated region
        $region61: #{transformer_classifier_forward.1} parent=35 // pred_check
          %p729 = pneg %p286
        $region62: #{transformer_classifier_forward.1} parent=35 // pred_check_branch
          %731 = sbr.rel (%p729) target = $region64
        $region63: #{transformer_classifier_forward.1} parent=35 // pred_region
          %s732 = sand.u32 %s29, 1
          %s733 = scalar_lea.sflag [#allocation5], %s732
          %s734 = sand.u32 %s276, 1
          %s735 = scalar_lea.vmem [#allocation15], %s734
          %s736 = ssub.s32 %s29, 2
          %p737 = scmp.gt.s32.totalorder %s736, 0
          %s738 = scalar_select %p737, %s736, 0
          %s740 = ssub.s32 16, 16
          %741 = vsyncadd %s733, %s740
          %s742 = smul.addr %s738, 16
          %s743 = scalar_lea.hbm %s9, %s742
          %s745 = sshll.u32 %s735, 4
          %s746 = int_to_ptr.vmem [resolvable:$true] %s745
          %748 = dma.hbm_to_vmem [thread:$0]  %s743, 16, %s746, %s733
        $region64: #{transformer_classifier_forward.1} parent=35 // pred_fallthru
          _
        // Predicated region
        $region65: #{transformer_classifier_forward.1} parent=35 // pred_check
          %p749 = pneg %p318
        $region66: #{transformer_classifier_forward.1} parent=35 // pred_check_branch
          %751 = sbr.rel (%p749) target = $region68
        $region67: #{transformer_classifier_forward.1} parent=35 // pred_region
          %s752 = sand.u32 %s29, 1
          %s753 = scalar_lea.sflag [#allocation5], %s752
          %s754 = sand.u32 %s308, 1
          %s755 = scalar_lea.vmem [#allocation16], %s754
          %s756 = ssub.s32 %s29, 2
          %p757 = scmp.gt.s32.totalorder %s756, 0
          %s758 = scalar_select %p757, %s756, 0
          %s760 = ssub.s32 16, 16
          %761 = vsyncadd %s753, %s760
          %s762 = smul.addr %s758, 16
          %s763 = scalar_lea.hbm %s10, %s762
          %s765 = sshll.u32 %s755, 4
          %s766 = int_to_ptr.vmem [resolvable:$true] %s765
          %768 = dma.hbm_to_vmem [thread:$0]  %s763, 16, %s766, %s753
        $region68: #{transformer_classifier_forward.1} parent=35 // pred_fallthru
          _
        // Predicated region
        $region69: #{transformer_classifier_forward.1} parent=35 // pred_check
          %p769 = pneg %p344
        $region70: #{transformer_classifier_forward.1} parent=35 // pred_check_branch
          %771 = sbr.rel (%p769) target = $region72
        $region71: #{transformer_classifier_forward.1} parent=35 // pred_region
          %s772 = sand.u32 %s29, 1
          %s773 = scalar_lea.sflag [#allocation5], %s772
          %s774 = sand.u32 %s334, 1
          %s775 = smul.addr %s774, 1024
          %s776 = scalar_lea.vmem [#allocation17], %s775
          %s778 = ssub.s32 16384, 16384
          %779 = vsyncadd %s773, %s778
          %s780 = smul.addr %s29, 256
          %s781 = smul.addr %s780, 64
          %s782 = scalar_lea.hbm %s11, %s781
          %s783 = sshll.u32 %s776, 4
          %s784 = int_to_ptr.vmem [resolvable:$true] %s783
          %789 = dma.hbm_to_vmem [thread:$0]  %s782, 16384, %s784, %s773, 1024, 1024, 64
        $region72: #{transformer_classifier_forward.1} parent=35 // pred_fallthru
          _
        // Predicated region
        $region73: #{transformer_classifier_forward.1} parent=35 // pred_check
          %p790 = pneg %p370
        $region74: #{transformer_classifier_forward.1} parent=35 // pred_check_branch
          %792 = sbr.rel (%p790) target = $region76
        $region75: #{transformer_classifier_forward.1} parent=35 // pred_region
          %s793 = sand.u32 %s29, 1
          %s794 = scalar_lea.sflag [#allocation5], %s793
          %s795 = sand.u32 %s360, 1
          %s796 = smul.addr %s795, 16
          %s797 = scalar_lea.vmem [#allocation18], %s796
          %s799 = ssub.s32 256, 256
          %800 = vsyncadd %s794, %s799
          %s801 = smul.addr %s29, 16
          %s802 = smul.addr %s801, 16
          %s803 = scalar_lea.hbm %s12, %s802
          %s805 = sshll.u32 %s797, 4
          %s806 = int_to_ptr.vmem [resolvable:$true] %s805
          %808 = dma.hbm_to_vmem [thread:$0]  %s803, 256, %s806, %s794
        $region76: #{transformer_classifier_forward.1} parent=35 // pred_fallthru
          _
        // Predicated region
        $region77: #{transformer_classifier_forward.1} parent=35 // pred_check
          %p809 = pneg %p396
        $region78: #{transformer_classifier_forward.1} parent=35 // pred_check_branch
          %811 = sbr.rel (%p809) target = $region80
        $region79: #{transformer_classifier_forward.1} parent=35 // pred_region
          %s812 = sand.u32 %s29, 1
          %s813 = scalar_lea.sflag [#allocation5], %s812
          %s814 = sand.u32 %s386, 1
          %s815 = smul.addr %s814, 1024
          %s816 = scalar_lea.vmem [#allocation19], %s815
          %s818 = ssub.s32 16384, 16384
          %819 = vsyncadd %s813, %s818
          %s820 = smul.addr %s29, 256
          %s821 = smul.addr %s820, 64
          %s822 = scalar_lea.hbm %s13, %s821
          %s823 = sshll.u32 %s816, 4
          %s824 = int_to_ptr.vmem [resolvable:$true] %s823
          %829 = dma.hbm_to_vmem [thread:$0]  %s822, 16384, %s824, %s813, 64, 64, 4
        $region80: #{transformer_classifier_forward.1} parent=35 // pred_fallthru
          _
        // Predicated region
        $region81: #{transformer_classifier_forward.1} parent=35 // pred_check
          %p830 = pneg %p422
        $region82: #{transformer_classifier_forward.1} parent=35 // pred_check_branch
          %832 = sbr.rel (%p830) target = $region84
        $region83: #{transformer_classifier_forward.1} parent=35 // pred_region
          %s833 = sand.u32 %s29, 1
          %s834 = scalar_lea.sflag [#allocation5], %s833
          %s835 = sand.u32 %s412, 1
          %s836 = scalar_lea.vmem [#allocation20], %s835
          %s838 = ssub.s32 16, 16
          %839 = vsyncadd %s834, %s838
          %s840 = smul.addr %s29, 16
          %s841 = scalar_lea.hbm %s14, %s840
          %s843 = sshll.u32 %s836, 4
          %s844 = int_to_ptr.vmem [resolvable:$true] %s843
          %846 = dma.hbm_to_vmem [thread:$0]  %s841, 16, %s844, %s834
        $region84: #{transformer_classifier_forward.1} parent=35 // pred_fallthru
          _
        // Predicated region
        $region85: #{transformer_classifier_forward.1} parent=35 // pred_check
          %p847 = pneg %p448
        $region86: #{transformer_classifier_forward.1} parent=35 // pred_check_branch
          %849 = sbr.rel (%p847) target = $region88
        $region87: #{transformer_classifier_forward.1} parent=35 // pred_region
          %s850 = sand.u32 %s29, 1
          %s851 = scalar_lea.sflag [#allocation5], %s850
          %s852 = sand.u32 %s438, 1
          %s853 = scalar_lea.vmem [#allocation21], %s852
          %s855 = ssub.s32 16, 16
          %856 = vsyncadd %s851, %s855
          %s857 = smul.addr %s29, 16
          %s858 = scalar_lea.hbm %s15, %s857
          %s860 = sshll.u32 %s853, 4
          %s861 = int_to_ptr.vmem [resolvable:$true] %s860
          %863 = dma.hbm_to_vmem [thread:$0]  %s858, 16, %s861, %s851
        $region88: #{transformer_classifier_forward.1} parent=35 // pred_fallthru
          _
        // Predicated region
        $region89: #{transformer_classifier_forward.1} parent=35 // pred_check
          %p864 = pneg %p474
        $region90: #{transformer_classifier_forward.1} parent=35 // pred_check_branch
          %866 = sbr.rel (%p864) target = $region92
        $region91: #{transformer_classifier_forward.1} parent=35 // pred_region
          %s867 = sand.u32 %s29, 1
          %s868 = scalar_lea.sflag [#allocation5], %s867
          %s869 = sand.u32 %s464, 1
          %s870 = scalar_lea.vmem [#allocation22], %s869
          %s872 = ssub.s32 16, 16
          %873 = vsyncadd %s868, %s872
          %s874 = smul.addr %s29, 16
          %s875 = scalar_lea.hbm %s16, %s874
          %s877 = sshll.u32 %s870, 4
          %s878 = int_to_ptr.vmem [resolvable:$true] %s877
          %880 = dma.hbm_to_vmem [thread:$0]  %s875, 16, %s878, %s868
        $region92: #{transformer_classifier_forward.1} parent=35 // pred_fallthru
          _
      $region36: #{transformer_classifier_forward.1} parent=5 // pred_fallthru
        _
      %p881 = scmp.le.s32.totalorder 1, %s29
      %p882 = scmp.lt.s32.totalorder %s29, 5
      %p883 = pnand %p881, %p882
      %p884 = pneg %p883
      // Predicated region
      $region93: #{transformer_classifier_forward.1} parent=5 // pred_check
        _
      $region94: #{transformer_classifier_forward.1} parent=5 // pred_check_branch
        %886 = sbr.rel (%p883) target = $region96
      $region95: #{transformer_classifier_forward.1} parent=5 // pred_region
        %s887 = ssub.s32 %s29, 1
        // Predicated region
        $region97: #{transformer_classifier_forward.1} parent=95 // pred_check
          %p888 = pneg %p71
        $region98: #{transformer_classifier_forward.1} parent=95 // pred_check_branch
          %890 = sbr.rel (%p888) target = $region100
        $region99: #{transformer_classifier_forward.1} parent=95 // pred_region
          %891 = dma.done [#allocation5], 7168
        $region100: #{transformer_classifier_forward.1} parent=95 // pred_fallthru
          _
        // Predicated region
        $region101: #{transformer_classifier_forward.1} parent=95 // pred_check
          %p892 = pneg %p92
        $region102: #{transformer_classifier_forward.1} parent=95 // pred_check_branch
          %894 = sbr.rel (%p892) target = $region104
        $region103: #{transformer_classifier_forward.1} parent=95 // pred_region
          %895 = dma.done [#allocation8], 16
        $region104: #{transformer_classifier_forward.1} parent=95 // pred_fallthru
          _
        %s896 = sand.u32 %s34, 1
        %s897 = scalar_lea.sflag [#allocation5], %s896
        %s898 = sand.u32 %s105, 1
        %s899 = smul.addr %s898, 64
        %s900 = scalar_lea.vmem [#allocation9], %s899
        // Predicated region
        $region105: #{transformer_classifier_forward.1} parent=95 // pred_check
          %p901 = pneg %p118
        $region106: #{transformer_classifier_forward.1} parent=95 // pred_check_branch
          %903 = sbr.rel (%p901) target = $region108
        $region107: #{transformer_classifier_forward.1} parent=95 // pred_region
          %904 = dma.done %s897, 1024
        $region108: #{transformer_classifier_forward.1} parent=95 // pred_fallthru
          _
        %s905 = sand.u32 %s34, 1
        %s906 = scalar_lea.sflag [#allocation5], %s905
        %s907 = sand.u32 %s131, 1
        %s908 = scalar_lea.vmem [#allocation10], %s907
        // Predicated region
        $region109: #{transformer_classifier_forward.1} parent=95 // pred_check
          %p909 = pneg %p144
        $region110: #{transformer_classifier_forward.1} parent=95 // pred_check_branch
          %911 = sbr.rel (%p909) target = $region112
        $region111: #{transformer_classifier_forward.1} parent=95 // pred_region
          %912 = dma.done %s906, 16
        $region112: #{transformer_classifier_forward.1} parent=95 // pred_fallthru
          _
        %s913 = sand.u32 %s34, 1
        %s914 = scalar_lea.sflag [#allocation5], %s913
        %s915 = sand.u32 %s157, 1
        %s916 = scalar_lea.vmem [#allocation11], %s915
        // Predicated region
        $region113: #{transformer_classifier_forward.1} parent=95 // pred_check
          %p917 = pneg %p170
        $region114: #{transformer_classifier_forward.1} parent=95 // pred_check_branch
          %919 = sbr.rel (%p917) target = $region116
        $region115: #{transformer_classifier_forward.1} parent=95 // pred_region
          %920 = dma.done %s914, 16
        $region116: #{transformer_classifier_forward.1} parent=95 // pred_fallthru
          _
        %s921 = sand.u32 %s34, 1
        %s922 = scalar_lea.sflag [#allocation5], %s921
        %s923 = sand.u32 %s183, 1
        %s924 = scalar_lea.vmem [#allocation12], %s923
        // Predicated region
        $region117: #{transformer_classifier_forward.1} parent=95 // pred_check
          %p925 = pneg %p196
        $region118: #{transformer_classifier_forward.1} parent=95 // pred_check_branch
          %927 = sbr.rel (%p925) target = $region120
        $region119: #{transformer_classifier_forward.1} parent=95 // pred_region
          %928 = dma.done %s922, 16
        $region120: #{transformer_classifier_forward.1} parent=95 // pred_fallthru
          _
        %s929 = sand.u32 %s34, 1
        %s930 = scalar_lea.sflag [#allocation5], %s929
        %s931 = sand.u32 %s215, 1
        %s932 = smul.addr %s931, 64
        %s933 = scalar_lea.vmem [#allocation13], %s932
        // Predicated region
        $region121: #{transformer_classifier_forward.1} parent=95 // pred_check
          %p934 = pneg %p228
        $region122: #{transformer_classifier_forward.1} parent=95 // pred_check_branch
          %936 = sbr.rel (%p934) target = $region124
        $region123: #{transformer_classifier_forward.1} parent=95 // pred_region
          %937 = dma.done %s930, 1024
        $region124: #{transformer_classifier_forward.1} parent=95 // pred_fallthru
          _
        %s938 = sand.u32 %s34, 1
        %s939 = scalar_lea.sflag [#allocation5], %s938
        %s940 = sand.u32 %s247, 1
        %s941 = scalar_lea.vmem [#allocation14], %s940
        // Predicated region
        $region125: #{transformer_classifier_forward.1} parent=95 // pred_check
          %p942 = pneg %p260
        $region126: #{transformer_classifier_forward.1} parent=95 // pred_check_branch
          %944 = sbr.rel (%p942) target = $region128
        $region127: #{transformer_classifier_forward.1} parent=95 // pred_region
          %945 = dma.done %s939, 16
        $region128: #{transformer_classifier_forward.1} parent=95 // pred_fallthru
          _
        %s946 = sand.u32 %s34, 1
        %s947 = scalar_lea.sflag [#allocation5], %s946
        %s948 = sand.u32 %s279, 1
        %s949 = scalar_lea.vmem [#allocation15], %s948
        // Predicated region
        $region129: #{transformer_classifier_forward.1} parent=95 // pred_check
          %p950 = pneg %p292
        $region130: #{transformer_classifier_forward.1} parent=95 // pred_check_branch
          %952 = sbr.rel (%p950) target = $region132
        $region131: #{transformer_classifier_forward.1} parent=95 // pred_region
          %953 = dma.done %s947, 16
        $region132: #{transformer_classifier_forward.1} parent=95 // pred_fallthru
          _
        %s954 = sand.u32 %s34, 1
        %s955 = scalar_lea.sflag [#allocation5], %s954
        %s956 = sand.u32 %s311, 1
        %s957 = scalar_lea.vmem [#allocation16], %s956
        // Predicated region
        $region133: #{transformer_classifier_forward.1} parent=95 // pred_check
          %p958 = pneg %p324
        $region134: #{transformer_classifier_forward.1} parent=95 // pred_check_branch
          %960 = sbr.rel (%p958) target = $region136
        $region135: #{transformer_classifier_forward.1} parent=95 // pred_region
          %961 = dma.done %s955, 16
        $region136: #{transformer_classifier_forward.1} parent=95 // pred_fallthru
          _
        %s962 = sand.u32 %s34, 1
        %s963 = scalar_lea.sflag [#allocation5], %s962
        %s964 = sand.u32 %s337, 1
        %s965 = smul.addr %s964, 1024
        %s966 = scalar_lea.vmem [#allocation17], %s965
        // Predicated region
        $region137: #{transformer_classifier_forward.1} parent=95 // pred_check
          %p967 = pneg %p350
        $region138: #{transformer_classifier_forward.1} parent=95 // pred_check_branch
          %969 = sbr.rel (%p967) target = $region140
        $region139: #{transformer_classifier_forward.1} parent=95 // pred_region
          %970 = dma.done %s963, 16384
        $region140: #{transformer_classifier_forward.1} parent=95 // pred_fallthru
          _
        %s971 = sand.u32 %s34, 1
        %s972 = scalar_lea.sflag [#allocation5], %s971
        %s973 = sand.u32 %s363, 1
        %s974 = smul.addr %s973, 16
        %s975 = scalar_lea.vmem [#allocation18], %s974
        // Predicated region
        $region141: #{transformer_classifier_forward.1} parent=95 // pred_check
          %p976 = pneg %p376
        $region142: #{transformer_classifier_forward.1} parent=95 // pred_check_branch
          %978 = sbr.rel (%p976) target = $region144
        $region143: #{transformer_classifier_forward.1} parent=95 // pred_region
          %979 = dma.done %s972, 256
        $region144: #{transformer_classifier_forward.1} parent=95 // pred_fallthru
          _
        %s980 = sand.u32 %s34, 1
        %s981 = scalar_lea.sflag [#allocation5], %s980
        %s982 = sand.u32 %s389, 1
        %s983 = smul.addr %s982, 1024
        %s984 = scalar_lea.vmem [#allocation19], %s983
        // Predicated region
        $region145: #{transformer_classifier_forward.1} parent=95 // pred_check
          %p985 = pneg %p402
        $region146: #{transformer_classifier_forward.1} parent=95 // pred_check_branch
          %987 = sbr.rel (%p985) target = $region148
        $region147: #{transformer_classifier_forward.1} parent=95 // pred_region
          %988 = dma.done %s981, 16384
        $region148: #{transformer_classifier_forward.1} parent=95 // pred_fallthru
          _
        %s989 = sand.u32 %s34, 1
        %s990 = scalar_lea.sflag [#allocation5], %s989
        %s991 = sand.u32 %s415, 1
        %s992 = scalar_lea.vmem [#allocation20], %s991
        // Predicated region
        $region149: #{transformer_classifier_forward.1} parent=95 // pred_check
          %p993 = pneg %p428
        $region150: #{transformer_classifier_forward.1} parent=95 // pred_check_branch
          %995 = sbr.rel (%p993) target = $region152
        $region151: #{transformer_classifier_forward.1} parent=95 // pred_region
          %996 = dma.done %s990, 16
        $region152: #{transformer_classifier_forward.1} parent=95 // pred_fallthru
          _
        %s997 = sand.u32 %s34, 1
        %s998 = scalar_lea.sflag [#allocation5], %s997
        %s999 = sand.u32 %s441, 1
        %s1000 = scalar_lea.vmem [#allocation21], %s999
        // Predicated region
        $region153: #{transformer_classifier_forward.1} parent=95 // pred_check
          %p1001 = pneg %p454
        $region154: #{transformer_classifier_forward.1} parent=95 // pred_check_branch
          %1003 = sbr.rel (%p1001) target = $region156
        $region155: #{transformer_classifier_forward.1} parent=95 // pred_region
          %1004 = dma.done %s998, 16
        $region156: #{transformer_classifier_forward.1} parent=95 // pred_fallthru
          _
        %s1005 = sand.u32 %s34, 1
        %s1006 = scalar_lea.sflag [#allocation5], %s1005
        %s1007 = sand.u32 %s467, 1
        %s1008 = scalar_lea.vmem [#allocation22], %s1007
        // Predicated region
        $region157: #{transformer_classifier_forward.1} parent=95 // pred_check
          %p1009 = pneg %p480
        $region158: #{transformer_classifier_forward.1} parent=95 // pred_check_branch
          %1011 = sbr.rel (%p1009) target = $region160
        $region159: #{transformer_classifier_forward.1} parent=95 // pred_region
          %1012 = dma.done %s1006, 16
        $region160: #{transformer_classifier_forward.1} parent=95 // pred_fallthru
          _
        // Predicated region
        $region161: #{transformer_classifier_forward.1} parent=95 // pred_check
          %p1013 = pneg %p501
        $region162: #{transformer_classifier_forward.1} parent=95 // pred_check_branch
          %1015 = sbr.rel (%p1013) target = $region164
        $region163: #{transformer_classifier_forward.1} parent=95 // pred_region
          %1016 = dma.done [#allocation8], 1024
        $region164: #{transformer_classifier_forward.1} parent=95 // pred_fallthru
          _
        // Predicated region
        $region165: #{transformer_classifier_forward.1} parent=95 // pred_check
          %p1017 = pneg %p522
        $region166: #{transformer_classifier_forward.1} parent=95 // pred_check_branch
          %1019 = sbr.rel (%p1017) target = $region168
        $region167: #{transformer_classifier_forward.1} parent=95 // pred_region
          %1020 = dma.done [#allocation25], 16
        $region168: #{transformer_classifier_forward.1} parent=95 // pred_fallthru
          _
        %p1021 = pneg %p50
        %p1022 = pneg %p47
        %p1023 = pneg %p71
        %p1024 = pneg %p68
        %p1025 = pneg %p92
        %p1026 = pneg %p89
        %s1027 = sand.u32 %s34, 1
        %s1028 = scalar_lea.sflag [#allocation5], %s1027
        %s1029 = sand.u32 %s105, 1
        %s1030 = smul.addr %s1029, 64
        %s1031 = scalar_lea.vmem [#allocation9], %s1030
        %p1032 = pneg %p118
        %p1033 = pneg %p115
        %s1034 = sand.u32 %s34, 1
        %s1035 = scalar_lea.sflag [#allocation5], %s1034
        %s1036 = sand.u32 %s131, 1
        %s1037 = scalar_lea.vmem [#allocation10], %s1036
        %p1038 = pneg %p144
        %p1039 = pneg %p141
        %s1040 = sand.u32 %s34, 1
        %s1041 = scalar_lea.sflag [#allocation5], %s1040
        %s1042 = sand.u32 %s157, 1
        %s1043 = scalar_lea.vmem [#allocation11], %s1042
        %p1044 = pneg %p170
        %p1045 = pneg %p167
        %s1046 = sand.u32 %s34, 1
        %s1047 = scalar_lea.sflag [#allocation5], %s1046
        %s1048 = sand.u32 %s183, 1
        %s1049 = scalar_lea.vmem [#allocation12], %s1048
        %p1050 = pneg %p196
        %p1051 = pneg %p193
        %s1052 = sand.u32 %s34, 1
        %s1053 = scalar_lea.sflag [#allocation5], %s1052
        %s1054 = sand.u32 %s215, 1
        %s1055 = smul.addr %s1054, 64
        %s1056 = scalar_lea.vmem [#allocation13], %s1055
        %p1057 = pneg %p228
        %p1058 = pneg %p225
        %s1059 = sand.u32 %s34, 1
        %s1060 = scalar_lea.sflag [#allocation5], %s1059
        %s1061 = sand.u32 %s247, 1
        %s1062 = scalar_lea.vmem [#allocation14], %s1061
        %p1063 = pneg %p260
        %p1064 = pneg %p257
        %s1065 = sand.u32 %s34, 1
        %s1066 = scalar_lea.sflag [#allocation5], %s1065
        %s1067 = sand.u32 %s279, 1
        %s1068 = scalar_lea.vmem [#allocation15], %s1067
        %p1069 = pneg %p292
        %p1070 = pneg %p289
        %s1071 = sand.u32 %s34, 1
        %s1072 = scalar_lea.sflag [#allocation5], %s1071
        %s1073 = sand.u32 %s311, 1
        %s1074 = scalar_lea.vmem [#allocation16], %s1073
        %p1075 = pneg %p324
        %p1076 = pneg %p321
        %s1077 = sand.u32 %s34, 1
        %s1078 = scalar_lea.sflag [#allocation5], %s1077
        %s1079 = sand.u32 %s337, 1
        %s1080 = smul.addr %s1079, 1024
        %s1081 = scalar_lea.vmem [#allocation17], %s1080
        %p1082 = pneg %p350
        %p1083 = pneg %p347
        %s1084 = sand.u32 %s34, 1
        %s1085 = scalar_lea.sflag [#allocation5], %s1084
        %s1086 = sand.u32 %s363, 1
        %s1087 = smul.addr %s1086, 16
        %s1088 = scalar_lea.vmem [#allocation18], %s1087
        %p1089 = pneg %p376
        %p1090 = pneg %p373
        %s1091 = sand.u32 %s34, 1
        %s1092 = scalar_lea.sflag [#allocation5], %s1091
        %s1093 = sand.u32 %s389, 1
        %s1094 = smul.addr %s1093, 1024
        %s1095 = scalar_lea.vmem [#allocation19], %s1094
        %p1096 = pneg %p402
        %p1097 = pneg %p399
        %s1098 = sand.u32 %s34, 1
        %s1099 = scalar_lea.sflag [#allocation5], %s1098
        %s1100 = sand.u32 %s415, 1
        %s1101 = scalar_lea.vmem [#allocation20], %s1100
        %p1102 = pneg %p428
        %p1103 = pneg %p425
        %s1104 = sand.u32 %s34, 1
        %s1105 = scalar_lea.sflag [#allocation5], %s1104
        %s1106 = sand.u32 %s441, 1
        %s1107 = scalar_lea.vmem [#allocation21], %s1106
        %p1108 = pneg %p454
        %p1109 = pneg %p451
        %s1110 = sand.u32 %s34, 1
        %s1111 = scalar_lea.sflag [#allocation5], %s1110
        %s1112 = sand.u32 %s467, 1
        %s1113 = scalar_lea.vmem [#allocation22], %s1112
        %p1114 = pneg %p480
        %p1115 = pneg %p477
        %p1116 = pneg %p501
        %p1117 = pneg %p498
        %p1118 = pneg %p522
        %p1119 = pneg %p519
        %p1120 = pneg %p543
        %p1121 = pneg %p540
        %s1122 = ssub.s32 %s34, 2
        %p1123 = scmp.gt.s32.totalorder %s1122, 0
        %s1124 = scalar_select %p1123, %s1122, 0
        %s1125 = ssub.s32 %s34, 2
        %p1126 = scmp.gt.s32.totalorder %s1125, 0
        %s1127 = scalar_select %p1126, %s1125, 0
        %s1128 = ssub.s32 %s34, 2
        %p1129 = scmp.gt.s32.totalorder %s1128, 0
        %s1130 = scalar_select %p1129, %s1128, 0
        %s1131 = ssub.s32 %s34, 2
        %p1132 = scmp.gt.s32.totalorder %s1131, 0
        %s1133 = scalar_select %p1132, %s1131, 0
        %p1135 = scmp.eq.s32.totalorder %s34, 0
        // Predicated region
        $region169: #{transformer_classifier_forward.1} parent=95 // pred_check
          %p1136 = pneg %p1135
        $region170: #{transformer_classifier_forward.1} parent=95 // pred_check_branch
          %1138 = sbr.rel (%p1136) target = $region172
        $region171: #{transformer_classifier_forward.1} parent=95 // pred_region
          %v1139 = vld [vmem:[%s0] sm:$0xff]
          %v1140 = vld [vmem:[%s0 + $0x8] sm:$0x3f]
          %v1141 = vld [vmem:[#allocation4] sm:$0xf]
          %v1142 = vld [vmem:[#allocation4 + $0x4] sm:$0xf]
          %v1143 = vld [vmem:[#allocation4 + $0x8] sm:$0xf]
          %v1144 = vld [vmem:[#allocation4 + $0xc] sm:$0xf]
          %v1145 = vld [vmem:[#allocation4 + $0x10] sm:$0xf]
          %v1146 = vld [vmem:[#allocation4 + $0x14] sm:$0xf]
          %v1147 = vld [vmem:[#allocation4 + $0x18] sm:$0xf]
          %v1148 = vld [vmem:[#allocation4 + $0x1c] sm:$0xf]
          %v1149 = vld [vmem:[#allocation4 + $0x20] sm:$0xf]
          %v1150 = vld [vmem:[#allocation4 + $0x24] sm:$0xf]
          %v1151 = vld [vmem:[#allocation4 + $0x28] sm:$0xf]
          %v1152 = vld [vmem:[#allocation4 + $0x2c] sm:$0xf]
          %v1153 = vld [vmem:[#allocation4 + $0x30] sm:$0xf]
          %v1154 = vld [vmem:[#allocation4 + $0x34] sm:$0xf]
          %v1155 = vld [vmem:[#allocation4 + $0x38] sm:$0xf]
          %v1156 = vld [vmem:[#allocation4 + $0x3c] sm:$0xf]
          %v1157 = vld [vmem:[#allocation4 + $0x40] sm:$0xf]
          %v1158 = vld [vmem:[#allocation4 + $0x44] sm:$0xf]
          %v1159 = vld [vmem:[#allocation4 + $0x48] sm:$0xf]
          %v1160 = vld [vmem:[#allocation4 + $0x4c] sm:$0xf]
          %v1161 = vld [vmem:[#allocation4 + $0x50] sm:$0xf]
          %v1162 = vld [vmem:[#allocation4 + $0x54] sm:$0xf]
          %v1163 = vld [vmem:[#allocation4 + $0x58] sm:$0xf]
          %v1164 = vld [vmem:[#allocation4 + $0x5c] sm:$0xf]
          %v1165 = vld [vmem:[#allocation4 + $0x60] sm:$0xf]
          %v1166 = vld [vmem:[#allocation4 + $0x64] sm:$0xf]
          %v1167 = vld [vmem:[#allocation4 + $0x68] sm:$0xf]
          %v1168 = vld [vmem:[#allocation4 + $0x6c] sm:$0xf]
          %v1169 = vld [vmem:[#allocation4 + $0x70] sm:$0xf]
          %v1170 = vld [vmem:[#allocation4 + $0x74] sm:$0xf]
          %v1171 = vld [vmem:[#allocation4 + $0x78] sm:$0xf]
          %v1172 = vld [vmem:[#allocation4 + $0x7c] sm:$0xf]
          %v1173 = vld [vmem:[#allocation4 + $0x80] sm:$0xf]
          %v1174 = vld [vmem:[#allocation4 + $0x84] sm:$0xf]
          %v1175 = vld [vmem:[#allocation4 + $0x88] sm:$0xf]
          %v1176 = vld [vmem:[#allocation4 + $0x8c] sm:$0xf]
          %v1177 = vld [vmem:[#allocation4 + $0x90] sm:$0xf]
          %v1178 = vld [vmem:[#allocation4 + $0x94] sm:$0xf]
          %v1179 = vld [vmem:[#allocation4 + $0x98] sm:$0xf]
          %v1180 = vld [vmem:[#allocation4 + $0x9c] sm:$0xf]
          %v1181 = vld [vmem:[#allocation4 + $0xa0] sm:$0xf]
          %v1182 = vld [vmem:[#allocation4 + $0xa4] sm:$0xf]
          %v1183 = vld [vmem:[#allocation4 + $0xa8] sm:$0xf]
          %v1184 = vld [vmem:[#allocation4 + $0xac] sm:$0xf]
          %v1185 = vld [vmem:[#allocation4 + $0xb0] sm:$0xf]
          %v1186 = vld [vmem:[#allocation4 + $0xb4] sm:$0xf]
          %v1187 = vld [vmem:[#allocation4 + $0xb8] sm:$0xf]
          %v1188 = vld [vmem:[#allocation4 + $0xbc] sm:$0xf]
          %v1189 = vld [vmem:[#allocation4 + $0xc0] sm:$0xf]
          %v1190 = vld [vmem:[#allocation4 + $0xc4] sm:$0xf]
          %v1191 = vld [vmem:[#allocation4 + $0xc8] sm:$0xf]
          %v1192 = vld [vmem:[#allocation4 + $0xcc] sm:$0xf]
          %v1193 = vld [vmem:[#allocation4 + $0xd0] sm:$0xf]
          %v1194 = vld [vmem:[#allocation4 + $0xd4] sm:$0xf]
          %v1195 = vld [vmem:[#allocation4 + $0xd8] sm:$0xf]
          %v1196 = vld [vmem:[#allocation4 + $0xdc] sm:$0xf]
          %v1197 = vld [vmem:[#allocation4 + $0xe0] sm:$0xf]
          %v1198 = vld [vmem:[#allocation4 + $0xe4] sm:$0xf]
          %v1199 = vld [vmem:[#allocation4 + $0xe8] sm:$0xf]
          %v1200 = vld [vmem:[#allocation4 + $0xec] sm:$0xf]
          %v1201 = vld [vmem:[#allocation4 + $0xf0] sm:$0xf]
          %v1202 = vld [vmem:[#allocation4 + $0xf4] sm:$0xf]
          %v1203 = vld [vmem:[#allocation4 + $0xf8] sm:$0xf]
          %v1204 = vld [vmem:[#allocation4 + $0xfc] sm:$0xf]
          %v1205 = vld [vmem:[#allocation4 + $0x100] sm:$0xf]
          %v1206 = vld [vmem:[#allocation4 + $0x104] sm:$0xf]
          %v1207 = vld [vmem:[#allocation4 + $0x108] sm:$0xf]
          %v1208 = vld [vmem:[#allocation4 + $0x10c] sm:$0xf]
          %v1209 = vld [vmem:[#allocation4 + $0x110] sm:$0xf]
          %v1210 = vld [vmem:[#allocation4 + $0x114] sm:$0xf]
          %v1211 = vld [vmem:[#allocation4 + $0x118] sm:$0xf]
          %v1212 = vld [vmem:[#allocation4 + $0x11c] sm:$0xf]
          %v1213 = vld [vmem:[#allocation4 + $0x120] sm:$0xf]
          %v1214 = vld [vmem:[#allocation4 + $0x124] sm:$0xf]
          %v1215 = vld [vmem:[#allocation4 + $0x128] sm:$0xf]
          %v1216 = vld [vmem:[#allocation4 + $0x12c] sm:$0xf]
          %v1217 = vld [vmem:[#allocation4 + $0x130] sm:$0xf]
          %v1218 = vld [vmem:[#allocation4 + $0x134] sm:$0xf]
          %v1219 = vld [vmem:[#allocation4 + $0x138] sm:$0xf]
          %v1220 = vld [vmem:[#allocation4 + $0x13c] sm:$0xf]
          %v1221 = vld [vmem:[#allocation4 + $0x140] sm:$0xf]
          %v1222 = vld [vmem:[#allocation4 + $0x144] sm:$0xf]
          %v1223 = vld [vmem:[#allocation4 + $0x148] sm:$0xf]
          %v1224 = vld [vmem:[#allocation4 + $0x14c] sm:$0xf]
          %v1225 = vld [vmem:[#allocation4 + $0x150] sm:$0xf]
          %v1226 = vld [vmem:[#allocation4 + $0x154] sm:$0xf]
          %v1227 = vld [vmem:[#allocation4 + $0x158] sm:$0xf]
          %v1228 = vld [vmem:[#allocation4 + $0x15c] sm:$0xf]
          %v1229 = vld [vmem:[#allocation4 + $0x160] sm:$0xf]
          %v1230 = vld [vmem:[#allocation4 + $0x164] sm:$0xf]
          %v1231 = vld [vmem:[#allocation4 + $0x168] sm:$0xf]
          %v1232 = vld [vmem:[#allocation4 + $0x16c] sm:$0xf]
          %v1233 = vld [vmem:[#allocation4 + $0x170] sm:$0xf]
          %v1234 = vld [vmem:[#allocation4 + $0x174] sm:$0xf]
          %v1235 = vld [vmem:[#allocation4 + $0x178] sm:$0xf]
          %v1236 = vld [vmem:[#allocation4 + $0x17c] sm:$0xf]
          %v1237 = vld [vmem:[#allocation4 + $0x180] sm:$0xf]
          %v1238 = vld [vmem:[#allocation4 + $0x184] sm:$0xf]
          %v1239 = vld [vmem:[#allocation4 + $0x188] sm:$0xf]
          %v1240 = vld [vmem:[#allocation4 + $0x18c] sm:$0xf]
          %v1241 = vld [vmem:[#allocation4 + $0x190] sm:$0xf]
          %v1242 = vld [vmem:[#allocation4 + $0x194] sm:$0xf]
          %v1243 = vld [vmem:[#allocation4 + $0x198] sm:$0xf]
          %v1244 = vld [vmem:[#allocation4 + $0x19c] sm:$0xf]
          %v1245 = vld [vmem:[#allocation4 + $0x1a0] sm:$0xf]
          %v1246 = vld [vmem:[#allocation4 + $0x1a4] sm:$0xf]
          %v1247 = vld [vmem:[#allocation4 + $0x1a8] sm:$0xf]
          %v1248 = vld [vmem:[#allocation4 + $0x1ac] sm:$0xf]
          %v1249 = vld [vmem:[#allocation4 + $0x1b0] sm:$0xf]
          %v1250 = vld [vmem:[#allocation4 + $0x1b4] sm:$0xf]
          %v1251 = vld [vmem:[#allocation4 + $0x1b8] sm:$0xf]
          %v1252 = vld [vmem:[#allocation4 + $0x1bc] sm:$0xf]
          %v1255 = vcombine.high %v1139, %v1139
          %v1257 = vunpack.c.l.s4 1983009808
          %v1258 = vunpack.c.0.s8 %v1257
          %v1259 = vlaneseq
          %v1260 = vshrl.u32 %v1259, 7
          %v1261 = vsub.s32 %v1258, %v1260
          %v1262 = vrot.slane %v1139, %v1261
          %v1264 = vunpack.c.l.s4 1983009808
          %v1265 = vunpack.c.0.s8 %v1264
          %v1266 = vlaneseq
          %v1267 = vshrl.u32 %v1266, 7
          %v1268 = vsub.s32 %v1265, %v1267
          %v1269 = vrot.slane %v1255, %v1268
          %v1270 = vcombine.high %v1262, %v1262
          %v1271 = vcombine.high %v1269, %v1269
          %v1272 = vcombine.high %v1140, %v1140
          %v1274 = vunpack.c.l.s4 1983009808
          %v1275 = vunpack.c.0.s8 %v1274
          %v1276 = vlaneseq
          %v1277 = vshrl.u32 %v1276, 7
          %v1278 = vsub.s32 %v1275, %v1277
          %v1279 = vrot.slane %v1140, %v1278
          %v1281 = vunpack.c.l.s4 1983009808
          %v1282 = vunpack.c.0.s8 %v1281
          %v1283 = vlaneseq
          %v1284 = vshrl.u32 %v1283, 7
          %v1285 = vsub.s32 %v1282, %v1284
          %v1286 = vrot.slane %v1272, %v1285
          %v1287 = vcombine.high %v1279, %v1279
          %v1295 = vpack.c.bf16 %v1262, %v1262
          %v1296 = vpack.c.bf16 %v1270, %v1270
          %v1297 = vpack.c.bf16 %v1269, %v1269
          %v1298 = vpack.c.bf16 %v1271, %v1271
          %v1299 = vpack.c.bf16 %v1279, %v1279
          %v1300 = vpack.c.bf16 %v1287, %v1287
          %v1301 = vpack.c.bf16 %v1286, %v1286
          %v1302 = vld [vmem:[#allocation7] sm:$0x1]
          %v1304 = vlaneseq
          %v1305 = vshrl.u32 %v1304, 7
          %v1306 = vsub.s32 0, %v1305
          %v1307 = vrot.slane %v1302, %v1306
          %v1421 = vunpack.c.l.b16 %v1141
          %v1422 = vunpack.c.l.b16 %v1142
          %v1423 = vunpack.c.l.b16 %v1143
          %v1424 = vunpack.c.l.b16 %v1144
          %v1425 = vunpack.c.l.b16 %v1145
          %v1426 = vunpack.c.l.b16 %v1146
          %v1427 = vunpack.c.l.b16 %v1147
          %v1428 = vunpack.c.l.b16 %v1148
          %v1429 = vunpack.c.l.b16 %v1149
          %v1430 = vunpack.c.l.b16 %v1150
          %v1431 = vunpack.c.l.b16 %v1151
          %v1432 = vunpack.c.l.b16 %v1152
          %v1433 = vunpack.c.l.b16 %v1153
          %v1434 = vunpack.c.l.b16 %v1154
          %v1435 = vunpack.c.l.b16 %v1155
          %v1436 = vunpack.c.l.b16 %v1156
          %v1437 = vunpack.c.l.b16 %v1157
          %v1438 = vunpack.c.l.b16 %v1158
          %v1439 = vunpack.c.l.b16 %v1159
          %v1440 = vunpack.c.l.b16 %v1160
          %v1441 = vunpack.c.l.b16 %v1161
          %v1442 = vunpack.c.l.b16 %v1162
          %v1443 = vunpack.c.l.b16 %v1163
          %v1444 = vunpack.c.l.b16 %v1164
          %v1445 = vunpack.c.l.b16 %v1165
          %v1446 = vunpack.c.l.b16 %v1166
          %v1447 = vunpack.c.l.b16 %v1167
          %v1448 = vunpack.c.l.b16 %v1168
          %v1449 = vunpack.c.l.b16 %v1169
          %v1450 = vunpack.c.l.b16 %v1170
          %v1451 = vunpack.c.l.b16 %v1171
          %v1452 = vunpack.c.l.b16 %v1172
          %v1453 = vunpack.c.l.b16 %v1173
          %v1454 = vunpack.c.l.b16 %v1174
          %v1455 = vunpack.c.l.b16 %v1175
          %v1456 = vunpack.c.l.b16 %v1176
          %v1457 = vunpack.c.l.b16 %v1177
          %v1458 = vunpack.c.l.b16 %v1178
          %v1459 = vunpack.c.l.b16 %v1179
          %v1460 = vunpack.c.l.b16 %v1180
          %v1461 = vunpack.c.l.b16 %v1181
          %v1462 = vunpack.c.l.b16 %v1182
          %v1463 = vunpack.c.l.b16 %v1183
          %v1464 = vunpack.c.l.b16 %v1184
          %v1465 = vunpack.c.l.b16 %v1185
          %v1466 = vunpack.c.l.b16 %v1186
          %v1467 = vunpack.c.l.b16 %v1187
          %v1468 = vunpack.c.l.b16 %v1188
          %v1469 = vunpack.c.l.b16 %v1189
          %v1470 = vunpack.c.l.b16 %v1190
          %v1471 = vunpack.c.l.b16 %v1191
          %v1472 = vunpack.c.l.b16 %v1192
          %v1473 = vunpack.c.l.b16 %v1193
          %v1474 = vunpack.c.l.b16 %v1194
          %v1475 = vunpack.c.l.b16 %v1195
          %v1476 = vunpack.c.l.b16 %v1196
          %v1477 = vunpack.c.l.b16 %v1197
          %v1478 = vunpack.c.l.b16 %v1198
          %v1479 = vunpack.c.l.b16 %v1199
          %v1480 = vunpack.c.l.b16 %v1200
          %v1481 = vunpack.c.l.b16 %v1201
          %v1482 = vunpack.c.l.b16 %v1202
          %v1483 = vunpack.c.l.b16 %v1203
          %v1484 = vunpack.c.l.b16 %v1204
          %v1485 = vunpack.c.l.b16 %v1205
          %v1486 = vunpack.c.l.b16 %v1206
          %v1487 = vunpack.c.l.b16 %v1207
          %v1488 = vunpack.c.l.b16 %v1208
          %v1489 = vunpack.c.l.b16 %v1209
          %v1490 = vunpack.c.l.b16 %v1210
          %v1491 = vunpack.c.l.b16 %v1211
          %v1492 = vunpack.c.l.b16 %v1212
          %v1493 = vunpack.c.l.b16 %v1213
          %v1494 = vunpack.c.l.b16 %v1214
          %v1495 = vunpack.c.l.b16 %v1215
          %v1496 = vunpack.c.l.b16 %v1216
          %v1497 = vunpack.c.l.b16 %v1217
          %v1498 = vunpack.c.l.b16 %v1218
          %v1499 = vunpack.c.l.b16 %v1219
          %v1500 = vunpack.c.l.b16 %v1220
          %v1501 = vunpack.c.l.b16 %v1221
          %v1502 = vunpack.c.l.b16 %v1222
          %v1503 = vunpack.c.l.b16 %v1223
          %v1504 = vunpack.c.l.b16 %v1224
          %v1505 = vunpack.c.l.b16 %v1225
          %v1506 = vunpack.c.l.b16 %v1226
          %v1507 = vunpack.c.l.b16 %v1227
          %v1508 = vunpack.c.l.b16 %v1228
          %v1509 = vunpack.c.l.b16 %v1229
          %v1510 = vunpack.c.l.b16 %v1230
          %v1511 = vunpack.c.l.b16 %v1231
          %v1512 = vunpack.c.l.b16 %v1232
          %v1513 = vunpack.c.l.b16 %v1233
          %v1514 = vunpack.c.l.b16 %v1234
          %v1515 = vunpack.c.l.b16 %v1235
          %v1516 = vunpack.c.l.b16 %v1236
          %v1517 = vunpack.c.l.b16 %v1237
          %v1518 = vunpack.c.l.b16 %v1238
          %v1519 = vunpack.c.l.b16 %v1239
          %v1520 = vunpack.c.l.b16 %v1240
          %v1521 = vunpack.c.l.b16 %v1241
          %v1522 = vunpack.c.l.b16 %v1242
          %v1523 = vunpack.c.l.b16 %v1243
          %v1524 = vunpack.c.l.b16 %v1244
          %v1525 = vunpack.c.l.b16 %v1245
          %v1526 = vunpack.c.l.b16 %v1246
          %v1527 = vunpack.c.l.b16 %v1247
          %v1528 = vunpack.c.l.b16 %v1248
          %v1529 = vunpack.c.l.b16 %v1249
          %v1530 = vunpack.c.l.b16 %v1250
          %v1531 = vunpack.c.l.b16 %v1251
          %v1532 = vunpack.c.l.b16 %v1252
          %v1533 = vpack.c.b16 %v1422, %v1421
          %v1534 = vpack.c.b16 %v1424, %v1423
          %v1535 = vpack.c.b16 %v1426, %v1425
          %v1536 = vpack.c.b16 %v1428, %v1427
          %v1537 = vpack.c.b16 %v1430, %v1429
          %v1538 = vpack.c.b16 %v1432, %v1431
          %v1539 = vpack.c.b16 %v1434, %v1433
          %v1540 = vpack.c.b16 %v1436, %v1435
          %v1541 = vpack.c.b16 %v1438, %v1437
          %v1542 = vpack.c.b16 %v1440, %v1439
          %v1543 = vpack.c.b16 %v1442, %v1441
          %v1544 = vpack.c.b16 %v1444, %v1443
          %v1545 = vpack.c.b16 %v1446, %v1445
          %v1546 = vpack.c.b16 %v1448, %v1447
          %v1547 = vpack.c.b16 %v1450, %v1449
          %v1548 = vpack.c.b16 %v1452, %v1451
          %v1549 = vpack.c.b16 %v1454, %v1453
          %v1550 = vpack.c.b16 %v1456, %v1455
          %v1551 = vpack.c.b16 %v1458, %v1457
          %v1552 = vpack.c.b16 %v1460, %v1459
          %v1553 = vpack.c.b16 %v1462, %v1461
          %v1554 = vpack.c.b16 %v1464, %v1463
          %v1555 = vpack.c.b16 %v1466, %v1465
          %v1556 = vpack.c.b16 %v1468, %v1467
          %v1557 = vpack.c.b16 %v1470, %v1469
          %v1558 = vpack.c.b16 %v1472, %v1471
          %v1559 = vpack.c.b16 %v1474, %v1473
          %v1560 = vpack.c.b16 %v1476, %v1475
          %v1561 = vpack.c.b16 %v1478, %v1477
          %v1562 = vpack.c.b16 %v1480, %v1479
          %v1563 = vpack.c.b16 %v1482, %v1481
          %v1564 = vpack.c.b16 %v1484, %v1483
          %v1565 = vpack.c.b16 %v1486, %v1485
          %v1566 = vpack.c.b16 %v1488, %v1487
          %v1567 = vpack.c.b16 %v1490, %v1489
          %v1568 = vpack.c.b16 %v1492, %v1491
          %v1569 = vpack.c.b16 %v1494, %v1493
          %v1570 = vpack.c.b16 %v1496, %v1495
          %v1571 = vpack.c.b16 %v1498, %v1497
          %v1572 = vpack.c.b16 %v1500, %v1499
          %v1573 = vpack.c.b16 %v1502, %v1501
          %v1574 = vpack.c.b16 %v1504, %v1503
          %v1575 = vpack.c.b16 %v1506, %v1505
          %v1576 = vpack.c.b16 %v1508, %v1507
          %v1577 = vpack.c.b16 %v1510, %v1509
          %v1578 = vpack.c.b16 %v1512, %v1511
          %v1579 = vpack.c.b16 %v1514, %v1513
          %v1580 = vpack.c.b16 %v1516, %v1515
          %v1581 = vpack.c.b16 %v1518, %v1517
          %v1582 = vpack.c.b16 %v1520, %v1519
          %v1583 = vpack.c.b16 %v1522, %v1521
          %v1584 = vpack.c.b16 %v1524, %v1523
          %v1585 = vpack.c.b16 %v1526, %v1525
          %v1586 = vpack.c.b16 %v1528, %v1527
          %v1587 = vpack.c.b16 %v1530, %v1529
          %v1588 = vpack.c.b16 %v1532, %v1531
          %1645 = vmatprep.subr.bf16.mxu0 0
          %1646 = vmatpush1.bf16.msra.mxu0 %v1533
          %1647 = vmatprep.subr.bf16.mxu0 0
          %1648 = vmatpush1.bf16.msra.mxu0 %v1534
          %1649 = vmatprep.subr.bf16.mxu0 0
          %1650 = vmatpush1.bf16.msra.mxu0 %v1535
          %1651 = vmatprep.subr.bf16.mxu0 0
          %1652 = vmatpush1.bf16.msra.mxu0 %v1536
          %1653 = vmatprep.subr.bf16.mxu0 0
          %1654 = vmatpush1.bf16.msra.mxu0 %v1537
          %1655 = vmatprep.subr.bf16.mxu0 0
          %1656 = vmatpush1.bf16.msra.mxu0 %v1538
          %1657 = vmatprep.subr.bf16.mxu0 0
          %1658 = vmatpush1.bf16.msra.mxu0 %v1539
          %1659 = vmatprep.subr.bf16.mxu0 0
          %1660 = vmatpush1.bf16.msra.mxu0 %v1540
          %1661 = vmatprep.subr.bf16.mxu0 0
          %1662 = vmatpush1.bf16.msra.mxu0 %v1541
          %1663 = vmatprep.subr.bf16.mxu0 0
          %1664 = vmatpush1.bf16.msra.mxu0 %v1542
          %1665 = vmatprep.subr.bf16.mxu0 0
          %1666 = vmatpush1.bf16.msra.mxu0 %v1543
          %1667 = vmatprep.subr.bf16.mxu0 0
          %1668 = vmatpush1.bf16.msra.mxu0 %v1544
          %1669 = vmatprep.subr.bf16.mxu0 0
          %1670 = vmatpush1.bf16.msra.mxu0 %v1545
          %1671 = vmatprep.subr.bf16.mxu0 0
          %1672 = vmatpush1.bf16.msra.mxu0 %v1546
          %1673 = vmatprep.subr.bf16.mxu0 0
          %1674 = vmatpush1.bf16.msra.mxu0 %v1547
          %1675 = vmatprep.subr.bf16.mxu0 0
          %1676 = vmatpush1.bf16.msra.mxu0 %v1548
          %1677 = vmatprep.mubr.bf16.mxu0 %v1296
          %1678 = vmatmul.mubr.bf16.gmra.mrb[0].mxu0 %v1295
          %v1679 = vpop.f32.mrb[0].mxu0
          %v1680 = vadd.f32 %v1307, %v1679
          %v1681 = vpop.f32.mrb[0].mxu0
          %v1682 = vpop.f32.mrb[0].mxu0
          %v1683 = vpop.f32.mrb[0].mxu0
          %1684 = vdwg.mxu0
          %1685 = vmatprep.subr.bf16.mxu0 0
          %1686 = vmatpush1.bf16.msra.mxu0 %v1549
          %1687 = vmatprep.subr.bf16.mxu0 0
          %1688 = vmatpush1.bf16.msra.mxu0 %v1550
          %1689 = vmatprep.subr.bf16.mxu0 0
          %1690 = vmatpush1.bf16.msra.mxu0 %v1551
          %1691 = vmatprep.subr.bf16.mxu0 0
          %1692 = vmatpush1.bf16.msra.mxu0 %v1552
          %1693 = vmatprep.subr.bf16.mxu0 0
          %1694 = vmatpush1.bf16.msra.mxu0 %v1553
          %1695 = vmatprep.subr.bf16.mxu0 0
          %1696 = vmatpush1.bf16.msra.mxu0 %v1554
          %1697 = vmatprep.subr.bf16.mxu0 0
          %1698 = vmatpush1.bf16.msra.mxu0 %v1555
          %1699 = vmatprep.subr.bf16.mxu0 0
          %1700 = vmatpush1.bf16.msra.mxu0 %v1556
          %1701 = vmatprep.subr.bf16.mxu0 0
          %1702 = vmatpush1.bf16.msra.mxu0 %v1557
          %1703 = vmatprep.subr.bf16.mxu0 0
          %1704 = vmatpush1.bf16.msra.mxu0 %v1558
          %1705 = vmatprep.subr.bf16.mxu0 0
          %1706 = vmatpush1.bf16.msra.mxu0 %v1559
          %1707 = vmatprep.subr.bf16.mxu0 0
          %1708 = vmatpush1.bf16.msra.mxu0 %v1560
          %1709 = vmatprep.subr.bf16.mxu0 0
          %1710 = vmatpush1.bf16.msra.mxu0 %v1561
          %1711 = vmatprep.subr.bf16.mxu0 0
          %1712 = vmatpush1.bf16.msra.mxu0 %v1562
          %1713 = vmatprep.subr.bf16.mxu0 0
          %1714 = vmatpush1.bf16.msra.mxu0 %v1563
          %1715 = vmatprep.subr.bf16.mxu0 0
          %1716 = vmatpush1.bf16.msra.mxu0 %v1564
          %1717 = vmatprep.mubr.bf16.mxu0 %v1298
          %1718 = vmatmul.mubr.bf16.gmra.mrb[0].mxu0 %v1297
          %v1719 = vpop.f32.mrb[0].mxu0
          %v1720 = vadd.f32 %v1680, %v1719
          %v1721 = vpop.f32.mrb[0].mxu0
          %v1722 = vpop.f32.mrb[0].mxu0
          %v1723 = vpop.f32.mrb[0].mxu0
          %1724 = vdwg.mxu0
          %1725 = vmatprep.subr.bf16.mxu0 0
          %1726 = vmatpush1.bf16.msra.mxu0 %v1565
          %1727 = vmatprep.subr.bf16.mxu0 0
          %1728 = vmatpush1.bf16.msra.mxu0 %v1566
          %1729 = vmatprep.subr.bf16.mxu0 0
          %1730 = vmatpush1.bf16.msra.mxu0 %v1567
          %1731 = vmatprep.subr.bf16.mxu0 0
          %1732 = vmatpush1.bf16.msra.mxu0 %v1568
          %1733 = vmatprep.subr.bf16.mxu0 0
          %1734 = vmatpush1.bf16.msra.mxu0 %v1569
          %1735 = vmatprep.subr.bf16.mxu0 0
          %1736 = vmatpush1.bf16.msra.mxu0 %v1570
          %1737 = vmatprep.subr.bf16.mxu0 0
          %1738 = vmatpush1.bf16.msra.mxu0 %v1571
          %1739 = vmatprep.subr.bf16.mxu0 0
          %1740 = vmatpush1.bf16.msra.mxu0 %v1572
          %1741 = vmatprep.subr.bf16.mxu0 0
          %1742 = vmatpush1.bf16.msra.mxu0 %v1573
          %1743 = vmatprep.subr.bf16.mxu0 0
          %1744 = vmatpush1.bf16.msra.mxu0 %v1574
          %1745 = vmatprep.subr.bf16.mxu0 0
          %1746 = vmatpush1.bf16.msra.mxu0 %v1575
          %1747 = vmatprep.subr.bf16.mxu0 0
          %1748 = vmatpush1.bf16.msra.mxu0 %v1576
          %1749 = vmatprep.subr.bf16.mxu0 0
          %1750 = vmatpush1.bf16.msra.mxu0 %v1577
          %1751 = vmatprep.subr.bf16.mxu0 0
          %1752 = vmatpush1.bf16.msra.mxu0 %v1578
          %1753 = vmatprep.subr.bf16.mxu0 0
          %1754 = vmatpush1.bf16.msra.mxu0 %v1579
          %1755 = vmatprep.subr.bf16.mxu0 0
          %1756 = vmatpush1.bf16.msra.mxu0 %v1580
          %1757 = vmatprep.mubr.bf16.mxu0 %v1300
          %1758 = vmatmul.mubr.bf16.gmra.mrb[0].mxu0 %v1299
          %v1759 = vpop.f32.mrb[0].mxu0
          %v1760 = vadd.f32 %v1720, %v1759
          %v1761 = vpop.f32.mrb[0].mxu0
          %v1762 = vpop.f32.mrb[0].mxu0
          %v1763 = vpop.f32.mrb[0].mxu0
          %1764 = vdwg.mxu0
          %1765 = vmatprep.subr.bf16.mxu0 0
          %1766 = vmatpush1.bf16.msra.mxu0 %v1581
          %1767 = vmatprep.subr.bf16.mxu0 0
          %1768 = vmatpush1.bf16.msra.mxu0 %v1582
          %1769 = vmatprep.subr.bf16.mxu0 0
          %1770 = vmatpush1.bf16.msra.mxu0 %v1583
          %1771 = vmatprep.subr.bf16.mxu0 0
          %1772 = vmatpush1.bf16.msra.mxu0 %v1584
          %1773 = vmatprep.subr.bf16.mxu0 0
          %1774 = vmatpush1.bf16.msra.mxu0 %v1585
          %1775 = vmatprep.subr.bf16.mxu0 0
          %1776 = vmatpush1.bf16.msra.mxu0 %v1586
          %1777 = vmatprep.subr.bf16.mxu0 0
          %1778 = vmatpush1.bf16.msra.mxu0 %v1587
          %1779 = vmatprep.subr.bf16.mxu0 0
          %1780 = vmatpush1.bf16.msra.mxu0 %v1588
          %1781 = vmatprep.subr.bf16.mxu0 0
          %1782 = vmatpush1.bf16.msra.mxu0 0
          %1783 = vmatprep.subr.bf16.mxu0 0
          %1784 = vmatpush1.bf16.msra.mxu0 0
          %1785 = vmatprep.subr.bf16.mxu0 0
          %1786 = vmatpush1.bf16.msra.mxu0 0
          %1787 = vmatprep.subr.bf16.mxu0 0
          %1788 = vmatpush1.bf16.msra.mxu0 0
          %1789 = vmatprep.subr.bf16.mxu0 0
          %1790 = vmatpush1.bf16.msra.mxu0 0
          %1791 = vmatprep.subr.bf16.mxu0 0
          %1792 = vmatpush1.bf16.msra.mxu0 0
          %1793 = vmatprep.subr.bf16.mxu0 0
          %1794 = vmatpush1.bf16.msra.mxu0 0
          %1795 = vmatprep.subr.bf16.mxu0 0
          %1796 = vmatpush1.bf16.msra.mxu0 0
          %1797 = vmatprep.mubr.bf16.mxu0 0
          %1798 = vmatmul.mubr.bf16.gmra.mrb[0].mxu0 %v1301
          %v1799 = vpop.f32.mrb[0].mxu0
          %v1800 = vadd.f32 %v1760, %v1799
          %v1801 = vpop.f32.mrb[0].mxu0
          %v1802 = vpop.f32.mrb[0].mxu0
          %v1803 = vpop.f32.mrb[0].mxu0
          %1804 = vdwg.mxu0
          %1805 = vst [vmem:[#allocation2] sm:$0x3] %v1800
        $region172: #{transformer_classifier_forward.1} parent=95 // pred_fallthru
          _
        %p1806 = scmp.eq.s32.totalorder %s34, 2
        // Predicated region
        $region173: #{transformer_classifier_forward.1} parent=95 // pred_check
          %p1807 = pneg %p1806
        $region174: #{transformer_classifier_forward.1} parent=95 // pred_check_branch
          %1809 = sbr.rel (%p1807) target = $region176
        $region175: #{transformer_classifier_forward.1} parent=95 // pred_region
          %v1810 = vld [vmem:[#allocation2] sm:$0x3]
          %1811 = vst [vmem:[#allocation3] sm:$0x3] %v1810
          %1812 = vst [vmem:[#allocation2] sm:$0x3] 0.0
        $region176: #{transformer_classifier_forward.1} parent=95 // pred_fallthru
          _
        %v1813 = vld [vmem:[#allocation2] sm:$0x3]
        %v1814 = vld [vmem:[%s900] sm:$0xf]
        %v1815 = vld [vmem:[%s900 + $0x4] sm:$0xf]
        %v1816 = vld [vmem:[%s900 + $0x8] sm:$0xf]
        %v1817 = vld [vmem:[%s900 + $0xc] sm:$0xf]
        %v1818 = vld [vmem:[%s900 + $0x10] sm:$0xf]
        %v1819 = vld [vmem:[%s900 + $0x14] sm:$0xf]
        %v1820 = vld [vmem:[%s900 + $0x18] sm:$0xf]
        %v1821 = vld [vmem:[%s900 + $0x1c] sm:$0xf]
        %v1822 = vld [vmem:[%s900 + $0x20] sm:$0xf]
        %v1823 = vld [vmem:[%s900 + $0x24] sm:$0xf]
        %v1824 = vld [vmem:[%s900 + $0x28] sm:$0xf]
        %v1825 = vld [vmem:[%s900 + $0x2c] sm:$0xf]
        %v1826 = vld [vmem:[%s900 + $0x30] sm:$0xf]
        %v1827 = vld [vmem:[%s900 + $0x34] sm:$0xf]
        %v1828 = vld [vmem:[%s900 + $0x38] sm:$0xf]
        %v1829 = vld [vmem:[%s900 + $0x3c] sm:$0xf]
        %v1830 = vpack.c.bf16 %v1813, %v1813
        %v1831 = vld [vmem:[%s908] sm:$0x1]
        %v1833 = vlaneseq
        %v1834 = vshrl.u32 %v1833, 7
        %v1835 = vsub.s32 0, %v1834
        %v1836 = vrot.slane %v1831, %v1835
        %v1854 = vunpack.c.l.b16 %v1814
        %v1855 = vunpack.c.l.b16 %v1815
        %v1856 = vunpack.c.l.b16 %v1816
        %v1857 = vunpack.c.l.b16 %v1817
        %v1858 = vunpack.c.l.b16 %v1818
        %v1859 = vunpack.c.l.b16 %v1819
        %v1860 = vunpack.c.l.b16 %v1820
        %v1861 = vunpack.c.l.b16 %v1821
        %v1862 = vunpack.c.l.b16 %v1822
        %v1863 = vunpack.c.l.b16 %v1823
        %v1864 = vunpack.c.l.b16 %v1824
        %v1865 = vunpack.c.l.b16 %v1825
        %v1866 = vunpack.c.l.b16 %v1826
        %v1867 = vunpack.c.l.b16 %v1827
        %v1868 = vunpack.c.l.b16 %v1828
        %v1869 = vunpack.c.l.b16 %v1829
        %v1870 = vpack.c.b16 %v1855, %v1854
        %v1871 = vpack.c.b16 %v1857, %v1856
        %v1872 = vpack.c.b16 %v1859, %v1858
        %v1873 = vpack.c.b16 %v1861, %v1860
        %v1874 = vpack.c.b16 %v1863, %v1862
        %v1875 = vpack.c.b16 %v1865, %v1864
        %v1876 = vpack.c.b16 %v1867, %v1866
        %v1877 = vpack.c.b16 %v1869, %v1868
        %1886 = vmatprep.subr.bf16.mxu0 0
        %1887 = vmatpush1.bf16.msra.mxu0 %v1870
        %1888 = vmatprep.subr.bf16.mxu0 0
        %1889 = vmatpush1.bf16.msra.mxu0 %v1871
        %1890 = vmatprep.subr.bf16.mxu0 0
        %1891 = vmatpush1.bf16.msra.mxu0 %v1872
        %1892 = vmatprep.subr.bf16.mxu0 0
        %1893 = vmatpush1.bf16.msra.mxu0 %v1873
        %1894 = vmatprep.subr.bf16.mxu0 0
        %1895 = vmatpush1.bf16.msra.mxu0 %v1874
        %1896 = vmatprep.subr.bf16.mxu0 0
        %1897 = vmatpush1.bf16.msra.mxu0 %v1875
        %1898 = vmatprep.subr.bf16.mxu0 0
        %1899 = vmatpush1.bf16.msra.mxu0 %v1876
        %1900 = vmatprep.subr.bf16.mxu0 0
        %1901 = vmatpush1.bf16.msra.mxu0 %v1877
        %1902 = vmatprep.subr.bf16.mxu0 0
        %1903 = vmatpush1.bf16.msra.mxu0 0
        %1904 = vmatprep.subr.bf16.mxu0 0
        %1905 = vmatpush1.bf16.msra.mxu0 0
        %1906 = vmatprep.subr.bf16.mxu0 0
        %1907 = vmatpush1.bf16.msra.mxu0 0
        %1908 = vmatprep.subr.bf16.mxu0 0
        %1909 = vmatpush1.bf16.msra.mxu0 0
        %1910 = vmatprep.subr.bf16.mxu0 0
        %1911 = vmatpush1.bf16.msra.mxu0 0
        %1912 = vmatprep.subr.bf16.mxu0 0
        %1913 = vmatpush1.bf16.msra.mxu0 0
        %1914 = vmatprep.subr.bf16.mxu0 0
        %1915 = vmatpush1.bf16.msra.mxu0 0
        %1916 = vmatprep.subr.bf16.mxu0 0
        %1917 = vmatpush1.bf16.msra.mxu0 0
        %1918 = vmatprep.mubr.bf16.mxu0 0
        %1919 = vmatmul.mubr.bf16.gmra.mrb[0].mxu0 %v1830
        %v1920 = vpop.f32.mrb[0].mxu0
        %v1921 = vadd.f32 %v1836, %v1920
        %v1922 = vpop.f32.mrb[0].mxu0
        %v1923 = vpop.f32.mrb[0].mxu0
        %v1924 = vpop.f32.mrb[0].mxu0
        %1925 = vdwg.mxu0
        %v1926 = vadd.f32 %v1813, %v1921
        %v1927 = vld [vmem:[%s916] sm:$0x1]
        %v1928 = vld [vmem:[%s924] sm:$0x1]
        %vm1929 = vcmask 1041408
        %v1930 = vsel %vm1929, %v1926, 0.0
        %1931 = vadd.xlane.f32.xlu0 %v1930
        %v1932 = vpop.xlane.xlu0 %1931
        %v1933 = vrcp.pop 128.0
        %v1934 = vmul.f32 %v1932, %v1933
        %v1935 = vsub.f32 %v1926, %v1934
        %v1936 = vmul.f32 %v1935, %v1935
        %v1937 = vsel %vm1929, %v1936, 0.0
        %1938 = vadd.xlane.f32.xlu0 %v1937
        %v1939 = vpop.xlane.xlu0 %1938
        %v1940 = vmul.f32 %v1939, %v1933
        %v1941 = vadd.f32 %v1940, 1e-05
        %v1942 = vrsqrt.pop %v1941
        %v1943 = vmul.f32 %v1935, %v1942
        %v1945 = vlaneseq
        %v1946 = vshrl.u32 %v1945, 7
        %v1947 = vsub.s32 0, %v1946
        %v1948 = vrot.slane %v1927, %v1947
        %v1950 = vmul.f32 %v1943, %v1948
        %v1952 = vlaneseq
        %v1953 = vshrl.u32 %v1952, 7
        %v1954 = vsub.s32 0, %v1953
        %v1955 = vrot.slane %v1928, %v1954
        %v1957 = vadd.f32 %v1950, %v1955
        %1958 = vst [vmem:[#allocation2] sm:$0x3] %v1957
        %p1959 = scmp.ge.s32.totalorder %s34, 2
        // Predicated region
        $region177: #{transformer_classifier_forward.1} parent=95 // pred_check
          %p1960 = pneg %p1959
        $region178: #{transformer_classifier_forward.1} parent=95 // pred_check_branch
          %1962 = sbr.rel (%p1960) target = $region180
        $region179: #{transformer_classifier_forward.1} parent=95 // pred_region
          %v1963 = vld [vmem:[#allocation2] sm:$0x3]
          %v1964 = vld [vmem:[#allocation3] sm:$0x3]
          %v1965 = vld [vmem:[%s933] sm:$0xf]
          %v1966 = vld [vmem:[%s933 + $0x4] sm:$0xf]
          %v1967 = vld [vmem:[%s933 + $0x8] sm:$0xf]
          %v1968 = vld [vmem:[%s933 + $0xc] sm:$0xf]
          %v1969 = vld [vmem:[%s933 + $0x10] sm:$0xf]
          %v1970 = vld [vmem:[%s933 + $0x14] sm:$0xf]
          %v1971 = vld [vmem:[%s933 + $0x18] sm:$0xf]
          %v1972 = vld [vmem:[%s933 + $0x1c] sm:$0xf]
          %v1973 = vld [vmem:[%s933 + $0x20] sm:$0xf]
          %v1974 = vld [vmem:[%s933 + $0x24] sm:$0xf]
          %v1975 = vld [vmem:[%s933 + $0x28] sm:$0xf]
          %v1976 = vld [vmem:[%s933 + $0x2c] sm:$0xf]
          %v1977 = vld [vmem:[%s933 + $0x30] sm:$0xf]
          %v1978 = vld [vmem:[%s933 + $0x34] sm:$0xf]
          %v1979 = vld [vmem:[%s933 + $0x38] sm:$0xf]
          %v1980 = vld [vmem:[%s933 + $0x3c] sm:$0xf]
          %v1981 = vpack.c.bf16 %v1964, %v1964
          %v1982 = vld [vmem:[%s941] sm:$0x1]
          %v1984 = vlaneseq
          %v1985 = vshrl.u32 %v1984, 7
          %v1986 = vsub.s32 0, %v1985
          %v1987 = vrot.slane %v1982, %v1986
          %v2005 = vunpack.c.l.b16 %v1965
          %v2006 = vunpack.c.l.b16 %v1966
          %v2007 = vunpack.c.l.b16 %v1967
          %v2008 = vunpack.c.l.b16 %v1968
          %v2009 = vunpack.c.l.b16 %v1969
          %v2010 = vunpack.c.l.b16 %v1970
          %v2011 = vunpack.c.l.b16 %v1971
          %v2012 = vunpack.c.l.b16 %v1972
          %v2013 = vunpack.c.l.b16 %v1973
          %v2014 = vunpack.c.l.b16 %v1974
          %v2015 = vunpack.c.l.b16 %v1975
          %v2016 = vunpack.c.l.b16 %v1976
          %v2017 = vunpack.c.l.b16 %v1977
          %v2018 = vunpack.c.l.b16 %v1978
          %v2019 = vunpack.c.l.b16 %v1979
          %v2020 = vunpack.c.l.b16 %v1980
          %v2021 = vpack.c.b16 %v2006, %v2005
          %v2022 = vpack.c.b16 %v2008, %v2007
          %v2023 = vpack.c.b16 %v2010, %v2009
          %v2024 = vpack.c.b16 %v2012, %v2011
          %v2025 = vpack.c.b16 %v2014, %v2013
          %v2026 = vpack.c.b16 %v2016, %v2015
          %v2027 = vpack.c.b16 %v2018, %v2017
          %v2028 = vpack.c.b16 %v2020, %v2019
          %2037 = vmatprep.subr.bf16.mxu0 0
          %2038 = vmatpush1.bf16.msra.mxu0 %v2021
          %2039 = vmatprep.subr.bf16.mxu0 0
          %2040 = vmatpush1.bf16.msra.mxu0 %v2022
          %2041 = vmatprep.subr.bf16.mxu0 0
          %2042 = vmatpush1.bf16.msra.mxu0 %v2023
          %2043 = vmatprep.subr.bf16.mxu0 0
          %2044 = vmatpush1.bf16.msra.mxu0 %v2024
          %2045 = vmatprep.subr.bf16.mxu0 0
          %2046 = vmatpush1.bf16.msra.mxu0 %v2025
          %2047 = vmatprep.subr.bf16.mxu0 0
          %2048 = vmatpush1.bf16.msra.mxu0 %v2026
          %2049 = vmatprep.subr.bf16.mxu0 0
          %2050 = vmatpush1.bf16.msra.mxu0 %v2027
          %2051 = vmatprep.subr.bf16.mxu0 0
          %2052 = vmatpush1.bf16.msra.mxu0 %v2028
          %2053 = vmatprep.subr.bf16.mxu0 0
          %2054 = vmatpush1.bf16.msra.mxu0 0
          %2055 = vmatprep.subr.bf16.mxu0 0
          %2056 = vmatpush1.bf16.msra.mxu0 0
          %2057 = vmatprep.subr.bf16.mxu0 0
          %2058 = vmatpush1.bf16.msra.mxu0 0
          %2059 = vmatprep.subr.bf16.mxu0 0
          %2060 = vmatpush1.bf16.msra.mxu0 0
          %2061 = vmatprep.subr.bf16.mxu0 0
          %2062 = vmatpush1.bf16.msra.mxu0 0
          %2063 = vmatprep.subr.bf16.mxu0 0
          %2064 = vmatpush1.bf16.msra.mxu0 0
          %2065 = vmatprep.subr.bf16.mxu0 0
          %2066 = vmatpush1.bf16.msra.mxu0 0
          %2067 = vmatprep.subr.bf16.mxu0 0
          %2068 = vmatpush1.bf16.msra.mxu0 0
          %2069 = vmatprep.mubr.bf16.mxu0 0
          %2070 = vmatmul.mubr.bf16.gmra.mrb[0].mxu0 %v1981
          %v2071 = vpop.f32.mrb[0].mxu0
          %v2072 = vadd.f32 %v1987, %v2071
          %v2073 = vpop.f32.mrb[0].mxu0
          %v2074 = vpop.f32.mrb[0].mxu0
          %v2075 = vpop.f32.mrb[0].mxu0
          %2076 = vdwg.mxu0
          %v2077 = vadd.f32 %v1963, %v2072
          %v2078 = vld [vmem:[%s949] sm:$0x1]
          %v2079 = vld [vmem:[%s957] sm:$0x1]
          %v2080 = vsel %vm1929, %v2077, 0.0
          %2081 = vadd.xlane.f32.xlu0 %v2080
          %v2082 = vpop.xlane.xlu0 %2081
          %v2083 = vmul.f32 %v2082, %v1933
          %v2084 = vsub.f32 %v2077, %v2083
          %v2085 = vmul.f32 %v2084, %v2084
          %v2086 = vsel %vm1929, %v2085, 0.0
          %2087 = vadd.xlane.f32.xlu0 %v2086
          %v2088 = vpop.xlane.xlu0 %2087
          %v2089 = vmul.f32 %v2088, %v1933
          %v2090 = vadd.f32 %v2089, 1e-05
          %v2091 = vrsqrt.pop %v2090
          %v2092 = vmul.f32 %v2084, %v2091
          %v2094 = vlaneseq
          %v2095 = vshrl.u32 %v2094, 7
          %v2096 = vsub.s32 0, %v2095
          %v2097 = vrot.slane %v2078, %v2096
          %v2099 = vmul.f32 %v2092, %v2097
          %v2101 = vlaneseq
          %v2102 = vshrl.u32 %v2101, 7
          %v2103 = vsub.s32 0, %v2102
          %v2104 = vrot.slane %v2079, %v2103
          %v2106 = vadd.f32 %v2099, %v2104
          %2107 = vst [vmem:[#allocation2] sm:$0x3] %v2106
        $region180: #{transformer_classifier_forward.1} parent=95 // pred_fallthru
          _
        %v2108 = vld [vmem:[#allocation2] sm:$0x3]
        %v2109 = vld [vmem:[%s966] sm:$0xff]
        %v2110 = vld [vmem:[%s966 + $0x8] sm:$0xff]
        %v2111 = vld [vmem:[%s966 + $0x10] sm:$0xff]
        %v2112 = vld [vmem:[%s966 + $0x18] sm:$0xff]
        %v2113 = vld [vmem:[%s966 + $0x20] sm:$0xff]
        %v2114 = vld [vmem:[%s966 + $0x28] sm:$0xff]
        %v2115 = vld [vmem:[%s966 + $0x30] sm:$0xff]
        %v2116 = vld [vmem:[%s966 + $0x38] sm:$0xff]
        %v2117 = vld [vmem:[%s966 + $0x40] sm:$0xff]
        %v2118 = vld [vmem:[%s966 + $0x48] sm:$0xff]
        %v2119 = vld [vmem:[%s966 + $0x50] sm:$0xff]
        %v2120 = vld [vmem:[%s966 + $0x58] sm:$0xff]
        %v2121 = vld [vmem:[%s966 + $0x60] sm:$0xff]
        %v2122 = vld [vmem:[%s966 + $0x68] sm:$0xff]
        %v2123 = vld [vmem:[%s966 + $0x70] sm:$0xff]
        %v2124 = vld [vmem:[%s966 + $0x78] sm:$0xff]
        %v2125 = vld [vmem:[%s966 + $0x80] sm:$0xff]
        %v2126 = vld [vmem:[%s966 + $0x88] sm:$0xff]
        %v2127 = vld [vmem:[%s966 + $0x90] sm:$0xff]
        %v2128 = vld [vmem:[%s966 + $0x98] sm:$0xff]
        %v2129 = vld [vmem:[%s966 + $0xa0] sm:$0xff]
        %v2130 = vld [vmem:[%s966 + $0xa8] sm:$0xff]
        %v2131 = vld [vmem:[%s966 + $0xb0] sm:$0xff]
        %v2132 = vld [vmem:[%s966 + $0xb8] sm:$0xff]
        %v2133 = vld [vmem:[%s966 + $0xc0] sm:$0xff]
        %v2134 = vld [vmem:[%s966 + $0xc8] sm:$0xff]
        %v2135 = vld [vmem:[%s966 + $0xd0] sm:$0xff]
        %v2136 = vld [vmem:[%s966 + $0xd8] sm:$0xff]
        %v2137 = vld [vmem:[%s966 + $0xe0] sm:$0xff]
        %v2138 = vld [vmem:[%s966 + $0xe8] sm:$0xff]
        %v2139 = vld [vmem:[%s966 + $0xf0] sm:$0xff]
        %v2140 = vld [vmem:[%s966 + $0xf8] sm:$0xff]
        %v2141 = vld [vmem:[%s966 + $0x100] sm:$0xff]
        %v2142 = vld [vmem:[%s966 + $0x108] sm:$0xff]
        %v2143 = vld [vmem:[%s966 + $0x110] sm:$0xff]
        %v2144 = vld [vmem:[%s966 + $0x118] sm:$0xff]
        %v2145 = vld [vmem:[%s966 + $0x120] sm:$0xff]
        %v2146 = vld [vmem:[%s966 + $0x128] sm:$0xff]
        %v2147 = vld [vmem:[%s966 + $0x130] sm:$0xff]
        %v2148 = vld [vmem:[%s966 + $0x138] sm:$0xff]
        %v2149 = vld [vmem:[%s966 + $0x140] sm:$0xff]
        %v2150 = vld [vmem:[%s966 + $0x148] sm:$0xff]
        %v2151 = vld [vmem:[%s966 + $0x150] sm:$0xff]
        %v2152 = vld [vmem:[%s966 + $0x158] sm:$0xff]
        %v2153 = vld [vmem:[%s966 + $0x160] sm:$0xff]
        %v2154 = vld [vmem:[%s966 + $0x168] sm:$0xff]
        %v2155 = vld [vmem:[%s966 + $0x170] sm:$0xff]
        %v2156 = vld [vmem:[%s966 + $0x178] sm:$0xff]
        %v2157 = vld [vmem:[%s966 + $0x180] sm:$0xff]
        %v2158 = vld [vmem:[%s966 + $0x188] sm:$0xff]
        %v2159 = vld [vmem:[%s966 + $0x190] sm:$0xff]
        %v2160 = vld [vmem:[%s966 + $0x198] sm:$0xff]
        %v2161 = vld [vmem:[%s966 + $0x1a0] sm:$0xff]
        %v2162 = vld [vmem:[%s966 + $0x1a8] sm:$0xff]
        %v2163 = vld [vmem:[%s966 + $0x1b0] sm:$0xff]
        %v2164 = vld [vmem:[%s966 + $0x1b8] sm:$0xff]
        %v2165 = vld [vmem:[%s966 + $0x1c0] sm:$0xff]
        %v2166 = vld [vmem:[%s966 + $0x1c8] sm:$0xff]
        %v2167 = vld [vmem:[%s966 + $0x1d0] sm:$0xff]
        %v2168 = vld [vmem:[%s966 + $0x1d8] sm:$0xff]
        %v2169 = vld [vmem:[%s966 + $0x1e0] sm:$0xff]
        %v2170 = vld [vmem:[%s966 + $0x1e8] sm:$0xff]
        %v2171 = vld [vmem:[%s966 + $0x1f0] sm:$0xff]
        %v2172 = vld [vmem:[%s966 + $0x1f8] sm:$0xff]
        %v2173 = vld [vmem:[%s966 + $0x200] sm:$0xff]
        %v2174 = vld [vmem:[%s966 + $0x208] sm:$0xff]
        %v2175 = vld [vmem:[%s966 + $0x210] sm:$0xff]
        %v2176 = vld [vmem:[%s966 + $0x218] sm:$0xff]
        %v2177 = vld [vmem:[%s966 + $0x220] sm:$0xff]
        %v2178 = vld [vmem:[%s966 + $0x228] sm:$0xff]
        %v2179 = vld [vmem:[%s966 + $0x230] sm:$0xff]
        %v2180 = vld [vmem:[%s966 + $0x238] sm:$0xff]
        %v2181 = vld [vmem:[%s966 + $0x240] sm:$0xff]
        %v2182 = vld [vmem:[%s966 + $0x248] sm:$0xff]
        %v2183 = vld [vmem:[%s966 + $0x250] sm:$0xff]
        %v2184 = vld [vmem:[%s966 + $0x258] sm:$0xff]
        %v2185 = vld [vmem:[%s966 + $0x260] sm:$0xff]
        %v2186 = vld [vmem:[%s966 + $0x268] sm:$0xff]
        %v2187 = vld [vmem:[%s966 + $0x270] sm:$0xff]
        %v2188 = vld [vmem:[%s966 + $0x278] sm:$0xff]
        %v2189 = vld [vmem:[%s966 + $0x280] sm:$0xff]
        %v2190 = vld [vmem:[%s966 + $0x288] sm:$0xff]
        %v2191 = vld [vmem:[%s966 + $0x290] sm:$0xff]
        %v2192 = vld [vmem:[%s966 + $0x298] sm:$0xff]
        %v2193 = vld [vmem:[%s966 + $0x2a0] sm:$0xff]
        %v2194 = vld [vmem:[%s966 + $0x2a8] sm:$0xff]
        %v2195 = vld [vmem:[%s966 + $0x2b0] sm:$0xff]
        %v2196 = vld [vmem:[%s966 + $0x2b8] sm:$0xff]
        %v2197 = vld [vmem:[%s966 + $0x2c0] sm:$0xff]
        %v2198 = vld [vmem:[%s966 + $0x2c8] sm:$0xff]
        %v2199 = vld [vmem:[%s966 + $0x2d0] sm:$0xff]
        %v2200 = vld [vmem:[%s966 + $0x2d8] sm:$0xff]
        %v2201 = vld [vmem:[%s966 + $0x2e0] sm:$0xff]
        %v2202 = vld [vmem:[%s966 + $0x2e8] sm:$0xff]
        %v2203 = vld [vmem:[%s966 + $0x2f0] sm:$0xff]
        %v2204 = vld [vmem:[%s966 + $0x2f8] sm:$0xff]
        %v2205 = vld [vmem:[%s966 + $0x300] sm:$0xff]
        %v2206 = vld [vmem:[%s966 + $0x308] sm:$0xff]
        %v2207 = vld [vmem:[%s966 + $0x310] sm:$0xff]
        %v2208 = vld [vmem:[%s966 + $0x318] sm:$0xff]
        %v2209 = vld [vmem:[%s966 + $0x320] sm:$0xff]
        %v2210 = vld [vmem:[%s966 + $0x328] sm:$0xff]
        %v2211 = vld [vmem:[%s966 + $0x330] sm:$0xff]
        %v2212 = vld [vmem:[%s966 + $0x338] sm:$0xff]
        %v2213 = vld [vmem:[%s966 + $0x340] sm:$0xff]
        %v2214 = vld [vmem:[%s966 + $0x348] sm:$0xff]
        %v2215 = vld [vmem:[%s966 + $0x350] sm:$0xff]
        %v2216 = vld [vmem:[%s966 + $0x358] sm:$0xff]
        %v2217 = vld [vmem:[%s966 + $0x360] sm:$0xff]
        %v2218 = vld [vmem:[%s966 + $0x368] sm:$0xff]
        %v2219 = vld [vmem:[%s966 + $0x370] sm:$0xff]
        %v2220 = vld [vmem:[%s966 + $0x378] sm:$0xff]
        %v2221 = vld [vmem:[%s966 + $0x380] sm:$0xff]
        %v2222 = vld [vmem:[%s966 + $0x388] sm:$0xff]
        %v2223 = vld [vmem:[%s966 + $0x390] sm:$0xff]
        %v2224 = vld [vmem:[%s966 + $0x398] sm:$0xff]
        %v2225 = vld [vmem:[%s966 + $0x3a0] sm:$0xff]
        %v2226 = vld [vmem:[%s966 + $0x3a8] sm:$0xff]
        %v2227 = vld [vmem:[%s966 + $0x3b0] sm:$0xff]
        %v2228 = vld [vmem:[%s966 + $0x3b8] sm:$0xff]
        %v2229 = vld [vmem:[%s966 + $0x3c0] sm:$0xff]
        %v2230 = vld [vmem:[%s966 + $0x3c8] sm:$0xff]
        %v2231 = vld [vmem:[%s966 + $0x3d0] sm:$0xff]
        %v2232 = vld [vmem:[%s966 + $0x3d8] sm:$0xff]
        %v2233 = vld [vmem:[%s966 + $0x3e0] sm:$0xff]
        %v2234 = vld [vmem:[%s966 + $0x3e8] sm:$0xff]
        %v2235 = vld [vmem:[%s966 + $0x3f0] sm:$0xff]
        %v2236 = vld [vmem:[%s966 + $0x3f8] sm:$0xff]
        %v2237 = vpack.c.bf16 %v2108, %v2108
        %v2238 = vld [vmem:[%s975] sm:$0xff]
        %v2239 = vld [vmem:[%s975 + $0x8] sm:$0xff]
        %v2242 = vlaneseq
        %v2243 = vshrl.u32 %v2242, 7
        %v2244 = vsub.s32 0, %v2243
        %v2245 = vrot.slane %v2238, %v2244
        %v2246 = vlaneseq
        %v2247 = vshrl.u32 %v2246, 7
        %v2248 = vsub.s32 1, %v2247
        %v2249 = vrot.slane %v2238, %v2248
        %v2250 = vlaneseq
        %v2251 = vshrl.u32 %v2250, 7
        %v2252 = vsub.s32 2, %v2251
        %v2253 = vrot.slane %v2238, %v2252
        %v2254 = vlaneseq
        %v2255 = vshrl.u32 %v2254, 7
        %v2256 = vsub.s32 3, %v2255
        %v2257 = vrot.slane %v2238, %v2256
        %v2258 = vlaneseq
        %v2259 = vshrl.u32 %v2258, 7
        %v2260 = vsub.s32 4, %v2259
        %v2261 = vrot.slane %v2238, %v2260
        %v2262 = vlaneseq
        %v2263 = vshrl.u32 %v2262, 7
        %v2264 = vsub.s32 5, %v2263
        %v2265 = vrot.slane %v2238, %v2264
        %v2266 = vlaneseq
        %v2267 = vshrl.u32 %v2266, 7
        %v2268 = vsub.s32 6, %v2267
        %v2269 = vrot.slane %v2238, %v2268
        %v2270 = vlaneseq
        %v2271 = vshrl.u32 %v2270, 7
        %v2272 = vsub.s32 7, %v2271
        %v2273 = vrot.slane %v2238, %v2272
        %v2274 = vlaneseq
        %v2275 = vshrl.u32 %v2274, 7
        %v2276 = vsub.s32 0, %v2275
        %v2277 = vrot.slane %v2239, %v2276
        %v2278 = vlaneseq
        %v2279 = vshrl.u32 %v2278, 7
        %v2280 = vsub.s32 1, %v2279
        %v2281 = vrot.slane %v2239, %v2280
        %v2282 = vlaneseq
        %v2283 = vshrl.u32 %v2282, 7
        %v2284 = vsub.s32 2, %v2283
        %v2285 = vrot.slane %v2239, %v2284
        %v2286 = vlaneseq
        %v2287 = vshrl.u32 %v2286, 7
        %v2288 = vsub.s32 3, %v2287
        %v2289 = vrot.slane %v2239, %v2288
        %v2290 = vlaneseq
        %v2291 = vshrl.u32 %v2290, 7
        %v2292 = vsub.s32 4, %v2291
        %v2293 = vrot.slane %v2239, %v2292
        %v2294 = vlaneseq
        %v2295 = vshrl.u32 %v2294, 7
        %v2296 = vsub.s32 5, %v2295
        %v2297 = vrot.slane %v2239, %v2296
        %v2298 = vlaneseq
        %v2299 = vshrl.u32 %v2298, 7
        %v2300 = vsub.s32 6, %v2299
        %v2301 = vrot.slane %v2239, %v2300
        %v2302 = vlaneseq
        %v2303 = vshrl.u32 %v2302, 7
        %v2304 = vsub.s32 7, %v2303
        %v2305 = vrot.slane %v2239, %v2304
        %v2450 = vunpack.c.l.b16 %v2109
        %v2451 = vunpack.c.h.b16 %v2109
        %v2452 = vunpack.c.l.b16 %v2110
        %v2453 = vunpack.c.h.b16 %v2110
        %v2454 = vunpack.c.l.b16 %v2111
        %v2455 = vunpack.c.h.b16 %v2111
        %v2456 = vunpack.c.l.b16 %v2112
        %v2457 = vunpack.c.h.b16 %v2112
        %v2458 = vunpack.c.l.b16 %v2113
        %v2459 = vunpack.c.h.b16 %v2113
        %v2460 = vunpack.c.l.b16 %v2114
        %v2461 = vunpack.c.h.b16 %v2114
        %v2462 = vunpack.c.l.b16 %v2115
        %v2463 = vunpack.c.h.b16 %v2115
        %v2464 = vunpack.c.l.b16 %v2116
        %v2465 = vunpack.c.h.b16 %v2116
        %v2466 = vunpack.c.l.b16 %v2117
        %v2467 = vunpack.c.h.b16 %v2117
        %v2468 = vunpack.c.l.b16 %v2118
        %v2469 = vunpack.c.h.b16 %v2118
        %v2470 = vunpack.c.l.b16 %v2119
        %v2471 = vunpack.c.h.b16 %v2119
        %v2472 = vunpack.c.l.b16 %v2120
        %v2473 = vunpack.c.h.b16 %v2120
        %v2474 = vunpack.c.l.b16 %v2121
        %v2475 = vunpack.c.h.b16 %v2121
        %v2476 = vunpack.c.l.b16 %v2122
        %v2477 = vunpack.c.h.b16 %v2122
        %v2478 = vunpack.c.l.b16 %v2123
        %v2479 = vunpack.c.h.b16 %v2123
        %v2480 = vunpack.c.l.b16 %v2124
        %v2481 = vunpack.c.h.b16 %v2124
        %v2482 = vunpack.c.l.b16 %v2125
        %v2483 = vunpack.c.h.b16 %v2125
        %v2484 = vunpack.c.l.b16 %v2126
        %v2485 = vunpack.c.h.b16 %v2126
        %v2486 = vunpack.c.l.b16 %v2127
        %v2487 = vunpack.c.h.b16 %v2127
        %v2488 = vunpack.c.l.b16 %v2128
        %v2489 = vunpack.c.h.b16 %v2128
        %v2490 = vunpack.c.l.b16 %v2129
        %v2491 = vunpack.c.h.b16 %v2129
        %v2492 = vunpack.c.l.b16 %v2130
        %v2493 = vunpack.c.h.b16 %v2130
        %v2494 = vunpack.c.l.b16 %v2131
        %v2495 = vunpack.c.h.b16 %v2131
        %v2496 = vunpack.c.l.b16 %v2132
        %v2497 = vunpack.c.h.b16 %v2132
        %v2498 = vunpack.c.l.b16 %v2133
        %v2499 = vunpack.c.h.b16 %v2133
        %v2500 = vunpack.c.l.b16 %v2134
        %v2501 = vunpack.c.h.b16 %v2134
        %v2502 = vunpack.c.l.b16 %v2135
        %v2503 = vunpack.c.h.b16 %v2135
        %v2504 = vunpack.c.l.b16 %v2136
        %v2505 = vunpack.c.h.b16 %v2136
        %v2506 = vunpack.c.l.b16 %v2137
        %v2507 = vunpack.c.h.b16 %v2137
        %v2508 = vunpack.c.l.b16 %v2138
        %v2509 = vunpack.c.h.b16 %v2138
        %v2510 = vunpack.c.l.b16 %v2139
        %v2511 = vunpack.c.h.b16 %v2139
        %v2512 = vunpack.c.l.b16 %v2140
        %v2513 = vunpack.c.h.b16 %v2140
        %v2514 = vunpack.c.l.b16 %v2141
        %v2515 = vunpack.c.h.b16 %v2141
        %v2516 = vunpack.c.l.b16 %v2142
        %v2517 = vunpack.c.h.b16 %v2142
        %v2518 = vunpack.c.l.b16 %v2143
        %v2519 = vunpack.c.h.b16 %v2143
        %v2520 = vunpack.c.l.b16 %v2144
        %v2521 = vunpack.c.h.b16 %v2144
        %v2522 = vunpack.c.l.b16 %v2145
        %v2523 = vunpack.c.h.b16 %v2145
        %v2524 = vunpack.c.l.b16 %v2146
        %v2525 = vunpack.c.h.b16 %v2146
        %v2526 = vunpack.c.l.b16 %v2147
        %v2527 = vunpack.c.h.b16 %v2147
        %v2528 = vunpack.c.l.b16 %v2148
        %v2529 = vunpack.c.h.b16 %v2148
        %v2530 = vunpack.c.l.b16 %v2149
        %v2531 = vunpack.c.h.b16 %v2149
        %v2532 = vunpack.c.l.b16 %v2150
        %v2533 = vunpack.c.h.b16 %v2150
        %v2534 = vunpack.c.l.b16 %v2151
        %v2535 = vunpack.c.h.b16 %v2151
        %v2536 = vunpack.c.l.b16 %v2152
        %v2537 = vunpack.c.h.b16 %v2152
        %v2538 = vunpack.c.l.b16 %v2153
        %v2539 = vunpack.c.h.b16 %v2153
        %v2540 = vunpack.c.l.b16 %v2154
        %v2541 = vunpack.c.h.b16 %v2154
        %v2542 = vunpack.c.l.b16 %v2155
        %v2543 = vunpack.c.h.b16 %v2155
        %v2544 = vunpack.c.l.b16 %v2156
        %v2545 = vunpack.c.h.b16 %v2156
        %v2546 = vunpack.c.l.b16 %v2157
        %v2547 = vunpack.c.h.b16 %v2157
        %v2548 = vunpack.c.l.b16 %v2158
        %v2549 = vunpack.c.h.b16 %v2158
        %v2550 = vunpack.c.l.b16 %v2159
        %v2551 = vunpack.c.h.b16 %v2159
        %v2552 = vunpack.c.l.b16 %v2160
        %v2553 = vunpack.c.h.b16 %v2160
        %v2554 = vunpack.c.l.b16 %v2161
        %v2555 = vunpack.c.h.b16 %v2161
        %v2556 = vunpack.c.l.b16 %v2162
        %v2557 = vunpack.c.h.b16 %v2162
        %v2558 = vunpack.c.l.b16 %v2163
        %v2559 = vunpack.c.h.b16 %v2163
        %v2560 = vunpack.c.l.b16 %v2164
        %v2561 = vunpack.c.h.b16 %v2164
        %v2562 = vunpack.c.l.b16 %v2165
        %v2563 = vunpack.c.h.b16 %v2165
        %v2564 = vunpack.c.l.b16 %v2166
        %v2565 = vunpack.c.h.b16 %v2166
        %v2566 = vunpack.c.l.b16 %v2167
        %v2567 = vunpack.c.h.b16 %v2167
        %v2568 = vunpack.c.l.b16 %v2168
        %v2569 = vunpack.c.h.b16 %v2168
        %v2570 = vunpack.c.l.b16 %v2169
        %v2571 = vunpack.c.h.b16 %v2169
        %v2572 = vunpack.c.l.b16 %v2170
        %v2573 = vunpack.c.h.b16 %v2170
        %v2574 = vunpack.c.l.b16 %v2171
        %v2575 = vunpack.c.h.b16 %v2171
        %v2576 = vunpack.c.l.b16 %v2172
        %v2577 = vunpack.c.h.b16 %v2172
        %v2578 = vunpack.c.l.b16 %v2173
        %v2579 = vunpack.c.h.b16 %v2173
        %v2580 = vunpack.c.l.b16 %v2174
        %v2581 = vunpack.c.h.b16 %v2174
        %v2582 = vunpack.c.l.b16 %v2175
        %v2583 = vunpack.c.h.b16 %v2175
        %v2584 = vunpack.c.l.b16 %v2176
        %v2585 = vunpack.c.h.b16 %v2176
        %v2586 = vunpack.c.l.b16 %v2177
        %v2587 = vunpack.c.h.b16 %v2177
        %v2588 = vunpack.c.l.b16 %v2178
        %v2589 = vunpack.c.h.b16 %v2178
        %v2590 = vunpack.c.l.b16 %v2179
        %v2591 = vunpack.c.h.b16 %v2179
        %v2592 = vunpack.c.l.b16 %v2180
        %v2593 = vunpack.c.h.b16 %v2180
        %v2594 = vunpack.c.l.b16 %v2181
        %v2595 = vunpack.c.h.b16 %v2181
        %v2596 = vunpack.c.l.b16 %v2182
        %v2597 = vunpack.c.h.b16 %v2182
        %v2598 = vunpack.c.l.b16 %v2183
        %v2599 = vunpack.c.h.b16 %v2183
        %v2600 = vunpack.c.l.b16 %v2184
        %v2601 = vunpack.c.h.b16 %v2184
        %v2602 = vunpack.c.l.b16 %v2185
        %v2603 = vunpack.c.h.b16 %v2185
        %v2604 = vunpack.c.l.b16 %v2186
        %v2605 = vunpack.c.h.b16 %v2186
        %v2606 = vunpack.c.l.b16 %v2187
        %v2607 = vunpack.c.h.b16 %v2187
        %v2608 = vunpack.c.l.b16 %v2188
        %v2609 = vunpack.c.h.b16 %v2188
        %v2610 = vunpack.c.l.b16 %v2189
        %v2611 = vunpack.c.h.b16 %v2189
        %v2612 = vunpack.c.l.b16 %v2190
        %v2613 = vunpack.c.h.b16 %v2190
        %v2614 = vunpack.c.l.b16 %v2191
        %v2615 = vunpack.c.h.b16 %v2191
        %v2616 = vunpack.c.l.b16 %v2192
        %v2617 = vunpack.c.h.b16 %v2192
        %v2618 = vunpack.c.l.b16 %v2193
        %v2619 = vunpack.c.h.b16 %v2193
        %v2620 = vunpack.c.l.b16 %v2194
        %v2621 = vunpack.c.h.b16 %v2194
        %v2622 = vunpack.c.l.b16 %v2195
        %v2623 = vunpack.c.h.b16 %v2195
        %v2624 = vunpack.c.l.b16 %v2196
        %v2625 = vunpack.c.h.b16 %v2196
        %v2626 = vunpack.c.l.b16 %v2197
        %v2627 = vunpack.c.h.b16 %v2197
        %v2628 = vunpack.c.l.b16 %v2198
        %v2629 = vunpack.c.h.b16 %v2198
        %v2630 = vunpack.c.l.b16 %v2199
        %v2631 = vunpack.c.h.b16 %v2199
        %v2632 = vunpack.c.l.b16 %v2200
        %v2633 = vunpack.c.h.b16 %v2200
        %v2634 = vunpack.c.l.b16 %v2201
        %v2635 = vunpack.c.h.b16 %v2201
        %v2636 = vunpack.c.l.b16 %v2202
        %v2637 = vunpack.c.h.b16 %v2202
        %v2638 = vunpack.c.l.b16 %v2203
        %v2639 = vunpack.c.h.b16 %v2203
        %v2640 = vunpack.c.l.b16 %v2204
        %v2641 = vunpack.c.h.b16 %v2204
        %v2642 = vunpack.c.l.b16 %v2205
        %v2643 = vunpack.c.h.b16 %v2205
        %v2644 = vunpack.c.l.b16 %v2206
        %v2645 = vunpack.c.h.b16 %v2206
        %v2646 = vunpack.c.l.b16 %v2207
        %v2647 = vunpack.c.h.b16 %v2207
        %v2648 = vunpack.c.l.b16 %v2208
        %v2649 = vunpack.c.h.b16 %v2208
        %v2650 = vunpack.c.l.b16 %v2209
        %v2651 = vunpack.c.h.b16 %v2209
        %v2652 = vunpack.c.l.b16 %v2210
        %v2653 = vunpack.c.h.b16 %v2210
        %v2654 = vunpack.c.l.b16 %v2211
        %v2655 = vunpack.c.h.b16 %v2211
        %v2656 = vunpack.c.l.b16 %v2212
        %v2657 = vunpack.c.h.b16 %v2212
        %v2658 = vunpack.c.l.b16 %v2213
        %v2659 = vunpack.c.h.b16 %v2213
        %v2660 = vunpack.c.l.b16 %v2214
        %v2661 = vunpack.c.h.b16 %v2214
        %v2662 = vunpack.c.l.b16 %v2215
        %v2663 = vunpack.c.h.b16 %v2215
        %v2664 = vunpack.c.l.b16 %v2216
        %v2665 = vunpack.c.h.b16 %v2216
        %v2666 = vunpack.c.l.b16 %v2217
        %v2667 = vunpack.c.h.b16 %v2217
        %v2668 = vunpack.c.l.b16 %v2218
        %v2669 = vunpack.c.h.b16 %v2218
        %v2670 = vunpack.c.l.b16 %v2219
        %v2671 = vunpack.c.h.b16 %v2219
        %v2672 = vunpack.c.l.b16 %v2220
        %v2673 = vunpack.c.h.b16 %v2220
        %v2674 = vunpack.c.l.b16 %v2221
        %v2675 = vunpack.c.h.b16 %v2221
        %v2676 = vunpack.c.l.b16 %v2222
        %v2677 = vunpack.c.h.b16 %v2222
        %v2678 = vunpack.c.l.b16 %v2223
        %v2679 = vunpack.c.h.b16 %v2223
        %v2680 = vunpack.c.l.b16 %v2224
        %v2681 = vunpack.c.h.b16 %v2224
        %v2682 = vunpack.c.l.b16 %v2225
        %v2683 = vunpack.c.h.b16 %v2225
        %v2684 = vunpack.c.l.b16 %v2226
        %v2685 = vunpack.c.h.b16 %v2226
        %v2686 = vunpack.c.l.b16 %v2227
        %v2687 = vunpack.c.h.b16 %v2227
        %v2688 = vunpack.c.l.b16 %v2228
        %v2689 = vunpack.c.h.b16 %v2228
        %v2690 = vunpack.c.l.b16 %v2229
        %v2691 = vunpack.c.h.b16 %v2229
        %v2692 = vunpack.c.l.b16 %v2230
        %v2693 = vunpack.c.h.b16 %v2230
        %v2694 = vunpack.c.l.b16 %v2231
        %v2695 = vunpack.c.h.b16 %v2231
        %v2696 = vunpack.c.l.b16 %v2232
        %v2697 = vunpack.c.h.b16 %v2232
        %v2698 = vunpack.c.l.b16 %v2233
        %v2699 = vunpack.c.h.b16 %v2233
        %v2700 = vunpack.c.l.b16 %v2234
        %v2701 = vunpack.c.h.b16 %v2234
        %v2702 = vunpack.c.l.b16 %v2235
        %v2703 = vunpack.c.h.b16 %v2235
        %v2704 = vunpack.c.l.b16 %v2236
        %v2705 = vunpack.c.h.b16 %v2236
        %v2706 = vpack.c.b16 %v2466, %v2450
        %v2707 = vpack.c.b16 %v2467, %v2451
        %v2708 = vpack.c.b16 %v2468, %v2452
        %v2709 = vpack.c.b16 %v2469, %v2453
        %v2710 = vpack.c.b16 %v2470, %v2454
        %v2711 = vpack.c.b16 %v2471, %v2455
        %v2712 = vpack.c.b16 %v2472, %v2456
        %v2713 = vpack.c.b16 %v2473, %v2457
        %v2714 = vpack.c.b16 %v2474, %v2458
        %v2715 = vpack.c.b16 %v2475, %v2459
        %v2716 = vpack.c.b16 %v2476, %v2460
        %v2717 = vpack.c.b16 %v2477, %v2461
        %v2718 = vpack.c.b16 %v2478, %v2462
        %v2719 = vpack.c.b16 %v2479, %v2463
        %v2720 = vpack.c.b16 %v2480, %v2464
        %v2721 = vpack.c.b16 %v2481, %v2465
        %v2722 = vpack.c.b16 %v2498, %v2482
        %v2723 = vpack.c.b16 %v2499, %v2483
        %v2724 = vpack.c.b16 %v2500, %v2484
        %v2725 = vpack.c.b16 %v2501, %v2485
        %v2726 = vpack.c.b16 %v2502, %v2486
        %v2727 = vpack.c.b16 %v2503, %v2487
        %v2728 = vpack.c.b16 %v2504, %v2488
        %v2729 = vpack.c.b16 %v2505, %v2489
        %v2730 = vpack.c.b16 %v2506, %v2490
        %v2731 = vpack.c.b16 %v2507, %v2491
        %v2732 = vpack.c.b16 %v2508, %v2492
        %v2733 = vpack.c.b16 %v2509, %v2493
        %v2734 = vpack.c.b16 %v2510, %v2494
        %v2735 = vpack.c.b16 %v2511, %v2495
        %v2736 = vpack.c.b16 %v2512, %v2496
        %v2737 = vpack.c.b16 %v2513, %v2497
        %v2738 = vpack.c.b16 %v2530, %v2514
        %v2739 = vpack.c.b16 %v2531, %v2515
        %v2740 = vpack.c.b16 %v2532, %v2516
        %v2741 = vpack.c.b16 %v2533, %v2517
        %v2742 = vpack.c.b16 %v2534, %v2518
        %v2743 = vpack.c.b16 %v2535, %v2519
        %v2744 = vpack.c.b16 %v2536, %v2520
        %v2745 = vpack.c.b16 %v2537, %v2521
        %v2746 = vpack.c.b16 %v2538, %v2522
        %v2747 = vpack.c.b16 %v2539, %v2523
        %v2748 = vpack.c.b16 %v2540, %v2524
        %v2749 = vpack.c.b16 %v2541, %v2525
        %v2750 = vpack.c.b16 %v2542, %v2526
        %v2751 = vpack.c.b16 %v2543, %v2527
        %v2752 = vpack.c.b16 %v2544, %v2528
        %v2753 = vpack.c.b16 %v2545, %v2529
        %v2754 = vpack.c.b16 %v2562, %v2546
        %v2755 = vpack.c.b16 %v2563, %v2547
        %v2756 = vpack.c.b16 %v2564, %v2548
        %v2757 = vpack.c.b16 %v2565, %v2549
        %v2758 = vpack.c.b16 %v2566, %v2550
        %v2759 = vpack.c.b16 %v2567, %v2551
        %v2760 = vpack.c.b16 %v2568, %v2552
        %v2761 = vpack.c.b16 %v2569, %v2553
        %v2762 = vpack.c.b16 %v2570, %v2554
        %v2763 = vpack.c.b16 %v2571, %v2555
        %v2764 = vpack.c.b16 %v2572, %v2556
        %v2765 = vpack.c.b16 %v2573, %v2557
        %v2766 = vpack.c.b16 %v2574, %v2558
        %v2767 = vpack.c.b16 %v2575, %v2559
        %v2768 = vpack.c.b16 %v2576, %v2560
        %v2769 = vpack.c.b16 %v2577, %v2561
        %v2770 = vpack.c.b16 %v2594, %v2578
        %v2771 = vpack.c.b16 %v2595, %v2579
        %v2772 = vpack.c.b16 %v2596, %v2580
        %v2773 = vpack.c.b16 %v2597, %v2581
        %v2774 = vpack.c.b16 %v2598, %v2582
        %v2775 = vpack.c.b16 %v2599, %v2583
        %v2776 = vpack.c.b16 %v2600, %v2584
        %v2777 = vpack.c.b16 %v2601, %v2585
        %v2778 = vpack.c.b16 %v2602, %v2586
        %v2779 = vpack.c.b16 %v2603, %v2587
        %v2780 = vpack.c.b16 %v2604, %v2588
        %v2781 = vpack.c.b16 %v2605, %v2589
        %v2782 = vpack.c.b16 %v2606, %v2590
        %v2783 = vpack.c.b16 %v2607, %v2591
        %v2784 = vpack.c.b16 %v2608, %v2592
        %v2785 = vpack.c.b16 %v2609, %v2593
        %v2786 = vpack.c.b16 %v2626, %v2610
        %v2787 = vpack.c.b16 %v2627, %v2611
        %v2788 = vpack.c.b16 %v2628, %v2612
        %v2789 = vpack.c.b16 %v2629, %v2613
        %v2790 = vpack.c.b16 %v2630, %v2614
        %v2791 = vpack.c.b16 %v2631, %v2615
        %v2792 = vpack.c.b16 %v2632, %v2616
        %v2793 = vpack.c.b16 %v2633, %v2617
        %v2794 = vpack.c.b16 %v2634, %v2618
        %v2795 = vpack.c.b16 %v2635, %v2619
        %v2796 = vpack.c.b16 %v2636, %v2620
        %v2797 = vpack.c.b16 %v2637, %v2621
        %v2798 = vpack.c.b16 %v2638, %v2622
        %v2799 = vpack.c.b16 %v2639, %v2623
        %v2800 = vpack.c.b16 %v2640, %v2624
        %v2801 = vpack.c.b16 %v2641, %v2625
        %v2802 = vpack.c.b16 %v2658, %v2642
        %v2803 = vpack.c.b16 %v2659, %v2643
        %v2804 = vpack.c.b16 %v2660, %v2644
        %v2805 = vpack.c.b16 %v2661, %v2645
        %v2806 = vpack.c.b16 %v2662, %v2646
        %v2807 = vpack.c.b16 %v2663, %v2647
        %v2808 = vpack.c.b16 %v2664, %v2648
        %v2809 = vpack.c.b16 %v2665, %v2649
        %v2810 = vpack.c.b16 %v2666, %v2650
        %v2811 = vpack.c.b16 %v2667, %v2651
        %v2812 = vpack.c.b16 %v2668, %v2652
        %v2813 = vpack.c.b16 %v2669, %v2653
        %v2814 = vpack.c.b16 %v2670, %v2654
        %v2815 = vpack.c.b16 %v2671, %v2655
        %v2816 = vpack.c.b16 %v2672, %v2656
        %v2817 = vpack.c.b16 %v2673, %v2657
        %v2818 = vpack.c.b16 %v2690, %v2674
        %v2819 = vpack.c.b16 %v2691, %v2675
        %v2820 = vpack.c.b16 %v2692, %v2676
        %v2821 = vpack.c.b16 %v2693, %v2677
        %v2822 = vpack.c.b16 %v2694, %v2678
        %v2823 = vpack.c.b16 %v2695, %v2679
        %v2824 = vpack.c.b16 %v2696, %v2680
        %v2825 = vpack.c.b16 %v2697, %v2681
        %v2826 = vpack.c.b16 %v2698, %v2682
        %v2827 = vpack.c.b16 %v2699, %v2683
        %v2828 = vpack.c.b16 %v2700, %v2684
        %v2829 = vpack.c.b16 %v2701, %v2685
        %v2830 = vpack.c.b16 %v2702, %v2686
        %v2831 = vpack.c.b16 %v2703, %v2687
        %v2832 = vpack.c.b16 %v2704, %v2688
        %v2833 = vpack.c.b16 %v2705, %v2689
        %2962 = vmatprep.subr.bf16.mxu0 %v2707
        %2963 = vmatpush1.bf16.msra.mxu0 %v2706
        %2964 = vmatprep.subr.bf16.mxu0 %v2723
        %2965 = vmatpush1.bf16.msra.mxu0 %v2722
        %2966 = vmatprep.subr.bf16.mxu0 %v2739
        %2967 = vmatpush1.bf16.msra.mxu0 %v2738
        %2968 = vmatprep.subr.bf16.mxu0 %v2755
        %2969 = vmatpush1.bf16.msra.mxu0 %v2754
        %2970 = vmatprep.subr.bf16.mxu0 %v2771
        %2971 = vmatpush1.bf16.msra.mxu0 %v2770
        %2972 = vmatprep.subr.bf16.mxu0 %v2787
        %2973 = vmatpush1.bf16.msra.mxu0 %v2786
        %2974 = vmatprep.subr.bf16.mxu0 %v2803
        %2975 = vmatpush1.bf16.msra.mxu0 %v2802
        %2976 = vmatprep.subr.bf16.mxu0 %v2819
        %2977 = vmatpush1.bf16.msra.mxu0 %v2818
        %2978 = vmatprep.subr.bf16.mxu0 0
        %2979 = vmatpush1.bf16.msra.mxu0 0
        %2980 = vmatprep.subr.bf16.mxu0 0
        %2981 = vmatpush1.bf16.msra.mxu0 0
        %2982 = vmatprep.subr.bf16.mxu0 0
        %2983 = vmatpush1.bf16.msra.mxu0 0
        %2984 = vmatprep.subr.bf16.mxu0 0
        %2985 = vmatpush1.bf16.msra.mxu0 0
        %2986 = vmatprep.subr.bf16.mxu0 0
        %2987 = vmatpush1.bf16.msra.mxu0 0
        %2988 = vmatprep.subr.bf16.mxu0 0
        %2989 = vmatpush1.bf16.msra.mxu0 0
        %2990 = vmatprep.subr.bf16.mxu0 0
        %2991 = vmatpush1.bf16.msra.mxu0 0
        %2992 = vmatprep.subr.bf16.mxu0 0
        %2993 = vmatpush1.bf16.msra.mxu0 0
        %2994 = vmatprep.mubr.bf16.mxu0 0
        %2995 = vmatmul.mubr.bf16.gmra.mrb[0].mxu0 %v2237
        %v2996 = vpop.f32.mrb[0].mxu0
        %v2997 = vadd.f32 %v2245, %v2996
        %v2998 = vpop.f32.mrb[0].mxu0
        %v2999 = vadd.f32 %v2249, %v2998
        %v3000 = vpop.f32.mrb[0].mxu0
        %v3001 = vpop.f32.mrb[0].mxu0
        %3002 = vdwg.mxu0
        %3003 = vmatprep.subr.bf16.mxu0 %v2709
        %3004 = vmatpush1.bf16.msra.mxu0 %v2708
        %3005 = vmatprep.subr.bf16.mxu0 %v2725
        %3006 = vmatpush1.bf16.msra.mxu0 %v2724
        %3007 = vmatprep.subr.bf16.mxu0 %v2741
        %3008 = vmatpush1.bf16.msra.mxu0 %v2740
        %3009 = vmatprep.subr.bf16.mxu0 %v2757
        %3010 = vmatpush1.bf16.msra.mxu0 %v2756
        %3011 = vmatprep.subr.bf16.mxu0 %v2773
        %3012 = vmatpush1.bf16.msra.mxu0 %v2772
        %3013 = vmatprep.subr.bf16.mxu0 %v2789
        %3014 = vmatpush1.bf16.msra.mxu0 %v2788
        %3015 = vmatprep.subr.bf16.mxu0 %v2805
        %3016 = vmatpush1.bf16.msra.mxu0 %v2804
        %3017 = vmatprep.subr.bf16.mxu0 %v2821
        %3018 = vmatpush1.bf16.msra.mxu0 %v2820
        %3019 = vmatprep.subr.bf16.mxu0 0
        %3020 = vmatpush1.bf16.msra.mxu0 0
        %3021 = vmatprep.subr.bf16.mxu0 0
        %3022 = vmatpush1.bf16.msra.mxu0 0
        %3023 = vmatprep.subr.bf16.mxu0 0
        %3024 = vmatpush1.bf16.msra.mxu0 0
        %3025 = vmatprep.subr.bf16.mxu0 0
        %3026 = vmatpush1.bf16.msra.mxu0 0
        %3027 = vmatprep.subr.bf16.mxu0 0
        %3028 = vmatpush1.bf16.msra.mxu0 0
        %3029 = vmatprep.subr.bf16.mxu0 0
        %3030 = vmatpush1.bf16.msra.mxu0 0
        %3031 = vmatprep.subr.bf16.mxu0 0
        %3032 = vmatpush1.bf16.msra.mxu0 0
        %3033 = vmatprep.subr.bf16.mxu0 0
        %3034 = vmatpush1.bf16.msra.mxu0 0
        %3035 = vmatprep.mubr.bf16.mxu0 0
        %3036 = vmatmul.mubr.bf16.gmra.mrb[0].mxu0 %v2237
        %v3037 = vpop.f32.mrb[0].mxu0
        %v3038 = vadd.f32 %v2253, %v3037
        %v3039 = vpop.f32.mrb[0].mxu0
        %v3040 = vadd.f32 %v2257, %v3039
        %v3041 = vpop.f32.mrb[0].mxu0
        %v3042 = vpop.f32.mrb[0].mxu0
        %3043 = vdwg.mxu0
        %3044 = vmatprep.subr.bf16.mxu0 %v2711
        %3045 = vmatpush1.bf16.msra.mxu0 %v2710
        %3046 = vmatprep.subr.bf16.mxu0 %v2727
        %3047 = vmatpush1.bf16.msra.mxu0 %v2726
        %3048 = vmatprep.subr.bf16.mxu0 %v2743
        %3049 = vmatpush1.bf16.msra.mxu0 %v2742
        %3050 = vmatprep.subr.bf16.mxu0 %v2759
        %3051 = vmatpush1.bf16.msra.mxu0 %v2758
        %3052 = vmatprep.subr.bf16.mxu0 %v2775
        %3053 = vmatpush1.bf16.msra.mxu0 %v2774
        %3054 = vmatprep.subr.bf16.mxu0 %v2791
        %3055 = vmatpush1.bf16.msra.mxu0 %v2790
        %3056 = vmatprep.subr.bf16.mxu0 %v2807
        %3057 = vmatpush1.bf16.msra.mxu0 %v2806
        %3058 = vmatprep.subr.bf16.mxu0 %v2823
        %3059 = vmatpush1.bf16.msra.mxu0 %v2822
        %3060 = vmatprep.subr.bf16.mxu0 0
        %3061 = vmatpush1.bf16.msra.mxu0 0
        %3062 = vmatprep.subr.bf16.mxu0 0
        %3063 = vmatpush1.bf16.msra.mxu0 0
        %3064 = vmatprep.subr.bf16.mxu0 0
        %3065 = vmatpush1.bf16.msra.mxu0 0
        %3066 = vmatprep.subr.bf16.mxu0 0
        %3067 = vmatpush1.bf16.msra.mxu0 0
        %3068 = vmatprep.subr.bf16.mxu0 0
        %3069 = vmatpush1.bf16.msra.mxu0 0
        %3070 = vmatprep.subr.bf16.mxu0 0
        %3071 = vmatpush1.bf16.msra.mxu0 0
        %3072 = vmatprep.subr.bf16.mxu0 0
        %3073 = vmatpush1.bf16.msra.mxu0 0
        %3074 = vmatprep.subr.bf16.mxu0 0
        %3075 = vmatpush1.bf16.msra.mxu0 0
        %3076 = vmatprep.mubr.bf16.mxu0 0
        %3077 = vmatmul.mubr.bf16.gmra.mrb[0].mxu0 %v2237
        %v3078 = vpop.f32.mrb[0].mxu0
        %v3079 = vadd.f32 %v2261, %v3078
        %v3080 = vpop.f32.mrb[0].mxu0
        %v3081 = vadd.f32 %v2265, %v3080
        %v3082 = vpop.f32.mrb[0].mxu0
        %v3083 = vpop.f32.mrb[0].mxu0
        %3084 = vdwg.mxu0
        %3085 = vmatprep.subr.bf16.mxu0 %v2713
        %3086 = vmatpush1.bf16.msra.mxu0 %v2712
        %3087 = vmatprep.subr.bf16.mxu0 %v2729
        %3088 = vmatpush1.bf16.msra.mxu0 %v2728
        %3089 = vmatprep.subr.bf16.mxu0 %v2745
        %3090 = vmatpush1.bf16.msra.mxu0 %v2744
        %3091 = vmatprep.subr.bf16.mxu0 %v2761
        %3092 = vmatpush1.bf16.msra.mxu0 %v2760
        %3093 = vmatprep.subr.bf16.mxu0 %v2777
        %3094 = vmatpush1.bf16.msra.mxu0 %v2776
        %3095 = vmatprep.subr.bf16.mxu0 %v2793
        %3096 = vmatpush1.bf16.msra.mxu0 %v2792
        %3097 = vmatprep.subr.bf16.mxu0 %v2809
        %3098 = vmatpush1.bf16.msra.mxu0 %v2808
        %3099 = vmatprep.subr.bf16.mxu0 %v2825
        %3100 = vmatpush1.bf16.msra.mxu0 %v2824
        %3101 = vmatprep.subr.bf16.mxu0 0
        %3102 = vmatpush1.bf16.msra.mxu0 0
        %3103 = vmatprep.subr.bf16.mxu0 0
        %3104 = vmatpush1.bf16.msra.mxu0 0
        %3105 = vmatprep.subr.bf16.mxu0 0
        %3106 = vmatpush1.bf16.msra.mxu0 0
        %3107 = vmatprep.subr.bf16.mxu0 0
        %3108 = vmatpush1.bf16.msra.mxu0 0
        %3109 = vmatprep.subr.bf16.mxu0 0
        %3110 = vmatpush1.bf16.msra.mxu0 0
        %3111 = vmatprep.subr.bf16.mxu0 0
        %3112 = vmatpush1.bf16.msra.mxu0 0
        %3113 = vmatprep.subr.bf16.mxu0 0
        %3114 = vmatpush1.bf16.msra.mxu0 0
        %3115 = vmatprep.subr.bf16.mxu0 0
        %3116 = vmatpush1.bf16.msra.mxu0 0
        %3117 = vmatprep.mubr.bf16.mxu0 0
        %3118 = vmatmul.mubr.bf16.gmra.mrb[0].mxu0 %v2237
        %v3119 = vpop.f32.mrb[0].mxu0
        %v3120 = vadd.f32 %v2269, %v3119
        %v3121 = vpop.f32.mrb[0].mxu0
        %v3122 = vadd.f32 %v2273, %v3121
        %v3123 = vpop.f32.mrb[0].mxu0
        %v3124 = vpop.f32.mrb[0].mxu0
        %3125 = vdwg.mxu0
        %3126 = vmatprep.subr.bf16.mxu0 %v2715
        %3127 = vmatpush1.bf16.msra.mxu0 %v2714
        %3128 = vmatprep.subr.bf16.mxu0 %v2731
        %3129 = vmatpush1.bf16.msra.mxu0 %v2730
        %3130 = vmatprep.subr.bf16.mxu0 %v2747
        %3131 = vmatpush1.bf16.msra.mxu0 %v2746
        %3132 = vmatprep.subr.bf16.mxu0 %v2763
        %3133 = vmatpush1.bf16.msra.mxu0 %v2762
        %3134 = vmatprep.subr.bf16.mxu0 %v2779
        %3135 = vmatpush1.bf16.msra.mxu0 %v2778
        %3136 = vmatprep.subr.bf16.mxu0 %v2795
        %3137 = vmatpush1.bf16.msra.mxu0 %v2794
        %3138 = vmatprep.subr.bf16.mxu0 %v2811
        %3139 = vmatpush1.bf16.msra.mxu0 %v2810
        %3140 = vmatprep.subr.bf16.mxu0 %v2827
        %3141 = vmatpush1.bf16.msra.mxu0 %v2826
        %3142 = vmatprep.subr.bf16.mxu0 0
        %3143 = vmatpush1.bf16.msra.mxu0 0
        %3144 = vmatprep.subr.bf16.mxu0 0
        %3145 = vmatpush1.bf16.msra.mxu0 0
        %3146 = vmatprep.subr.bf16.mxu0 0
        %3147 = vmatpush1.bf16.msra.mxu0 0
        %3148 = vmatprep.subr.bf16.mxu0 0
        %3149 = vmatpush1.bf16.msra.mxu0 0
        %3150 = vmatprep.subr.bf16.mxu0 0
        %3151 = vmatpush1.bf16.msra.mxu0 0
        %3152 = vmatprep.subr.bf16.mxu0 0
        %3153 = vmatpush1.bf16.msra.mxu0 0
        %3154 = vmatprep.subr.bf16.mxu0 0
        %3155 = vmatpush1.bf16.msra.mxu0 0
        %3156 = vmatprep.subr.bf16.mxu0 0
        %3157 = vmatpush1.bf16.msra.mxu0 0
        %3158 = vmatprep.mubr.bf16.mxu0 0
        %3159 = vmatmul.mubr.bf16.gmra.mrb[0].mxu0 %v2237
        %v3160 = vpop.f32.mrb[0].mxu0
        %v3161 = vadd.f32 %v2277, %v3160
        %v3162 = vpop.f32.mrb[0].mxu0
        %v3163 = vadd.f32 %v2281, %v3162
        %v3164 = vpop.f32.mrb[0].mxu0
        %v3165 = vpop.f32.mrb[0].mxu0
        %3166 = vdwg.mxu0
        %3167 = vmatprep.subr.bf16.mxu0 %v2717
        %3168 = vmatpush1.bf16.msra.mxu0 %v2716
        %3169 = vmatprep.subr.bf16.mxu0 %v2733
        %3170 = vmatpush1.bf16.msra.mxu0 %v2732
        %3171 = vmatprep.subr.bf16.mxu0 %v2749
        %3172 = vmatpush1.bf16.msra.mxu0 %v2748
        %3173 = vmatprep.subr.bf16.mxu0 %v2765
        %3174 = vmatpush1.bf16.msra.mxu0 %v2764
        %3175 = vmatprep.subr.bf16.mxu0 %v2781
        %3176 = vmatpush1.bf16.msra.mxu0 %v2780
        %3177 = vmatprep.subr.bf16.mxu0 %v2797
        %3178 = vmatpush1.bf16.msra.mxu0 %v2796
        %3179 = vmatprep.subr.bf16.mxu0 %v2813
        %3180 = vmatpush1.bf16.msra.mxu0 %v2812
        %3181 = vmatprep.subr.bf16.mxu0 %v2829
        %3182 = vmatpush1.bf16.msra.mxu0 %v2828
        %3183 = vmatprep.subr.bf16.mxu0 0
        %3184 = vmatpush1.bf16.msra.mxu0 0
        %3185 = vmatprep.subr.bf16.mxu0 0
        %3186 = vmatpush1.bf16.msra.mxu0 0
        %3187 = vmatprep.subr.bf16.mxu0 0
        %3188 = vmatpush1.bf16.msra.mxu0 0
        %3189 = vmatprep.subr.bf16.mxu0 0
        %3190 = vmatpush1.bf16.msra.mxu0 0
        %3191 = vmatprep.subr.bf16.mxu0 0
        %3192 = vmatpush1.bf16.msra.mxu0 0
        %3193 = vmatprep.subr.bf16.mxu0 0
        %3194 = vmatpush1.bf16.msra.mxu0 0
        %3195 = vmatprep.subr.bf16.mxu0 0
        %3196 = vmatpush1.bf16.msra.mxu0 0
        %3197 = vmatprep.subr.bf16.mxu0 0
        %3198 = vmatpush1.bf16.msra.mxu0 0
        %3199 = vmatprep.mubr.bf16.mxu0 0
        %3200 = vmatmul.mubr.bf16.gmra.mrb[0].mxu0 %v2237
        %v3201 = vpop.f32.mrb[0].mxu0
        %v3202 = vadd.f32 %v2285, %v3201
        %v3203 = vpop.f32.mrb[0].mxu0
        %v3204 = vadd.f32 %v2289, %v3203
        %v3205 = vpop.f32.mrb[0].mxu0
        %v3206 = vpop.f32.mrb[0].mxu0
        %3207 = vdwg.mxu0
        %3208 = vmatprep.subr.bf16.mxu0 %v2719
        %3209 = vmatpush1.bf16.msra.mxu0 %v2718
        %3210 = vmatprep.subr.bf16.mxu0 %v2735
        %3211 = vmatpush1.bf16.msra.mxu0 %v2734
        %3212 = vmatprep.subr.bf16.mxu0 %v2751
        %3213 = vmatpush1.bf16.msra.mxu0 %v2750
        %3214 = vmatprep.subr.bf16.mxu0 %v2767
        %3215 = vmatpush1.bf16.msra.mxu0 %v2766
        %3216 = vmatprep.subr.bf16.mxu0 %v2783
        %3217 = vmatpush1.bf16.msra.mxu0 %v2782
        %3218 = vmatprep.subr.bf16.mxu0 %v2799
        %3219 = vmatpush1.bf16.msra.mxu0 %v2798
        %3220 = vmatprep.subr.bf16.mxu0 %v2815
        %3221 = vmatpush1.bf16.msra.mxu0 %v2814
        %3222 = vmatprep.subr.bf16.mxu0 %v2831
        %3223 = vmatpush1.bf16.msra.mxu0 %v2830
        %3224 = vmatprep.subr.bf16.mxu0 0
        %3225 = vmatpush1.bf16.msra.mxu0 0
        %3226 = vmatprep.subr.bf16.mxu0 0
        %3227 = vmatpush1.bf16.msra.mxu0 0
        %3228 = vmatprep.subr.bf16.mxu0 0
        %3229 = vmatpush1.bf16.msra.mxu0 0
        %3230 = vmatprep.subr.bf16.mxu0 0
        %3231 = vmatpush1.bf16.msra.mxu0 0
        %3232 = vmatprep.subr.bf16.mxu0 0
        %3233 = vmatpush1.bf16.msra.mxu0 0
        %3234 = vmatprep.subr.bf16.mxu0 0
        %3235 = vmatpush1.bf16.msra.mxu0 0
        %3236 = vmatprep.subr.bf16.mxu0 0
        %3237 = vmatpush1.bf16.msra.mxu0 0
        %3238 = vmatprep.subr.bf16.mxu0 0
        %3239 = vmatpush1.bf16.msra.mxu0 0
        %3240 = vmatprep.mubr.bf16.mxu0 0
        %3241 = vmatmul.mubr.bf16.gmra.mrb[0].mxu0 %v2237
        %v3242 = vpop.f32.mrb[0].mxu0
        %v3243 = vadd.f32 %v2293, %v3242
        %v3244 = vpop.f32.mrb[0].mxu0
        %v3245 = vadd.f32 %v2297, %v3244
        %v3246 = vpop.f32.mrb[0].mxu0
        %v3247 = vpop.f32.mrb[0].mxu0
        %3248 = vdwg.mxu0
        %3249 = vmatprep.subr.bf16.mxu0 %v2721
        %3250 = vmatpush1.bf16.msra.mxu0 %v2720
        %3251 = vmatprep.subr.bf16.mxu0 %v2737
        %3252 = vmatpush1.bf16.msra.mxu0 %v2736
        %3253 = vmatprep.subr.bf16.mxu0 %v2753
        %3254 = vmatpush1.bf16.msra.mxu0 %v2752
        %3255 = vmatprep.subr.bf16.mxu0 %v2769
        %3256 = vmatpush1.bf16.msra.mxu0 %v2768
        %3257 = vmatprep.subr.bf16.mxu0 %v2785
        %3258 = vmatpush1.bf16.msra.mxu0 %v2784
        %3259 = vmatprep.subr.bf16.mxu0 %v2801
        %3260 = vmatpush1.bf16.msra.mxu0 %v2800
        %3261 = vmatprep.subr.bf16.mxu0 %v2817
        %3262 = vmatpush1.bf16.msra.mxu0 %v2816
        %3263 = vmatprep.subr.bf16.mxu0 %v2833
        %3264 = vmatpush1.bf16.msra.mxu0 %v2832
        %3265 = vmatprep.subr.bf16.mxu0 0
        %3266 = vmatpush1.bf16.msra.mxu0 0
        %3267 = vmatprep.subr.bf16.mxu0 0
        %3268 = vmatpush1.bf16.msra.mxu0 0
        %3269 = vmatprep.subr.bf16.mxu0 0
        %3270 = vmatpush1.bf16.msra.mxu0 0
        %3271 = vmatprep.subr.bf16.mxu0 0
        %3272 = vmatpush1.bf16.msra.mxu0 0
        %3273 = vmatprep.subr.bf16.mxu0 0
        %3274 = vmatpush1.bf16.msra.mxu0 0
        %3275 = vmatprep.subr.bf16.mxu0 0
        %3276 = vmatpush1.bf16.msra.mxu0 0
        %3277 = vmatprep.subr.bf16.mxu0 0
        %3278 = vmatpush1.bf16.msra.mxu0 0
        %3279 = vmatprep.subr.bf16.mxu0 0
        %3280 = vmatpush1.bf16.msra.mxu0 0
        %3281 = vmatprep.mubr.bf16.mxu0 0
        %3282 = vmatmul.mubr.bf16.gmra.mrb[0].mxu0 %v2237
        %v3283 = vpop.f32.mrb[0].mxu0
        %v3284 = vadd.f32 %v2301, %v3283
        %v3285 = vpop.f32.mrb[0].mxu0
        %v3286 = vadd.f32 %v2305, %v3285
        %v3287 = vpop.f32.mrb[0].mxu0
        %v3288 = vpop.f32.mrb[0].mxu0
        %3289 = vdwg.mxu0
        %v3290 = vmax.f32 %v2997, 0.0
        %v3291 = vmax.f32 %v2999, 0.0
        %v3292 = vmax.f32 %v3038, 0.0
        %v3293 = vmax.f32 %v3040, 0.0
        %v3294 = vmax.f32 %v3079, 0.0
        %v3295 = vmax.f32 %v3081, 0.0
        %v3296 = vmax.f32 %v3120, 0.0
        %v3297 = vmax.f32 %v3122, 0.0
        %v3298 = vmax.f32 %v3161, 0.0
        %v3299 = vmax.f32 %v3163, 0.0
        %v3300 = vmax.f32 %v3202, 0.0
        %v3301 = vmax.f32 %v3204, 0.0
        %v3302 = vmax.f32 %v3243, 0.0
        %v3303 = vmax.f32 %v3245, 0.0
        %v3304 = vmax.f32 %v3284, 0.0
        %v3305 = vmax.f32 %v3286, 0.0
        %v3306 = vld [vmem:[%s984] sm:$0xf]
        %v3307 = vld [vmem:[%s984 + $0x4] sm:$0xf]
        %v3308 = vld [vmem:[%s984 + $0x8] sm:$0xf]
        %v3309 = vld [vmem:[%s984 + $0xc] sm:$0xf]
        %v3310 = vld [vmem:[%s984 + $0x10] sm:$0xf]
        %v3311 = vld [vmem:[%s984 + $0x14] sm:$0xf]
        %v3312 = vld [vmem:[%s984 + $0x18] sm:$0xf]
        %v3313 = vld [vmem:[%s984 + $0x1c] sm:$0xf]
        %v3314 = vld [vmem:[%s984 + $0x20] sm:$0xf]
        %v3315 = vld [vmem:[%s984 + $0x24] sm:$0xf]
        %v3316 = vld [vmem:[%s984 + $0x28] sm:$0xf]
        %v3317 = vld [vmem:[%s984 + $0x2c] sm:$0xf]
        %v3318 = vld [vmem:[%s984 + $0x30] sm:$0xf]
        %v3319 = vld [vmem:[%s984 + $0x34] sm:$0xf]
        %v3320 = vld [vmem:[%s984 + $0x38] sm:$0xf]
        %v3321 = vld [vmem:[%s984 + $0x3c] sm:$0xf]
        %v3322 = vld [vmem:[%s984 + $0x40] sm:$0xf]
        %v3323 = vld [vmem:[%s984 + $0x44] sm:$0xf]
        %v3324 = vld [vmem:[%s984 + $0x48] sm:$0xf]
        %v3325 = vld [vmem:[%s984 + $0x4c] sm:$0xf]
        %v3326 = vld [vmem:[%s984 + $0x50] sm:$0xf]
        %v3327 = vld [vmem:[%s984 + $0x54] sm:$0xf]
        %v3328 = vld [vmem:[%s984 + $0x58] sm:$0xf]
        %v3329 = vld [vmem:[%s984 + $0x5c] sm:$0xf]
        %v3330 = vld [vmem:[%s984 + $0x60] sm:$0xf]
        %v3331 = vld [vmem:[%s984 + $0x64] sm:$0xf]
        %v3332 = vld [vmem:[%s984 + $0x68] sm:$0xf]
        %v3333 = vld [vmem:[%s984 + $0x6c] sm:$0xf]
        %v3334 = vld [vmem:[%s984 + $0x70] sm:$0xf]
        %v3335 = vld [vmem:[%s984 + $0x74] sm:$0xf]
        %v3336 = vld [vmem:[%s984 + $0x78] sm:$0xf]
        %v3337 = vld [vmem:[%s984 + $0x7c] sm:$0xf]
        %v3338 = vld [vmem:[%s984 + $0x80] sm:$0xf]
        %v3339 = vld [vmem:[%s984 + $0x84] sm:$0xf]
        %v3340 = vld [vmem:[%s984 + $0x88] sm:$0xf]
        %v3341 = vld [vmem:[%s984 + $0x8c] sm:$0xf]
        %v3342 = vld [vmem:[%s984 + $0x90] sm:$0xf]
        %v3343 = vld [vmem:[%s984 + $0x94] sm:$0xf]
        %v3344 = vld [vmem:[%s984 + $0x98] sm:$0xf]
        %v3345 = vld [vmem:[%s984 + $0x9c] sm:$0xf]
        %v3346 = vld [vmem:[%s984 + $0xa0] sm:$0xf]
        %v3347 = vld [vmem:[%s984 + $0xa4] sm:$0xf]
        %v3348 = vld [vmem:[%s984 + $0xa8] sm:$0xf]
        %v3349 = vld [vmem:[%s984 + $0xac] sm:$0xf]
        %v3350 = vld [vmem:[%s984 + $0xb0] sm:$0xf]
        %v3351 = vld [vmem:[%s984 + $0xb4] sm:$0xf]
        %v3352 = vld [vmem:[%s984 + $0xb8] sm:$0xf]
        %v3353 = vld [vmem:[%s984 + $0xbc] sm:$0xf]
        %v3354 = vld [vmem:[%s984 + $0xc0] sm:$0xf]
        %v3355 = vld [vmem:[%s984 + $0xc4] sm:$0xf]
        %v3356 = vld [vmem:[%s984 + $0xc8] sm:$0xf]
        %v3357 = vld [vmem:[%s984 + $0xcc] sm:$0xf]
        %v3358 = vld [vmem:[%s984 + $0xd0] sm:$0xf]
        %v3359 = vld [vmem:[%s984 + $0xd4] sm:$0xf]
        %v3360 = vld [vmem:[%s984 + $0xd8] sm:$0xf]
        %v3361 = vld [vmem:[%s984 + $0xdc] sm:$0xf]
        %v3362 = vld [vmem:[%s984 + $0xe0] sm:$0xf]
        %v3363 = vld [vmem:[%s984 + $0xe4] sm:$0xf]
        %v3364 = vld [vmem:[%s984 + $0xe8] sm:$0xf]
        %v3365 = vld [vmem:[%s984 + $0xec] sm:$0xf]
        %v3366 = vld [vmem:[%s984 + $0xf0] sm:$0xf]
        %v3367 = vld [vmem:[%s984 + $0xf4] sm:$0xf]
        %v3368 = vld [vmem:[%s984 + $0xf8] sm:$0xf]
        %v3369 = vld [vmem:[%s984 + $0xfc] sm:$0xf]
        %v3370 = vld [vmem:[%s984 + $0x100] sm:$0xf]
        %v3371 = vld [vmem:[%s984 + $0x104] sm:$0xf]
        %v3372 = vld [vmem:[%s984 + $0x108] sm:$0xf]
        %v3373 = vld [vmem:[%s984 + $0x10c] sm:$0xf]
        %v3374 = vld [vmem:[%s984 + $0x110] sm:$0xf]
        %v3375 = vld [vmem:[%s984 + $0x114] sm:$0xf]
        %v3376 = vld [vmem:[%s984 + $0x118] sm:$0xf]
        %v3377 = vld [vmem:[%s984 + $0x11c] sm:$0xf]
        %v3378 = vld [vmem:[%s984 + $0x120] sm:$0xf]
        %v3379 = vld [vmem:[%s984 + $0x124] sm:$0xf]
        %v3380 = vld [vmem:[%s984 + $0x128] sm:$0xf]
        %v3381 = vld [vmem:[%s984 + $0x12c] sm:$0xf]
        %v3382 = vld [vmem:[%s984 + $0x130] sm:$0xf]
        %v3383 = vld [vmem:[%s984 + $0x134] sm:$0xf]
        %v3384 = vld [vmem:[%s984 + $0x138] sm:$0xf]
        %v3385 = vld [vmem:[%s984 + $0x13c] sm:$0xf]
        %v3386 = vld [vmem:[%s984 + $0x140] sm:$0xf]
        %v3387 = vld [vmem:[%s984 + $0x144] sm:$0xf]
        %v3388 = vld [vmem:[%s984 + $0x148] sm:$0xf]
        %v3389 = vld [vmem:[%s984 + $0x14c] sm:$0xf]
        %v3390 = vld [vmem:[%s984 + $0x150] sm:$0xf]
        %v3391 = vld [vmem:[%s984 + $0x154] sm:$0xf]
        %v3392 = vld [vmem:[%s984 + $0x158] sm:$0xf]
        %v3393 = vld [vmem:[%s984 + $0x15c] sm:$0xf]
        %v3394 = vld [vmem:[%s984 + $0x160] sm:$0xf]
        %v3395 = vld [vmem:[%s984 + $0x164] sm:$0xf]
        %v3396 = vld [vmem:[%s984 + $0x168] sm:$0xf]
        %v3397 = vld [vmem:[%s984 + $0x16c] sm:$0xf]
        %v3398 = vld [vmem:[%s984 + $0x170] sm:$0xf]
        %v3399 = vld [vmem:[%s984 + $0x174] sm:$0xf]
        %v3400 = vld [vmem:[%s984 + $0x178] sm:$0xf]
        %v3401 = vld [vmem:[%s984 + $0x17c] sm:$0xf]
        %v3402 = vld [vmem:[%s984 + $0x180] sm:$0xf]
        %v3403 = vld [vmem:[%s984 + $0x184] sm:$0xf]
        %v3404 = vld [vmem:[%s984 + $0x188] sm:$0xf]
        %v3405 = vld [vmem:[%s984 + $0x18c] sm:$0xf]
        %v3406 = vld [vmem:[%s984 + $0x190] sm:$0xf]
        %v3407 = vld [vmem:[%s984 + $0x194] sm:$0xf]
        %v3408 = vld [vmem:[%s984 + $0x198] sm:$0xf]
        %v3409 = vld [vmem:[%s984 + $0x19c] sm:$0xf]
        %v3410 = vld [vmem:[%s984 + $0x1a0] sm:$0xf]
        %v3411 = vld [vmem:[%s984 + $0x1a4] sm:$0xf]
        %v3412 = vld [vmem:[%s984 + $0x1a8] sm:$0xf]
        %v3413 = vld [vmem:[%s984 + $0x1ac] sm:$0xf]
        %v3414 = vld [vmem:[%s984 + $0x1b0] sm:$0xf]
        %v3415 = vld [vmem:[%s984 + $0x1b4] sm:$0xf]
        %v3416 = vld [vmem:[%s984 + $0x1b8] sm:$0xf]
        %v3417 = vld [vmem:[%s984 + $0x1bc] sm:$0xf]
        %v3418 = vld [vmem:[%s984 + $0x1c0] sm:$0xf]
        %v3419 = vld [vmem:[%s984 + $0x1c4] sm:$0xf]
        %v3420 = vld [vmem:[%s984 + $0x1c8] sm:$0xf]
        %v3421 = vld [vmem:[%s984 + $0x1cc] sm:$0xf]
        %v3422 = vld [vmem:[%s984 + $0x1d0] sm:$0xf]
        %v3423 = vld [vmem:[%s984 + $0x1d4] sm:$0xf]
        %v3424 = vld [vmem:[%s984 + $0x1d8] sm:$0xf]
        %v3425 = vld [vmem:[%s984 + $0x1dc] sm:$0xf]
        %v3426 = vld [vmem:[%s984 + $0x1e0] sm:$0xf]
        %v3427 = vld [vmem:[%s984 + $0x1e4] sm:$0xf]
        %v3428 = vld [vmem:[%s984 + $0x1e8] sm:$0xf]
        %v3429 = vld [vmem:[%s984 + $0x1ec] sm:$0xf]
        %v3430 = vld [vmem:[%s984 + $0x1f0] sm:$0xf]
        %v3431 = vld [vmem:[%s984 + $0x1f4] sm:$0xf]
        %v3432 = vld [vmem:[%s984 + $0x1f8] sm:$0xf]
        %v3433 = vld [vmem:[%s984 + $0x1fc] sm:$0xf]
        %v3434 = vld [vmem:[%s984 + $0x200] sm:$0xf]
        %v3435 = vld [vmem:[%s984 + $0x204] sm:$0xf]
        %v3436 = vld [vmem:[%s984 + $0x208] sm:$0xf]
        %v3437 = vld [vmem:[%s984 + $0x20c] sm:$0xf]
        %v3438 = vld [vmem:[%s984 + $0x210] sm:$0xf]
        %v3439 = vld [vmem:[%s984 + $0x214] sm:$0xf]
        %v3440 = vld [vmem:[%s984 + $0x218] sm:$0xf]
        %v3441 = vld [vmem:[%s984 + $0x21c] sm:$0xf]
        %v3442 = vld [vmem:[%s984 + $0x220] sm:$0xf]
        %v3443 = vld [vmem:[%s984 + $0x224] sm:$0xf]
        %v3444 = vld [vmem:[%s984 + $0x228] sm:$0xf]
        %v3445 = vld [vmem:[%s984 + $0x22c] sm:$0xf]
        %v3446 = vld [vmem:[%s984 + $0x230] sm:$0xf]
        %v3447 = vld [vmem:[%s984 + $0x234] sm:$0xf]
        %v3448 = vld [vmem:[%s984 + $0x238] sm:$0xf]
        %v3449 = vld [vmem:[%s984 + $0x23c] sm:$0xf]
        %v3450 = vld [vmem:[%s984 + $0x240] sm:$0xf]
        %v3451 = vld [vmem:[%s984 + $0x244] sm:$0xf]
        %v3452 = vld [vmem:[%s984 + $0x248] sm:$0xf]
        %v3453 = vld [vmem:[%s984 + $0x24c] sm:$0xf]
        %v3454 = vld [vmem:[%s984 + $0x250] sm:$0xf]
        %v3455 = vld [vmem:[%s984 + $0x254] sm:$0xf]
        %v3456 = vld [vmem:[%s984 + $0x258] sm:$0xf]
        %v3457 = vld [vmem:[%s984 + $0x25c] sm:$0xf]
        %v3458 = vld [vmem:[%s984 + $0x260] sm:$0xf]
        %v3459 = vld [vmem:[%s984 + $0x264] sm:$0xf]
        %v3460 = vld [vmem:[%s984 + $0x268] sm:$0xf]
        %v3461 = vld [vmem:[%s984 + $0x26c] sm:$0xf]
        %v3462 = vld [vmem:[%s984 + $0x270] sm:$0xf]
        %v3463 = vld [vmem:[%s984 + $0x274] sm:$0xf]
        %v3464 = vld [vmem:[%s984 + $0x278] sm:$0xf]
        %v3465 = vld [vmem:[%s984 + $0x27c] sm:$0xf]
        %v3466 = vld [vmem:[%s984 + $0x280] sm:$0xf]
        %v3467 = vld [vmem:[%s984 + $0x284] sm:$0xf]
        %v3468 = vld [vmem:[%s984 + $0x288] sm:$0xf]
        %v3469 = vld [vmem:[%s984 + $0x28c] sm:$0xf]
        %v3470 = vld [vmem:[%s984 + $0x290] sm:$0xf]
        %v3471 = vld [vmem:[%s984 + $0x294] sm:$0xf]
        %v3472 = vld [vmem:[%s984 + $0x298] sm:$0xf]
        %v3473 = vld [vmem:[%s984 + $0x29c] sm:$0xf]
        %v3474 = vld [vmem:[%s984 + $0x2a0] sm:$0xf]
        %v3475 = vld [vmem:[%s984 + $0x2a4] sm:$0xf]
        %v3476 = vld [vmem:[%s984 + $0x2a8] sm:$0xf]
        %v3477 = vld [vmem:[%s984 + $0x2ac] sm:$0xf]
        %v3478 = vld [vmem:[%s984 + $0x2b0] sm:$0xf]
        %v3479 = vld [vmem:[%s984 + $0x2b4] sm:$0xf]
        %v3480 = vld [vmem:[%s984 + $0x2b8] sm:$0xf]
        %v3481 = vld [vmem:[%s984 + $0x2bc] sm:$0xf]
        %v3482 = vld [vmem:[%s984 + $0x2c0] sm:$0xf]
        %v3483 = vld [vmem:[%s984 + $0x2c4] sm:$0xf]
        %v3484 = vld [vmem:[%s984 + $0x2c8] sm:$0xf]
        %v3485 = vld [vmem:[%s984 + $0x2cc] sm:$0xf]
        %v3486 = vld [vmem:[%s984 + $0x2d0] sm:$0xf]
        %v3487 = vld [vmem:[%s984 + $0x2d4] sm:$0xf]
        %v3488 = vld [vmem:[%s984 + $0x2d8] sm:$0xf]
        %v3489 = vld [vmem:[%s984 + $0x2dc] sm:$0xf]
        %v3490 = vld [vmem:[%s984 + $0x2e0] sm:$0xf]
        %v3491 = vld [vmem:[%s984 + $0x2e4] sm:$0xf]
        %v3492 = vld [vmem:[%s984 + $0x2e8] sm:$0xf]
        %v3493 = vld [vmem:[%s984 + $0x2ec] sm:$0xf]
        %v3494 = vld [vmem:[%s984 + $0x2f0] sm:$0xf]
        %v3495 = vld [vmem:[%s984 + $0x2f4] sm:$0xf]
        %v3496 = vld [vmem:[%s984 + $0x2f8] sm:$0xf]
        %v3497 = vld [vmem:[%s984 + $0x2fc] sm:$0xf]
        %v3498 = vld [vmem:[%s984 + $0x300] sm:$0xf]
        %v3499 = vld [vmem:[%s984 + $0x304] sm:$0xf]
        %v3500 = vld [vmem:[%s984 + $0x308] sm:$0xf]
        %v3501 = vld [vmem:[%s984 + $0x30c] sm:$0xf]
        %v3502 = vld [vmem:[%s984 + $0x310] sm:$0xf]
        %v3503 = vld [vmem:[%s984 + $0x314] sm:$0xf]
        %v3504 = vld [vmem:[%s984 + $0x318] sm:$0xf]
        %v3505 = vld [vmem:[%s984 + $0x31c] sm:$0xf]
        %v3506 = vld [vmem:[%s984 + $0x320] sm:$0xf]
        %v3507 = vld [vmem:[%s984 + $0x324] sm:$0xf]
        %v3508 = vld [vmem:[%s984 + $0x328] sm:$0xf]
        %v3509 = vld [vmem:[%s984 + $0x32c] sm:$0xf]
        %v3510 = vld [vmem:[%s984 + $0x330] sm:$0xf]
        %v3511 = vld [vmem:[%s984 + $0x334] sm:$0xf]
        %v3512 = vld [vmem:[%s984 + $0x338] sm:$0xf]
        %v3513 = vld [vmem:[%s984 + $0x33c] sm:$0xf]
        %v3514 = vld [vmem:[%s984 + $0x340] sm:$0xf]
        %v3515 = vld [vmem:[%s984 + $0x344] sm:$0xf]
        %v3516 = vld [vmem:[%s984 + $0x348] sm:$0xf]
        %v3517 = vld [vmem:[%s984 + $0x34c] sm:$0xf]
        %v3518 = vld [vmem:[%s984 + $0x350] sm:$0xf]
        %v3519 = vld [vmem:[%s984 + $0x354] sm:$0xf]
        %v3520 = vld [vmem:[%s984 + $0x358] sm:$0xf]
        %v3521 = vld [vmem:[%s984 + $0x35c] sm:$0xf]
        %v3522 = vld [vmem:[%s984 + $0x360] sm:$0xf]
        %v3523 = vld [vmem:[%s984 + $0x364] sm:$0xf]
        %v3524 = vld [vmem:[%s984 + $0x368] sm:$0xf]
        %v3525 = vld [vmem:[%s984 + $0x36c] sm:$0xf]
        %v3526 = vld [vmem:[%s984 + $0x370] sm:$0xf]
        %v3527 = vld [vmem:[%s984 + $0x374] sm:$0xf]
        %v3528 = vld [vmem:[%s984 + $0x378] sm:$0xf]
        %v3529 = vld [vmem:[%s984 + $0x37c] sm:$0xf]
        %v3530 = vld [vmem:[%s984 + $0x380] sm:$0xf]
        %v3531 = vld [vmem:[%s984 + $0x384] sm:$0xf]
        %v3532 = vld [vmem:[%s984 + $0x388] sm:$0xf]
        %v3533 = vld [vmem:[%s984 + $0x38c] sm:$0xf]
        %v3534 = vld [vmem:[%s984 + $0x390] sm:$0xf]
        %v3535 = vld [vmem:[%s984 + $0x394] sm:$0xf]
        %v3536 = vld [vmem:[%s984 + $0x398] sm:$0xf]
        %v3537 = vld [vmem:[%s984 + $0x39c] sm:$0xf]
        %v3538 = vld [vmem:[%s984 + $0x3a0] sm:$0xf]
        %v3539 = vld [vmem:[%s984 + $0x3a4] sm:$0xf]
        %v3540 = vld [vmem:[%s984 + $0x3a8] sm:$0xf]
        %v3541 = vld [vmem:[%s984 + $0x3ac] sm:$0xf]
        %v3542 = vld [vmem:[%s984 + $0x3b0] sm:$0xf]
        %v3543 = vld [vmem:[%s984 + $0x3b4] sm:$0xf]
        %v3544 = vld [vmem:[%s984 + $0x3b8] sm:$0xf]
        %v3545 = vld [vmem:[%s984 + $0x3bc] sm:$0xf]
        %v3546 = vld [vmem:[%s984 + $0x3c0] sm:$0xf]
        %v3547 = vld [vmem:[%s984 + $0x3c4] sm:$0xf]
        %v3548 = vld [vmem:[%s984 + $0x3c8] sm:$0xf]
        %v3549 = vld [vmem:[%s984 + $0x3cc] sm:$0xf]
        %v3550 = vld [vmem:[%s984 + $0x3d0] sm:$0xf]
        %v3551 = vld [vmem:[%s984 + $0x3d4] sm:$0xf]
        %v3552 = vld [vmem:[%s984 + $0x3d8] sm:$0xf]
        %v3553 = vld [vmem:[%s984 + $0x3dc] sm:$0xf]
        %v3554 = vld [vmem:[%s984 + $0x3e0] sm:$0xf]
        %v3555 = vld [vmem:[%s984 + $0x3e4] sm:$0xf]
        %v3556 = vld [vmem:[%s984 + $0x3e8] sm:$0xf]
        %v3557 = vld [vmem:[%s984 + $0x3ec] sm:$0xf]
        %v3558 = vld [vmem:[%s984 + $0x3f0] sm:$0xf]
        %v3559 = vld [vmem:[%s984 + $0x3f4] sm:$0xf]
        %v3560 = vld [vmem:[%s984 + $0x3f8] sm:$0xf]
        %v3561 = vld [vmem:[%s984 + $0x3fc] sm:$0xf]
        %v3562 = vpack.c.bf16 %v3290, %v3290
        %v3563 = vpack.c.bf16 %v3291, %v3291
        %v3564 = vpack.c.bf16 %v3292, %v3292
        %v3565 = vpack.c.bf16 %v3293, %v3293
        %v3566 = vpack.c.bf16 %v3294, %v3294
        %v3567 = vpack.c.bf16 %v3295, %v3295
        %v3568 = vpack.c.bf16 %v3296, %v3296
        %v3569 = vpack.c.bf16 %v3297, %v3297
        %v3570 = vpack.c.bf16 %v3298, %v3298
        %v3571 = vpack.c.bf16 %v3299, %v3299
        %v3572 = vpack.c.bf16 %v3300, %v3300
        %v3573 = vpack.c.bf16 %v3301, %v3301
        %v3574 = vpack.c.bf16 %v3302, %v3302
        %v3575 = vpack.c.bf16 %v3303, %v3303
        %v3576 = vpack.c.bf16 %v3304, %v3304
        %v3577 = vpack.c.bf16 %v3305, %v3305
        %v3578 = vld [vmem:[%s992] sm:$0x1]
        %v3580 = vlaneseq
        %v3581 = vshrl.u32 %v3580, 7
        %v3582 = vsub.s32 0, %v3581
        %v3583 = vrot.slane %v3578, %v3582
        %v3841 = vunpack.c.l.b16 %v3306
        %v3842 = vunpack.c.l.b16 %v3307
        %v3843 = vunpack.c.l.b16 %v3308
        %v3844 = vunpack.c.l.b16 %v3309
        %v3845 = vunpack.c.l.b16 %v3310
        %v3846 = vunpack.c.l.b16 %v3311
        %v3847 = vunpack.c.l.b16 %v3312
        %v3848 = vunpack.c.l.b16 %v3313
        %v3849 = vunpack.c.l.b16 %v3314
        %v3850 = vunpack.c.l.b16 %v3315
        %v3851 = vunpack.c.l.b16 %v3316
        %v3852 = vunpack.c.l.b16 %v3317
        %v3853 = vunpack.c.l.b16 %v3318
        %v3854 = vunpack.c.l.b16 %v3319
        %v3855 = vunpack.c.l.b16 %v3320
        %v3856 = vunpack.c.l.b16 %v3321
        %v3857 = vunpack.c.l.b16 %v3322
        %v3858 = vunpack.c.l.b16 %v3323
        %v3859 = vunpack.c.l.b16 %v3324
        %v3860 = vunpack.c.l.b16 %v3325
        %v3861 = vunpack.c.l.b16 %v3326
        %v3862 = vunpack.c.l.b16 %v3327
        %v3863 = vunpack.c.l.b16 %v3328
        %v3864 = vunpack.c.l.b16 %v3329
        %v3865 = vunpack.c.l.b16 %v3330
        %v3866 = vunpack.c.l.b16 %v3331
        %v3867 = vunpack.c.l.b16 %v3332
        %v3868 = vunpack.c.l.b16 %v3333
        %v3869 = vunpack.c.l.b16 %v3334
        %v3870 = vunpack.c.l.b16 %v3335
        %v3871 = vunpack.c.l.b16 %v3336
        %v3872 = vunpack.c.l.b16 %v3337
        %v3873 = vunpack.c.l.b16 %v3338
        %v3874 = vunpack.c.l.b16 %v3339
        %v3875 = vunpack.c.l.b16 %v3340
        %v3876 = vunpack.c.l.b16 %v3341
        %v3877 = vunpack.c.l.b16 %v3342
        %v3878 = vunpack.c.l.b16 %v3343
        %v3879 = vunpack.c.l.b16 %v3344
        %v3880 = vunpack.c.l.b16 %v3345
        %v3881 = vunpack.c.l.b16 %v3346
        %v3882 = vunpack.c.l.b16 %v3347
        %v3883 = vunpack.c.l.b16 %v3348
        %v3884 = vunpack.c.l.b16 %v3349
        %v3885 = vunpack.c.l.b16 %v3350
        %v3886 = vunpack.c.l.b16 %v3351
        %v3887 = vunpack.c.l.b16 %v3352
        %v3888 = vunpack.c.l.b16 %v3353
        %v3889 = vunpack.c.l.b16 %v3354
        %v3890 = vunpack.c.l.b16 %v3355
        %v3891 = vunpack.c.l.b16 %v3356
        %v3892 = vunpack.c.l.b16 %v3357
        %v3893 = vunpack.c.l.b16 %v3358
        %v3894 = vunpack.c.l.b16 %v3359
        %v3895 = vunpack.c.l.b16 %v3360
        %v3896 = vunpack.c.l.b16 %v3361
        %v3897 = vunpack.c.l.b16 %v3362
        %v3898 = vunpack.c.l.b16 %v3363
        %v3899 = vunpack.c.l.b16 %v3364
        %v3900 = vunpack.c.l.b16 %v3365
        %v3901 = vunpack.c.l.b16 %v3366
        %v3902 = vunpack.c.l.b16 %v3367
        %v3903 = vunpack.c.l.b16 %v3368
        %v3904 = vunpack.c.l.b16 %v3369
        %v3905 = vunpack.c.l.b16 %v3370
        %v3906 = vunpack.c.l.b16 %v3371
        %v3907 = vunpack.c.l.b16 %v3372
        %v3908 = vunpack.c.l.b16 %v3373
        %v3909 = vunpack.c.l.b16 %v3374
        %v3910 = vunpack.c.l.b16 %v3375
        %v3911 = vunpack.c.l.b16 %v3376
        %v3912 = vunpack.c.l.b16 %v3377
        %v3913 = vunpack.c.l.b16 %v3378
        %v3914 = vunpack.c.l.b16 %v3379
        %v3915 = vunpack.c.l.b16 %v3380
        %v3916 = vunpack.c.l.b16 %v3381
        %v3917 = vunpack.c.l.b16 %v3382
        %v3918 = vunpack.c.l.b16 %v3383
        %v3919 = vunpack.c.l.b16 %v3384
        %v3920 = vunpack.c.l.b16 %v3385
        %v3921 = vunpack.c.l.b16 %v3386
        %v3922 = vunpack.c.l.b16 %v3387
        %v3923 = vunpack.c.l.b16 %v3388
        %v3924 = vunpack.c.l.b16 %v3389
        %v3925 = vunpack.c.l.b16 %v3390
        %v3926 = vunpack.c.l.b16 %v3391
        %v3927 = vunpack.c.l.b16 %v3392
        %v3928 = vunpack.c.l.b16 %v3393
        %v3929 = vunpack.c.l.b16 %v3394
        %v3930 = vunpack.c.l.b16 %v3395
        %v3931 = vunpack.c.l.b16 %v3396
        %v3932 = vunpack.c.l.b16 %v3397
        %v3933 = vunpack.c.l.b16 %v3398
        %v3934 = vunpack.c.l.b16 %v3399
        %v3935 = vunpack.c.l.b16 %v3400
        %v3936 = vunpack.c.l.b16 %v3401
        %v3937 = vunpack.c.l.b16 %v3402
        %v3938 = vunpack.c.l.b16 %v3403
        %v3939 = vunpack.c.l.b16 %v3404
        %v3940 = vunpack.c.l.b16 %v3405
        %v3941 = vunpack.c.l.b16 %v3406
        %v3942 = vunpack.c.l.b16 %v3407
        %v3943 = vunpack.c.l.b16 %v3408
        %v3944 = vunpack.c.l.b16 %v3409
        %v3945 = vunpack.c.l.b16 %v3410
        %v3946 = vunpack.c.l.b16 %v3411
        %v3947 = vunpack.c.l.b16 %v3412
        %v3948 = vunpack.c.l.b16 %v3413
        %v3949 = vunpack.c.l.b16 %v3414
        %v3950 = vunpack.c.l.b16 %v3415
        %v3951 = vunpack.c.l.b16 %v3416
        %v3952 = vunpack.c.l.b16 %v3417
        %v3953 = vunpack.c.l.b16 %v3418
        %v3954 = vunpack.c.l.b16 %v3419
        %v3955 = vunpack.c.l.b16 %v3420
        %v3956 = vunpack.c.l.b16 %v3421
        %v3957 = vunpack.c.l.b16 %v3422
        %v3958 = vunpack.c.l.b16 %v3423
        %v3959 = vunpack.c.l.b16 %v3424
        %v3960 = vunpack.c.l.b16 %v3425
        %v3961 = vunpack.c.l.b16 %v3426
        %v3962 = vunpack.c.l.b16 %v3427
        %v3963 = vunpack.c.l.b16 %v3428
        %v3964 = vunpack.c.l.b16 %v3429
        %v3965 = vunpack.c.l.b16 %v3430
        %v3966 = vunpack.c.l.b16 %v3431
        %v3967 = vunpack.c.l.b16 %v3432
        %v3968 = vunpack.c.l.b16 %v3433
        %v3969 = vunpack.c.l.b16 %v3434
        %v3970 = vunpack.c.l.b16 %v3435
        %v3971 = vunpack.c.l.b16 %v3436
        %v3972 = vunpack.c.l.b16 %v3437
        %v3973 = vunpack.c.l.b16 %v3438
        %v3974 = vunpack.c.l.b16 %v3439
        %v3975 = vunpack.c.l.b16 %v3440
        %v3976 = vunpack.c.l.b16 %v3441
        %v3977 = vunpack.c.l.b16 %v3442
        %v3978 = vunpack.c.l.b16 %v3443
        %v3979 = vunpack.c.l.b16 %v3444
        %v3980 = vunpack.c.l.b16 %v3445
        %v3981 = vunpack.c.l.b16 %v3446
        %v3982 = vunpack.c.l.b16 %v3447
        %v3983 = vunpack.c.l.b16 %v3448
        %v3984 = vunpack.c.l.b16 %v3449
        %v3985 = vunpack.c.l.b16 %v3450
        %v3986 = vunpack.c.l.b16 %v3451
        %v3987 = vunpack.c.l.b16 %v3452
        %v3988 = vunpack.c.l.b16 %v3453
        %v3989 = vunpack.c.l.b16 %v3454
        %v3990 = vunpack.c.l.b16 %v3455
        %v3991 = vunpack.c.l.b16 %v3456
        %v3992 = vunpack.c.l.b16 %v3457
        %v3993 = vunpack.c.l.b16 %v3458
        %v3994 = vunpack.c.l.b16 %v3459
        %v3995 = vunpack.c.l.b16 %v3460
        %v3996 = vunpack.c.l.b16 %v3461
        %v3997 = vunpack.c.l.b16 %v3462
        %v3998 = vunpack.c.l.b16 %v3463
        %v3999 = vunpack.c.l.b16 %v3464
        %v4000 = vunpack.c.l.b16 %v3465
        %v4001 = vunpack.c.l.b16 %v3466
        %v4002 = vunpack.c.l.b16 %v3467
        %v4003 = vunpack.c.l.b16 %v3468
        %v4004 = vunpack.c.l.b16 %v3469
        %v4005 = vunpack.c.l.b16 %v3470
        %v4006 = vunpack.c.l.b16 %v3471
        %v4007 = vunpack.c.l.b16 %v3472
        %v4008 = vunpack.c.l.b16 %v3473
        %v4009 = vunpack.c.l.b16 %v3474
        %v4010 = vunpack.c.l.b16 %v3475
        %v4011 = vunpack.c.l.b16 %v3476
        %v4012 = vunpack.c.l.b16 %v3477
        %v4013 = vunpack.c.l.b16 %v3478
        %v4014 = vunpack.c.l.b16 %v3479
        %v4015 = vunpack.c.l.b16 %v3480
        %v4016 = vunpack.c.l.b16 %v3481
        %v4017 = vunpack.c.l.b16 %v3482
        %v4018 = vunpack.c.l.b16 %v3483
        %v4019 = vunpack.c.l.b16 %v3484
        %v4020 = vunpack.c.l.b16 %v3485
        %v4021 = vunpack.c.l.b16 %v3486
        %v4022 = vunpack.c.l.b16 %v3487
        %v4023 = vunpack.c.l.b16 %v3488
        %v4024 = vunpack.c.l.b16 %v3489
        %v4025 = vunpack.c.l.b16 %v3490
        %v4026 = vunpack.c.l.b16 %v3491
        %v4027 = vunpack.c.l.b16 %v3492
        %v4028 = vunpack.c.l.b16 %v3493
        %v4029 = vunpack.c.l.b16 %v3494
        %v4030 = vunpack.c.l.b16 %v3495
        %v4031 = vunpack.c.l.b16 %v3496
        %v4032 = vunpack.c.l.b16 %v3497
        %v4033 = vunpack.c.l.b16 %v3498
        %v4034 = vunpack.c.l.b16 %v3499
        %v4035 = vunpack.c.l.b16 %v3500
        %v4036 = vunpack.c.l.b16 %v3501
        %v4037 = vunpack.c.l.b16 %v3502
        %v4038 = vunpack.c.l.b16 %v3503
        %v4039 = vunpack.c.l.b16 %v3504
        %v4040 = vunpack.c.l.b16 %v3505
        %v4041 = vunpack.c.l.b16 %v3506
        %v4042 = vunpack.c.l.b16 %v3507
        %v4043 = vunpack.c.l.b16 %v3508
        %v4044 = vunpack.c.l.b16 %v3509
        %v4045 = vunpack.c.l.b16 %v3510
        %v4046 = vunpack.c.l.b16 %v3511
        %v4047 = vunpack.c.l.b16 %v3512
        %v4048 = vunpack.c.l.b16 %v3513
        %v4049 = vunpack.c.l.b16 %v3514
        %v4050 = vunpack.c.l.b16 %v3515
        %v4051 = vunpack.c.l.b16 %v3516
        %v4052 = vunpack.c.l.b16 %v3517
        %v4053 = vunpack.c.l.b16 %v3518
        %v4054 = vunpack.c.l.b16 %v3519
        %v4055 = vunpack.c.l.b16 %v3520
        %v4056 = vunpack.c.l.b16 %v3521
        %v4057 = vunpack.c.l.b16 %v3522
        %v4058 = vunpack.c.l.b16 %v3523
        %v4059 = vunpack.c.l.b16 %v3524
        %v4060 = vunpack.c.l.b16 %v3525
        %v4061 = vunpack.c.l.b16 %v3526
        %v4062 = vunpack.c.l.b16 %v3527
        %v4063 = vunpack.c.l.b16 %v3528
        %v4064 = vunpack.c.l.b16 %v3529
        %v4065 = vunpack.c.l.b16 %v3530
        %v4066 = vunpack.c.l.b16 %v3531
        %v4067 = vunpack.c.l.b16 %v3532
        %v4068 = vunpack.c.l.b16 %v3533
        %v4069 = vunpack.c.l.b16 %v3534
        %v4070 = vunpack.c.l.b16 %v3535
        %v4071 = vunpack.c.l.b16 %v3536
        %v4072 = vunpack.c.l.b16 %v3537
        %v4073 = vunpack.c.l.b16 %v3538
        %v4074 = vunpack.c.l.b16 %v3539
        %v4075 = vunpack.c.l.b16 %v3540
        %v4076 = vunpack.c.l.b16 %v3541
        %v4077 = vunpack.c.l.b16 %v3542
        %v4078 = vunpack.c.l.b16 %v3543
        %v4079 = vunpack.c.l.b16 %v3544
        %v4080 = vunpack.c.l.b16 %v3545
        %v4081 = vunpack.c.l.b16 %v3546
        %v4082 = vunpack.c.l.b16 %v3547
        %v4083 = vunpack.c.l.b16 %v3548
        %v4084 = vunpack.c.l.b16 %v3549
        %v4085 = vunpack.c.l.b16 %v3550
        %v4086 = vunpack.c.l.b16 %v3551
        %v4087 = vunpack.c.l.b16 %v3552
        %v4088 = vunpack.c.l.b16 %v3553
        %v4089 = vunpack.c.l.b16 %v3554
        %v4090 = vunpack.c.l.b16 %v3555
        %v4091 = vunpack.c.l.b16 %v3556
        %v4092 = vunpack.c.l.b16 %v3557
        %v4093 = vunpack.c.l.b16 %v3558
        %v4094 = vunpack.c.l.b16 %v3559
        %v4095 = vunpack.c.l.b16 %v3560
        %v4096 = vunpack.c.l.b16 %v3561
        %v4097 = vpack.c.b16 %v3842, %v3841
        %v4098 = vpack.c.b16 %v3844, %v3843
        %v4099 = vpack.c.b16 %v3846, %v3845
        %v4100 = vpack.c.b16 %v3848, %v3847
        %v4101 = vpack.c.b16 %v3850, %v3849
        %v4102 = vpack.c.b16 %v3852, %v3851
        %v4103 = vpack.c.b16 %v3854, %v3853
        %v4104 = vpack.c.b16 %v3856, %v3855
        %v4105 = vpack.c.b16 %v3858, %v3857
        %v4106 = vpack.c.b16 %v3860, %v3859
        %v4107 = vpack.c.b16 %v3862, %v3861
        %v4108 = vpack.c.b16 %v3864, %v3863
        %v4109 = vpack.c.b16 %v3866, %v3865
        %v4110 = vpack.c.b16 %v3868, %v3867
        %v4111 = vpack.c.b16 %v3870, %v3869
        %v4112 = vpack.c.b16 %v3872, %v3871
        %v4113 = vpack.c.b16 %v3874, %v3873
        %v4114 = vpack.c.b16 %v3876, %v3875
        %v4115 = vpack.c.b16 %v3878, %v3877
        %v4116 = vpack.c.b16 %v3880, %v3879
        %v4117 = vpack.c.b16 %v3882, %v3881
        %v4118 = vpack.c.b16 %v3884, %v3883
        %v4119 = vpack.c.b16 %v3886, %v3885
        %v4120 = vpack.c.b16 %v3888, %v3887
        %v4121 = vpack.c.b16 %v3890, %v3889
        %v4122 = vpack.c.b16 %v3892, %v3891
        %v4123 = vpack.c.b16 %v3894, %v3893
        %v4124 = vpack.c.b16 %v3896, %v3895
        %v4125 = vpack.c.b16 %v3898, %v3897
        %v4126 = vpack.c.b16 %v3900, %v3899
        %v4127 = vpack.c.b16 %v3902, %v3901
        %v4128 = vpack.c.b16 %v3904, %v3903
        %v4129 = vpack.c.b16 %v3906, %v3905
        %v4130 = vpack.c.b16 %v3908, %v3907
        %v4131 = vpack.c.b16 %v3910, %v3909
        %v4132 = vpack.c.b16 %v3912, %v3911
        %v4133 = vpack.c.b16 %v3914, %v3913
        %v4134 = vpack.c.b16 %v3916, %v3915
        %v4135 = vpack.c.b16 %v3918, %v3917
        %v4136 = vpack.c.b16 %v3920, %v3919
        %v4137 = vpack.c.b16 %v3922, %v3921
        %v4138 = vpack.c.b16 %v3924, %v3923
        %v4139 = vpack.c.b16 %v3926, %v3925
        %v4140 = vpack.c.b16 %v3928, %v3927
        %v4141 = vpack.c.b16 %v3930, %v3929
        %v4142 = vpack.c.b16 %v3932, %v3931
        %v4143 = vpack.c.b16 %v3934, %v3933
        %v4144 = vpack.c.b16 %v3936, %v3935
        %v4145 = vpack.c.b16 %v3938, %v3937
        %v4146 = vpack.c.b16 %v3940, %v3939
        %v4147 = vpack.c.b16 %v3942, %v3941
        %v4148 = vpack.c.b16 %v3944, %v3943
        %v4149 = vpack.c.b16 %v3946, %v3945
        %v4150 = vpack.c.b16 %v3948, %v3947
        %v4151 = vpack.c.b16 %v3950, %v3949
        %v4152 = vpack.c.b16 %v3952, %v3951
        %v4153 = vpack.c.b16 %v3954, %v3953
        %v4154 = vpack.c.b16 %v3956, %v3955
        %v4155 = vpack.c.b16 %v3958, %v3957
        %v4156 = vpack.c.b16 %v3960, %v3959
        %v4157 = vpack.c.b16 %v3962, %v3961
        %v4158 = vpack.c.b16 %v3964, %v3963
        %v4159 = vpack.c.b16 %v3966, %v3965
        %v4160 = vpack.c.b16 %v3968, %v3967
        %v4161 = vpack.c.b16 %v3970, %v3969
        %v4162 = vpack.c.b16 %v3972, %v3971
        %v4163 = vpack.c.b16 %v3974, %v3973
        %v4164 = vpack.c.b16 %v3976, %v3975
        %v4165 = vpack.c.b16 %v3978, %v3977
        %v4166 = vpack.c.b16 %v3980, %v3979
        %v4167 = vpack.c.b16 %v3982, %v3981
        %v4168 = vpack.c.b16 %v3984, %v3983
        %v4169 = vpack.c.b16 %v3986, %v3985
        %v4170 = vpack.c.b16 %v3988, %v3987
        %v4171 = vpack.c.b16 %v3990, %v3989
        %v4172 = vpack.c.b16 %v3992, %v3991
        %v4173 = vpack.c.b16 %v3994, %v3993
        %v4174 = vpack.c.b16 %v3996, %v3995
        %v4175 = vpack.c.b16 %v3998, %v3997
        %v4176 = vpack.c.b16 %v4000, %v3999
        %v4177 = vpack.c.b16 %v4002, %v4001
        %v4178 = vpack.c.b16 %v4004, %v4003
        %v4179 = vpack.c.b16 %v4006, %v4005
        %v4180 = vpack.c.b16 %v4008, %v4007
        %v4181 = vpack.c.b16 %v4010, %v4009
        %v4182 = vpack.c.b16 %v4012, %v4011
        %v4183 = vpack.c.b16 %v4014, %v4013
        %v4184 = vpack.c.b16 %v4016, %v4015
        %v4185 = vpack.c.b16 %v4018, %v4017
        %v4186 = vpack.c.b16 %v4020, %v4019
        %v4187 = vpack.c.b16 %v4022, %v4021
        %v4188 = vpack.c.b16 %v4024, %v4023
        %v4189 = vpack.c.b16 %v4026, %v4025
        %v4190 = vpack.c.b16 %v4028, %v4027
        %v4191 = vpack.c.b16 %v4030, %v4029
        %v4192 = vpack.c.b16 %v4032, %v4031
        %v4193 = vpack.c.b16 %v4034, %v4033
        %v4194 = vpack.c.b16 %v4036, %v4035
        %v4195 = vpack.c.b16 %v4038, %v4037
        %v4196 = vpack.c.b16 %v4040, %v4039
        %v4197 = vpack.c.b16 %v4042, %v4041
        %v4198 = vpack.c.b16 %v4044, %v4043
        %v4199 = vpack.c.b16 %v4046, %v4045
        %v4200 = vpack.c.b16 %v4048, %v4047
        %v4201 = vpack.c.b16 %v4050, %v4049
        %v4202 = vpack.c.b16 %v4052, %v4051
        %v4203 = vpack.c.b16 %v4054, %v4053
        %v4204 = vpack.c.b16 %v4056, %v4055
        %v4205 = vpack.c.b16 %v4058, %v4057
        %v4206 = vpack.c.b16 %v4060, %v4059
        %v4207 = vpack.c.b16 %v4062, %v4061
        %v4208 = vpack.c.b16 %v4064, %v4063
        %v4209 = vpack.c.b16 %v4066, %v4065
        %v4210 = vpack.c.b16 %v4068, %v4067
        %v4211 = vpack.c.b16 %v4070, %v4069
        %v4212 = vpack.c.b16 %v4072, %v4071
        %v4213 = vpack.c.b16 %v4074, %v4073
        %v4214 = vpack.c.b16 %v4076, %v4075
        %v4215 = vpack.c.b16 %v4078, %v4077
        %v4216 = vpack.c.b16 %v4080, %v4079
        %v4217 = vpack.c.b16 %v4082, %v4081
        %v4218 = vpack.c.b16 %v4084, %v4083
        %v4219 = vpack.c.b16 %v4086, %v4085
        %v4220 = vpack.c.b16 %v4088, %v4087
        %v4221 = vpack.c.b16 %v4090, %v4089
        %v4222 = vpack.c.b16 %v4092, %v4091
        %v4223 = vpack.c.b16 %v4094, %v4093
        %v4224 = vpack.c.b16 %v4096, %v4095
        %4353 = vmatprep.subr.bf16.mxu0 0
        %4354 = vmatpush1.bf16.msra.mxu0 %v4097
        %4355 = vmatprep.subr.bf16.mxu0 0
        %4356 = vmatpush1.bf16.msra.mxu0 %v4098
        %4357 = vmatprep.subr.bf16.mxu0 0
        %4358 = vmatpush1.bf16.msra.mxu0 %v4099
        %4359 = vmatprep.subr.bf16.mxu0 0
        %4360 = vmatpush1.bf16.msra.mxu0 %v4100
        %4361 = vmatprep.subr.bf16.mxu0 0
        %4362 = vmatpush1.bf16.msra.mxu0 %v4101
        %4363 = vmatprep.subr.bf16.mxu0 0
        %4364 = vmatpush1.bf16.msra.mxu0 %v4102
        %4365 = vmatprep.subr.bf16.mxu0 0
        %4366 = vmatpush1.bf16.msra.mxu0 %v4103
        %4367 = vmatprep.subr.bf16.mxu0 0
        %4368 = vmatpush1.bf16.msra.mxu0 %v4104
        %4369 = vmatprep.subr.bf16.mxu0 0
        %4370 = vmatpush1.bf16.msra.mxu0 %v4105
        %4371 = vmatprep.subr.bf16.mxu0 0
        %4372 = vmatpush1.bf16.msra.mxu0 %v4106
        %4373 = vmatprep.subr.bf16.mxu0 0
        %4374 = vmatpush1.bf16.msra.mxu0 %v4107
        %4375 = vmatprep.subr.bf16.mxu0 0
        %4376 = vmatpush1.bf16.msra.mxu0 %v4108
        %4377 = vmatprep.subr.bf16.mxu0 0
        %4378 = vmatpush1.bf16.msra.mxu0 %v4109
        %4379 = vmatprep.subr.bf16.mxu0 0
        %4380 = vmatpush1.bf16.msra.mxu0 %v4110
        %4381 = vmatprep.subr.bf16.mxu0 0
        %4382 = vmatpush1.bf16.msra.mxu0 %v4111
        %4383 = vmatprep.subr.bf16.mxu0 0
        %4384 = vmatpush1.bf16.msra.mxu0 %v4112
        %4385 = vmatprep.mubr.bf16.mxu0 %v3563
        %4386 = vmatmul.mubr.bf16.gmra.mrb[0].mxu0 %v3562
        %v4387 = vpop.f32.mrb[0].mxu0
        %v4388 = vadd.f32 %v3583, %v4387
        %v4389 = vpop.f32.mrb[0].mxu0
        %v4390 = vpop.f32.mrb[0].mxu0
        %v4391 = vpop.f32.mrb[0].mxu0
        %4392 = vdwg.mxu0
        %4393 = vmatprep.subr.bf16.mxu0 0
        %4394 = vmatpush1.bf16.msra.mxu0 %v4113
        %4395 = vmatprep.subr.bf16.mxu0 0
        %4396 = vmatpush1.bf16.msra.mxu0 %v4114
        %4397 = vmatprep.subr.bf16.mxu0 0
        %4398 = vmatpush1.bf16.msra.mxu0 %v4115
        %4399 = vmatprep.subr.bf16.mxu0 0
        %4400 = vmatpush1.bf16.msra.mxu0 %v4116
        %4401 = vmatprep.subr.bf16.mxu0 0
        %4402 = vmatpush1.bf16.msra.mxu0 %v4117
        %4403 = vmatprep.subr.bf16.mxu0 0
        %4404 = vmatpush1.bf16.msra.mxu0 %v4118
        %4405 = vmatprep.subr.bf16.mxu0 0
        %4406 = vmatpush1.bf16.msra.mxu0 %v4119
        %4407 = vmatprep.subr.bf16.mxu0 0
        %4408 = vmatpush1.bf16.msra.mxu0 %v4120
        %4409 = vmatprep.subr.bf16.mxu0 0
        %4410 = vmatpush1.bf16.msra.mxu0 %v4121
        %4411 = vmatprep.subr.bf16.mxu0 0
        %4412 = vmatpush1.bf16.msra.mxu0 %v4122
        %4413 = vmatprep.subr.bf16.mxu0 0
        %4414 = vmatpush1.bf16.msra.mxu0 %v4123
        %4415 = vmatprep.subr.bf16.mxu0 0
        %4416 = vmatpush1.bf16.msra.mxu0 %v4124
        %4417 = vmatprep.subr.bf16.mxu0 0
        %4418 = vmatpush1.bf16.msra.mxu0 %v4125
        %4419 = vmatprep.subr.bf16.mxu0 0
        %4420 = vmatpush1.bf16.msra.mxu0 %v4126
        %4421 = vmatprep.subr.bf16.mxu0 0
        %4422 = vmatpush1.bf16.msra.mxu0 %v4127
        %4423 = vmatprep.subr.bf16.mxu0 0
        %4424 = vmatpush1.bf16.msra.mxu0 %v4128
        %4425 = vmatprep.mubr.bf16.mxu0 %v3565
        %4426 = vmatmul.mubr.bf16.gmra.mrb[0].mxu0 %v3564
        %v4427 = vpop.f32.mrb[0].mxu0
        %v4428 = vadd.f32 %v4388, %v4427
        %v4429 = vpop.f32.mrb[0].mxu0
        %v4430 = vpop.f32.mrb[0].mxu0
        %v4431 = vpop.f32.mrb[0].mxu0
        %4432 = vdwg.mxu0
        %4433 = vmatprep.subr.bf16.mxu0 0
        %4434 = vmatpush1.bf16.msra.mxu0 %v4129
        %4435 = vmatprep.subr.bf16.mxu0 0
        %4436 = vmatpush1.bf16.msra.mxu0 %v4130
        %4437 = vmatprep.subr.bf16.mxu0 0
        %4438 = vmatpush1.bf16.msra.mxu0 %v4131
        %4439 = vmatprep.subr.bf16.mxu0 0
        %4440 = vmatpush1.bf16.msra.mxu0 %v4132
        %4441 = vmatprep.subr.bf16.mxu0 0
        %4442 = vmatpush1.bf16.msra.mxu0 %v4133
        %4443 = vmatprep.subr.bf16.mxu0 0
        %4444 = vmatpush1.bf16.msra.mxu0 %v4134
        %4445 = vmatprep.subr.bf16.mxu0 0
        %4446 = vmatpush1.bf16.msra.mxu0 %v4135
        %4447 = vmatprep.subr.bf16.mxu0 0
        %4448 = vmatpush1.bf16.msra.mxu0 %v4136
        %4449 = vmatprep.subr.bf16.mxu0 0
        %4450 = vmatpush1.bf16.msra.mxu0 %v4137
        %4451 = vmatprep.subr.bf16.mxu0 0
        %4452 = vmatpush1.bf16.msra.mxu0 %v4138
        %4453 = vmatprep.subr.bf16.mxu0 0
        %4454 = vmatpush1.bf16.msra.mxu0 %v4139
        %4455 = vmatprep.subr.bf16.mxu0 0
        %4456 = vmatpush1.bf16.msra.mxu0 %v4140
        %4457 = vmatprep.subr.bf16.mxu0 0
        %4458 = vmatpush1.bf16.msra.mxu0 %v4141
        %4459 = vmatprep.subr.bf16.mxu0 0
        %4460 = vmatpush1.bf16.msra.mxu0 %v4142
        %4461 = vmatprep.subr.bf16.mxu0 0
        %4462 = vmatpush1.bf16.msra.mxu0 %v4143
        %4463 = vmatprep.subr.bf16.mxu0 0
        %4464 = vmatpush1.bf16.msra.mxu0 %v4144
        %4465 = vmatprep.mubr.bf16.mxu0 %v3567
        %4466 = vmatmul.mubr.bf16.gmra.mrb[0].mxu0 %v3566
        %v4467 = vpop.f32.mrb[0].mxu0
        %v4468 = vadd.f32 %v4428, %v4467
        %v4469 = vpop.f32.mrb[0].mxu0
        %v4470 = vpop.f32.mrb[0].mxu0
        %v4471 = vpop.f32.mrb[0].mxu0
        %4472 = vdwg.mxu0
        %4473 = vmatprep.subr.bf16.mxu0 0
        %4474 = vmatpush1.bf16.msra.mxu0 %v4145
        %4475 = vmatprep.subr.bf16.mxu0 0
        %4476 = vmatpush1.bf16.msra.mxu0 %v4146
        %4477 = vmatprep.subr.bf16.mxu0 0
        %4478 = vmatpush1.bf16.msra.mxu0 %v4147
        %4479 = vmatprep.subr.bf16.mxu0 0
        %4480 = vmatpush1.bf16.msra.mxu0 %v4148
        %4481 = vmatprep.subr.bf16.mxu0 0
        %4482 = vmatpush1.bf16.msra.mxu0 %v4149
        %4483 = vmatprep.subr.bf16.mxu0 0
        %4484 = vmatpush1.bf16.msra.mxu0 %v4150
        %4485 = vmatprep.subr.bf16.mxu0 0
        %4486 = vmatpush1.bf16.msra.mxu0 %v4151
        %4487 = vmatprep.subr.bf16.mxu0 0
        %4488 = vmatpush1.bf16.msra.mxu0 %v4152
        %4489 = vmatprep.subr.bf16.mxu0 0
        %4490 = vmatpush1.bf16.msra.mxu0 %v4153
        %4491 = vmatprep.subr.bf16.mxu0 0
        %4492 = vmatpush1.bf16.msra.mxu0 %v4154
        %4493 = vmatprep.subr.bf16.mxu0 0
        %4494 = vmatpush1.bf16.msra.mxu0 %v4155
        %4495 = vmatprep.subr.bf16.mxu0 0
        %4496 = vmatpush1.bf16.msra.mxu0 %v4156
        %4497 = vmatprep.subr.bf16.mxu0 0
        %4498 = vmatpush1.bf16.msra.mxu0 %v4157
        %4499 = vmatprep.subr.bf16.mxu0 0
        %4500 = vmatpush1.bf16.msra.mxu0 %v4158
        %4501 = vmatprep.subr.bf16.mxu0 0
        %4502 = vmatpush1.bf16.msra.mxu0 %v4159
        %4503 = vmatprep.subr.bf16.mxu0 0
        %4504 = vmatpush1.bf16.msra.mxu0 %v4160
        %4505 = vmatprep.mubr.bf16.mxu0 %v3569
        %4506 = vmatmul.mubr.bf16.gmra.mrb[0].mxu0 %v3568
        %v4507 = vpop.f32.mrb[0].mxu0
        %v4508 = vadd.f32 %v4468, %v4507
        %v4509 = vpop.f32.mrb[0].mxu0
        %v4510 = vpop.f32.mrb[0].mxu0
        %v4511 = vpop.f32.mrb[0].mxu0
        %4512 = vdwg.mxu0
        %4513 = vmatprep.subr.bf16.mxu0 0
        %4514 = vmatpush1.bf16.msra.mxu0 %v4161
        %4515 = vmatprep.subr.bf16.mxu0 0
        %4516 = vmatpush1.bf16.msra.mxu0 %v4162
        %4517 = vmatprep.subr.bf16.mxu0 0
        %4518 = vmatpush1.bf16.msra.mxu0 %v4163
        %4519 = vmatprep.subr.bf16.mxu0 0
        %4520 = vmatpush1.bf16.msra.mxu0 %v4164
        %4521 = vmatprep.subr.bf16.mxu0 0
        %4522 = vmatpush1.bf16.msra.mxu0 %v4165
        %4523 = vmatprep.subr.bf16.mxu0 0
        %4524 = vmatpush1.bf16.msra.mxu0 %v4166
        %4525 = vmatprep.subr.bf16.mxu0 0
        %4526 = vmatpush1.bf16.msra.mxu0 %v4167
        %4527 = vmatprep.subr.bf16.mxu0 0
        %4528 = vmatpush1.bf16.msra.mxu0 %v4168
        %4529 = vmatprep.subr.bf16.mxu0 0
        %4530 = vmatpush1.bf16.msra.mxu0 %v4169
        %4531 = vmatprep.subr.bf16.mxu0 0
        %4532 = vmatpush1.bf16.msra.mxu0 %v4170
        %4533 = vmatprep.subr.bf16.mxu0 0
        %4534 = vmatpush1.bf16.msra.mxu0 %v4171
        %4535 = vmatprep.subr.bf16.mxu0 0
        %4536 = vmatpush1.bf16.msra.mxu0 %v4172
        %4537 = vmatprep.subr.bf16.mxu0 0
        %4538 = vmatpush1.bf16.msra.mxu0 %v4173
        %4539 = vmatprep.subr.bf16.mxu0 0
        %4540 = vmatpush1.bf16.msra.mxu0 %v4174
        %4541 = vmatprep.subr.bf16.mxu0 0
        %4542 = vmatpush1.bf16.msra.mxu0 %v4175
        %4543 = vmatprep.subr.bf16.mxu0 0
        %4544 = vmatpush1.bf16.msra.mxu0 %v4176
        %4545 = vmatprep.mubr.bf16.mxu0 %v3571
        %4546 = vmatmul.mubr.bf16.gmra.mrb[0].mxu0 %v3570
        %v4547 = vpop.f32.mrb[0].mxu0
        %v4548 = vadd.f32 %v4508, %v4547
        %v4549 = vpop.f32.mrb[0].mxu0
        %v4550 = vpop.f32.mrb[0].mxu0
        %v4551 = vpop.f32.mrb[0].mxu0
        %4552 = vdwg.mxu0
        %4553 = vmatprep.subr.bf16.mxu0 0
        %4554 = vmatpush1.bf16.msra.mxu0 %v4177
        %4555 = vmatprep.subr.bf16.mxu0 0
        %4556 = vmatpush1.bf16.msra.mxu0 %v4178
        %4557 = vmatprep.subr.bf16.mxu0 0
        %4558 = vmatpush1.bf16.msra.mxu0 %v4179
        %4559 = vmatprep.subr.bf16.mxu0 0
        %4560 = vmatpush1.bf16.msra.mxu0 %v4180
        %4561 = vmatprep.subr.bf16.mxu0 0
        %4562 = vmatpush1.bf16.msra.mxu0 %v4181
        %4563 = vmatprep.subr.bf16.mxu0 0
        %4564 = vmatpush1.bf16.msra.mxu0 %v4182
        %4565 = vmatprep.subr.bf16.mxu0 0
        %4566 = vmatpush1.bf16.msra.mxu0 %v4183
        %4567 = vmatprep.subr.bf16.mxu0 0
        %4568 = vmatpush1.bf16.msra.mxu0 %v4184
        %4569 = vmatprep.subr.bf16.mxu0 0
        %4570 = vmatpush1.bf16.msra.mxu0 %v4185
        %4571 = vmatprep.subr.bf16.mxu0 0
        %4572 = vmatpush1.bf16.msra.mxu0 %v4186
        %4573 = vmatprep.subr.bf16.mxu0 0
        %4574 = vmatpush1.bf16.msra.mxu0 %v4187
        %4575 = vmatprep.subr.bf16.mxu0 0
        %4576 = vmatpush1.bf16.msra.mxu0 %v4188
        %4577 = vmatprep.subr.bf16.mxu0 0
        %4578 = vmatpush1.bf16.msra.mxu0 %v4189
        %4579 = vmatprep.subr.bf16.mxu0 0
        %4580 = vmatpush1.bf16.msra.mxu0 %v4190
        %4581 = vmatprep.subr.bf16.mxu0 0
        %4582 = vmatpush1.bf16.msra.mxu0 %v4191
        %4583 = vmatprep.subr.bf16.mxu0 0
        %4584 = vmatpush1.bf16.msra.mxu0 %v4192
        %4585 = vmatprep.mubr.bf16.mxu0 %v3573
        %4586 = vmatmul.mubr.bf16.gmra.mrb[0].mxu0 %v3572
        %v4587 = vpop.f32.mrb[0].mxu0
        %v4588 = vadd.f32 %v4548, %v4587
        %v4589 = vpop.f32.mrb[0].mxu0
        %v4590 = vpop.f32.mrb[0].mxu0
        %v4591 = vpop.f32.mrb[0].mxu0
        %4592 = vdwg.mxu0
        %4593 = vmatprep.subr.bf16.mxu0 0
        %4594 = vmatpush1.bf16.msra.mxu0 %v4193
        %4595 = vmatprep.subr.bf16.mxu0 0
        %4596 = vmatpush1.bf16.msra.mxu0 %v4194
        %4597 = vmatprep.subr.bf16.mxu0 0
        %4598 = vmatpush1.bf16.msra.mxu0 %v4195
        %4599 = vmatprep.subr.bf16.mxu0 0
        %4600 = vmatpush1.bf16.msra.mxu0 %v4196
        %4601 = vmatprep.subr.bf16.mxu0 0
        %4602 = vmatpush1.bf16.msra.mxu0 %v4197
        %4603 = vmatprep.subr.bf16.mxu0 0
        %4604 = vmatpush1.bf16.msra.mxu0 %v4198
        %4605 = vmatprep.subr.bf16.mxu0 0
        %4606 = vmatpush1.bf16.msra.mxu0 %v4199
        %4607 = vmatprep.subr.bf16.mxu0 0
        %4608 = vmatpush1.bf16.msra.mxu0 %v4200
        %4609 = vmatprep.subr.bf16.mxu0 0
        %4610 = vmatpush1.bf16.msra.mxu0 %v4201
        %4611 = vmatprep.subr.bf16.mxu0 0
        %4612 = vmatpush1.bf16.msra.mxu0 %v4202
        %4613 = vmatprep.subr.bf16.mxu0 0
        %4614 = vmatpush1.bf16.msra.mxu0 %v4203
        %4615 = vmatprep.subr.bf16.mxu0 0
        %4616 = vmatpush1.bf16.msra.mxu0 %v4204
        %4617 = vmatprep.subr.bf16.mxu0 0
        %4618 = vmatpush1.bf16.msra.mxu0 %v4205
        %4619 = vmatprep.subr.bf16.mxu0 0
        %4620 = vmatpush1.bf16.msra.mxu0 %v4206
        %4621 = vmatprep.subr.bf16.mxu0 0
        %4622 = vmatpush1.bf16.msra.mxu0 %v4207
        %4623 = vmatprep.subr.bf16.mxu0 0
        %4624 = vmatpush1.bf16.msra.mxu0 %v4208
        %4625 = vmatprep.mubr.bf16.mxu0 %v3575
        %4626 = vmatmul.mubr.bf16.gmra.mrb[0].mxu0 %v3574
        %v4627 = vpop.f32.mrb[0].mxu0
        %v4628 = vadd.f32 %v4588, %v4627
        %v4629 = vpop.f32.mrb[0].mxu0
        %v4630 = vpop.f32.mrb[0].mxu0
        %v4631 = vpop.f32.mrb[0].mxu0
        %4632 = vdwg.mxu0
        %4633 = vmatprep.subr.bf16.mxu0 0
        %4634 = vmatpush1.bf16.msra.mxu0 %v4209
        %4635 = vmatprep.subr.bf16.mxu0 0
        %4636 = vmatpush1.bf16.msra.mxu0 %v4210
        %4637 = vmatprep.subr.bf16.mxu0 0
        %4638 = vmatpush1.bf16.msra.mxu0 %v4211
        %4639 = vmatprep.subr.bf16.mxu0 0
        %4640 = vmatpush1.bf16.msra.mxu0 %v4212
        %4641 = vmatprep.subr.bf16.mxu0 0
        %4642 = vmatpush1.bf16.msra.mxu0 %v4213
        %4643 = vmatprep.subr.bf16.mxu0 0
        %4644 = vmatpush1.bf16.msra.mxu0 %v4214
        %4645 = vmatprep.subr.bf16.mxu0 0
        %4646 = vmatpush1.bf16.msra.mxu0 %v4215
        %4647 = vmatprep.subr.bf16.mxu0 0
        %4648 = vmatpush1.bf16.msra.mxu0 %v4216
        %4649 = vmatprep.subr.bf16.mxu0 0
        %4650 = vmatpush1.bf16.msra.mxu0 %v4217
        %4651 = vmatprep.subr.bf16.mxu0 0
        %4652 = vmatpush1.bf16.msra.mxu0 %v4218
        %4653 = vmatprep.subr.bf16.mxu0 0
        %4654 = vmatpush1.bf16.msra.mxu0 %v4219
        %4655 = vmatprep.subr.bf16.mxu0 0
        %4656 = vmatpush1.bf16.msra.mxu0 %v4220
        %4657 = vmatprep.subr.bf16.mxu0 0
        %4658 = vmatpush1.bf16.msra.mxu0 %v4221
        %4659 = vmatprep.subr.bf16.mxu0 0
        %4660 = vmatpush1.bf16.msra.mxu0 %v4222
        %4661 = vmatprep.subr.bf16.mxu0 0
        %4662 = vmatpush1.bf16.msra.mxu0 %v4223
        %4663 = vmatprep.subr.bf16.mxu0 0
        %4664 = vmatpush1.bf16.msra.mxu0 %v4224
        %4665 = vmatprep.mubr.bf16.mxu0 %v3577
        %4666 = vmatmul.mubr.bf16.gmra.mrb[0].mxu0 %v3576
        %v4667 = vpop.f32.mrb[0].mxu0
        %v4668 = vadd.f32 %v4628, %v4667
        %v4669 = vpop.f32.mrb[0].mxu0
        %v4670 = vpop.f32.mrb[0].mxu0
        %v4671 = vpop.f32.mrb[0].mxu0
        %4672 = vdwg.mxu0
        %v4673 = vadd.f32 %v2108, %v4668
        %v4674 = vld [vmem:[%s1000] sm:$0x1]
        %v4675 = vld [vmem:[%s1008] sm:$0x1]
        %v4676 = vsel %vm1929, %v4673, 0.0
        %4677 = vadd.xlane.f32.xlu0 %v4676
        %v4678 = vpop.xlane.xlu0 %4677
        %v4679 = vmul.f32 %v4678, %v1933
        %v4680 = vsub.f32 %v4673, %v4679
        %v4681 = vmul.f32 %v4680, %v4680
        %v4682 = vsel %vm1929, %v4681, 0.0
        %4683 = vadd.xlane.f32.xlu0 %v4682
        %v4684 = vpop.xlane.xlu0 %4683
        %v4685 = vmul.f32 %v4684, %v1933
        %v4686 = vadd.f32 %v4685, 1e-05
        %v4687 = vrsqrt.pop %v4686
        %v4688 = vmul.f32 %v4680, %v4687
        %v4690 = vlaneseq
        %v4691 = vshrl.u32 %v4690, 7
        %v4692 = vsub.s32 0, %v4691
        %v4693 = vrot.slane %v4674, %v4692
        %v4695 = vmul.f32 %v4688, %v4693
        %v4697 = vlaneseq
        %v4698 = vshrl.u32 %v4697, 7
        %v4699 = vsub.s32 0, %v4698
        %v4700 = vrot.slane %v4675, %v4699
        %v4702 = vadd.f32 %v4695, %v4700
        %4703 = vst [vmem:[#allocation2] sm:$0x3] %v4702
        %p4704 = scmp.eq.s32.totalorder %s34, 3
        // Predicated region
        $region181: #{transformer_classifier_forward.1} parent=95 // pred_check
          %p4705 = pneg %p4704
        $region182: #{transformer_classifier_forward.1} parent=95 // pred_check_branch
          %4707 = sbr.rel (%p4705) target = $region184
        $region183: #{transformer_classifier_forward.1} parent=95 // pred_region
          %v4708 = vld [vmem:[#allocation2] sm:$0x3]
          %v4709 = vld [vmem:[#allocation23] sm:$0xf]
          %v4710 = vld [vmem:[#allocation23 + $0x4] sm:$0xf]
          %v4711 = vld [vmem:[#allocation23 + $0x8] sm:$0xf]
          %v4712 = vld [vmem:[#allocation23 + $0xc] sm:$0xf]
          %v4713 = vld [vmem:[#allocation23 + $0x10] sm:$0xf]
          %v4714 = vld [vmem:[#allocation23 + $0x14] sm:$0xf]
          %v4715 = vld [vmem:[#allocation23 + $0x18] sm:$0xf]
          %v4716 = vld [vmem:[#allocation23 + $0x1c] sm:$0xf]
          %v4717 = vld [vmem:[#allocation23 + $0x20] sm:$0xf]
          %v4718 = vld [vmem:[#allocation23 + $0x24] sm:$0xf]
          %v4719 = vld [vmem:[#allocation23 + $0x28] sm:$0xf]
          %v4720 = vld [vmem:[#allocation23 + $0x2c] sm:$0xf]
          %v4721 = vld [vmem:[#allocation23 + $0x30] sm:$0xf]
          %v4722 = vld [vmem:[#allocation23 + $0x34] sm:$0xf]
          %v4723 = vld [vmem:[#allocation23 + $0x38] sm:$0xf]
          %v4724 = vld [vmem:[#allocation23 + $0x3c] sm:$0xf]
          %v4725 = vpack.c.bf16 %v4708, %v4708
          %v4726 = vld [vmem:[#allocation24] sm:$0x1]
          %v4728 = vlaneseq
          %v4729 = vshrl.u32 %v4728, 7
          %v4730 = vsub.s32 0, %v4729
          %v4731 = vrot.slane %v4726, %v4730
          %v4749 = vunpack.c.l.b16 %v4709
          %v4750 = vunpack.c.l.b16 %v4710
          %v4751 = vunpack.c.l.b16 %v4711
          %v4752 = vunpack.c.l.b16 %v4712
          %v4753 = vunpack.c.l.b16 %v4713
          %v4754 = vunpack.c.l.b16 %v4714
          %v4755 = vunpack.c.l.b16 %v4715
          %v4756 = vunpack.c.l.b16 %v4716
          %v4757 = vunpack.c.l.b16 %v4717
          %v4758 = vunpack.c.l.b16 %v4718
          %v4759 = vunpack.c.l.b16 %v4719
          %v4760 = vunpack.c.l.b16 %v4720
          %v4761 = vunpack.c.l.b16 %v4721
          %v4762 = vunpack.c.l.b16 %v4722
          %v4763 = vunpack.c.l.b16 %v4723
          %v4764 = vunpack.c.l.b16 %v4724
          %v4765 = vpack.c.b16 %v4750, %v4749
          %v4766 = vpack.c.b16 %v4752, %v4751
          %v4767 = vpack.c.b16 %v4754, %v4753
          %v4768 = vpack.c.b16 %v4756, %v4755
          %v4769 = vpack.c.b16 %v4758, %v4757
          %v4770 = vpack.c.b16 %v4760, %v4759
          %v4771 = vpack.c.b16 %v4762, %v4761
          %v4772 = vpack.c.b16 %v4764, %v4763
          %4781 = vmatprep.subr.bf16.mxu0 0
          %4782 = vmatpush1.bf16.msra.mxu0 %v4765
          %4783 = vmatprep.subr.bf16.mxu0 0
          %4784 = vmatpush1.bf16.msra.mxu0 %v4766
          %4785 = vmatprep.subr.bf16.mxu0 0
          %4786 = vmatpush1.bf16.msra.mxu0 %v4767
          %4787 = vmatprep.subr.bf16.mxu0 0
          %4788 = vmatpush1.bf16.msra.mxu0 %v4768
          %4789 = vmatprep.subr.bf16.mxu0 0
          %4790 = vmatpush1.bf16.msra.mxu0 %v4769
          %4791 = vmatprep.subr.bf16.mxu0 0
          %4792 = vmatpush1.bf16.msra.mxu0 %v4770
          %4793 = vmatprep.subr.bf16.mxu0 0
          %4794 = vmatpush1.bf16.msra.mxu0 %v4771
          %4795 = vmatprep.subr.bf16.mxu0 0
          %4796 = vmatpush1.bf16.msra.mxu0 %v4772
          %4797 = vmatprep.subr.bf16.mxu0 0
          %4798 = vmatpush1.bf16.msra.mxu0 0
          %4799 = vmatprep.subr.bf16.mxu0 0
          %4800 = vmatpush1.bf16.msra.mxu0 0
          %4801 = vmatprep.subr.bf16.mxu0 0
          %4802 = vmatpush1.bf16.msra.mxu0 0
          %4803 = vmatprep.subr.bf16.mxu0 0
          %4804 = vmatpush1.bf16.msra.mxu0 0
          %4805 = vmatprep.subr.bf16.mxu0 0
          %4806 = vmatpush1.bf16.msra.mxu0 0
          %4807 = vmatprep.subr.bf16.mxu0 0
          %4808 = vmatpush1.bf16.msra.mxu0 0
          %4809 = vmatprep.subr.bf16.mxu0 0
          %4810 = vmatpush1.bf16.msra.mxu0 0
          %4811 = vmatprep.subr.bf16.mxu0 0
          %4812 = vmatpush1.bf16.msra.mxu0 0
          %4813 = vmatprep.mubr.bf16.mxu0 0
          %4814 = vmatmul.mubr.bf16.gmra.mrb[0].mxu0 %v4725
          %v4815 = vpop.f32.mrb[0].mxu0
          %v4816 = vadd.f32 %v4731, %v4815
          %v4817 = vpop.f32.mrb[0].mxu0
          %v4818 = vpop.f32.mrb[0].mxu0
          %v4819 = vpop.f32.mrb[0].mxu0
          %4820 = vdwg.mxu0
          %4821 = vst [vmem:[#allocation26] sm:$0x3] %v4816
        $region184: #{transformer_classifier_forward.1} parent=95 // pred_fallthru
          _
        // Predicated region
        $region185: #{transformer_classifier_forward.1} parent=95 // pred_check
          %p4822 = pneg %p540
        $region186: #{transformer_classifier_forward.1} parent=95 // pred_check_branch
          %4824 = sbr.rel (%p4822) target = $region188
        $region187: #{transformer_classifier_forward.1} parent=95 // pred_region
          %s4826 = ssub.s32 32, 32
          %4827 = vsyncadd [#allocation6], %s4826
          %s4829 = sshll.u32 [#allocation26], 4
          %s4830 = int_to_ptr.vmem [resolvable:$true] %s4829
          %4832 = dma.vmem_to_hbm [thread:$0]  %s4830, 32, %s19, [#allocation6]
        $region188: #{transformer_classifier_forward.1} parent=95 // pred_fallthru
          _
        // Predicated region
        $region189: #{transformer_classifier_forward.1} parent=95 // pred_check
          %p4833 = pneg %p540
        $region190: #{transformer_classifier_forward.1} parent=95 // pred_check_branch
          %4835 = sbr.rel (%p4833) target = $region192
        $region191: #{transformer_classifier_forward.1} parent=95 // pred_region
          %4836 = dma.done [#allocation6], 32
        $region192: #{transformer_classifier_forward.1} parent=95 // pred_fallthru
          _
      $region96: #{transformer_classifier_forward.1} parent=5 // pred_fallthru
        _
      %p4837 = scmp.le.s32.totalorder 2, %s29
      // Predicated region
      $region193: #{transformer_classifier_forward.1} parent=5 // pred_check
        %p4838 = pneg %p4837
      $region194: #{transformer_classifier_forward.1} parent=5 // pred_check_branch
        %4840 = sbr.rel (%p4838) target = $region196
      $region195: #{transformer_classifier_forward.1} parent=5 // pred_region
        %s4841 = ssub.s32 %s29, 2
      $region196: #{transformer_classifier_forward.1} parent=5 // pred_fallthru
        _
    $region6: #{transformer_classifier_forward.1} parent=1 // loop_footer
      %s33 = sadd.s32 1, %s29
    $region7: #{transformer_classifier_forward.1} parent=1 // loop_footer_branch
      %28 = sbr.rel target = $region3
    $region8: #{transformer_classifier_forward.1} parent=1 // loop_exit
      _
    %4842 = vsyncpa [#allocation5], 1
    %s4843 = scalar_lea.sflag [#allocation5], 1
    %4844 = vsyncpa %s4843, 1
    %4845 = vsyncpa [#allocation8], 1
    %4846 = vsyncpa [#allocation25], 1
    %4847 = vsyncpa [#allocation6], 1
    %s4848 = scalar_lea.sflag [#allocation6], 1
    %4849 = vsyncpa %s4848, 1

</llo_original>
